<compile_context>
chip_gen: v5e
topology: v5e:2x2
jax: 0.10.0
libtpu: 0.0.40
codegen_flags: <defaults>
</compile_context>

<pallas_src>
import jax
import jax.numpy as jnp
from jax.experimental import pallas as pl
from jax.experimental.pallas import tpu as pltpu

LENGTH = 15         # fixed by the PyTorch module
N_CLASSES = 9       # fixed by the PyTorch module (nn.Linear(hidden, 9))
PAD = LENGTH + 1    # 16 rows -> sublane multiple of 8 for the hoisted matmuls


def _lstm_ner_kernel(ids_ref,                     # (LENGTH,) int32     SMEM
                     emb_tbl_ref,                 # (vocab, 1, n_dim)   VMEM
                     wih0_ref, whh0_ref, b0_ref,  # (n_dim,4H) (H,4H) (1,4H)
                     w1cat_ref, b1_ref,           # (2H,4H) (1,4H)
                     wout_ref, bout_ref,          # (H,9) (1,9)
                     out_ref,                     # (LENGTH, 9) f32
                     xpad_ref,                    # (PAD, n_dim) scratch
                     rout_ref):                   # (PAD, H) scratch
    H = whh0_ref.shape[0]

    # ---- in-kernel embedding gather (15 rows, padded to 16) -----------------
    xpad_ref[...] = jnp.zeros_like(xpad_ref)
    for t in range(LENGTH):
        row = emb_tbl_ref[ids_ref[t]]                 # (1, n_dim), dynamic row
        xpad_ref[pl.ds(t, 1), :] = row

    # ---- hoisted layer-0 input projection: one (16, n_dim)@(n_dim, 4H) ------
    pre0 = (jnp.dot(xpad_ref[...], wih0_ref[...],
                    preferred_element_type=jnp.float32)
            + b0_ref[...])                            # (PAD, 4H)

    whh0 = whh0_ref[...]                              # (H, 4H)
    w1c = w1cat_ref[...]                              # (2H, 4H)
    b1 = b1_ref[...]                                  # (1, 4H)

    def lstm_from_gates(gates, c):
        # Activations on the full (1, 4H) vector, then 32-lane slices.
        sg = jax.nn.sigmoid(gates)
        tg = jnp.tanh(gates)
        i = sg[:, 0 * H:1 * H]
        f = sg[:, 1 * H:2 * H]
        g = tg[:, 2 * H:3 * H]
        o = sg[:, 3 * H:4 * H]
        c_new = f * c + i * g
        h_new = o * jnp.tanh(c_new)
        return h_new, c_new

    # zero initial states (h_0 / c_0 are None in the PyTorch call)
    h0 = jnp.zeros((1, H), jnp.float32)
    c0 = jnp.zeros((1, H), jnp.float32)
    h1 = jnp.zeros((1, H), jnp.float32)
    c1 = jnp.zeros((1, H), jnp.float32)

    rout_ref[...] = jnp.zeros_like(rout_ref)

    # ---- fully unrolled recurrence: 2 matmuls per step, state in vregs ------
    for t in range(LENGTH):
        # layer 0: recurrent matmul only (input term precomputed in pre0)
        g0 = (jnp.dot(h0, whh0, preferred_element_type=jnp.float32)
              + pre0[t:t + 1, :])
        h0, c0 = lstm_from_gates(g0, c0)

        # layer 1: single fused matmul over [h0_new, h1] @ [wih1; whh1]
        xh = jnp.concatenate([h0, h1], axis=1)        # (1, 2H)
        g1 = jnp.dot(xh, w1c, preferred_element_type=jnp.float32) + b1
        h1, c1 = lstm_from_gates(g1, c1)

        rout_ref[pl.ds(t, 1), :] = h1                 # r_out[:, t, :]

    # ---- head: padded (16, H) @ (H, 9) + bias, row-wise softmax -------------
    logits = (jnp.dot(rout_ref[...], wout_ref[...],
                      preferred_element_type=jnp.float32) + bout_ref[...])
    m = jnp.max(logits, axis=-1, keepdims=True)
    e = jnp.exp(logits - m)
    p = e / jnp.sum(e, axis=-1, keepdims=True)
    out_ref[...] = p[0:LENGTH, :]                     # drop the padding row


def init_params(key, input_size, n_dim, hidden_size):
    ks = jax.random.split(key, 12)
    bnd = 1.0 / jnp.sqrt(jnp.float32(hidden_size))

    def u(k, shape):
        return jax.random.uniform(k, shape, jnp.float32, -bnd, bnd)

    params = {
        "embedding": jax.random.normal(ks[0], (input_size, n_dim), jnp.float32),
        # layer 0 (input = n_dim), stored transposed: (in, 4H)
        "wih0": u(ks[1], (n_dim, 4 * hidden_size)),
        "whh0": u(ks[2], (hidden_size, 4 * hidden_size)),
        "b0":   u(ks[3], (1, 4 * hidden_size)) + u(ks[4], (1, 4 * hidden_size)),
        # layer 1 (input = hidden)
        "wih1": u(ks[5], (hidden_size, 4 * hidden_size)),
        "whh1": u(ks[6], (hidden_size, 4 * hidden_size)),
        "b1":   u(ks[7], (1, 4 * hidden_size)) + u(ks[8], (1, 4 * hidden_size)),
        # output head Linear(hidden, 9), stored transposed: (H, 9)
        "wout": u(ks[9], (hidden_size, N_CLASSES)),
        "bout": u(ks[10], (1, N_CLASSES)),
    }
    return params


@jax.jit
def rnn_forward(x, params):
    """x: (1, LENGTH) int32 token ids (the module's forward only supports batch=1)."""
    hidden_size = params["whh0"].shape[0]
    n_dim = params["wih0"].shape[0]
    vocab = params["embedding"].shape[0]

    ids = x[0].astype(jnp.int32)                                   # (LENGTH,)
    emb_tbl = params["embedding"].reshape(vocab, 1, n_dim)         # row-gatherable
    w1cat = jnp.concatenate([params["wih1"], params["whh1"]], axis=0)  # (2H, 4H)

    vmem = pl.BlockSpec(memory_space=pltpu.MemorySpace.VMEM)
    smem = pl.BlockSpec(memory_space=pltpu.MemorySpace.SMEM)

    out = pl.pallas_call(
        _lstm_ner_kernel,
        out_shape=jax.ShapeDtypeStruct((LENGTH, N_CLASSES), jnp.float32),
        in_specs=[smem,            # token ids
                  vmem,            # embedding table
                  vmem, vmem, vmem,  # wih0, whh0, b0
                  vmem, vmem,        # w1cat, b1
                  vmem, vmem],       # wout, bout
        out_specs=vmem,
        scratch_shapes=[
            pltpu.VMEM((PAD, n_dim), jnp.float32),        # gathered emb (padded)
            pltpu.VMEM((PAD, hidden_size), jnp.float32),  # r_out (padded)
        ],
    )(ids, emb_tbl,
      params["wih0"], params["whh0"], params["b0"],
      w1cat, params["b1"],
      params["wout"], params["bout"])
    return out


def rnn_forward_ref(x, params):
    """Pure-JAX reference of the PyTorch forward (for correctness checking)."""
    H = params["whh0"].shape[0]
    emb = params["embedding"][x[0]].astype(jnp.float32)

    def cell(x_t, h, c, wih, whh, b):
        gates = x_t @ wih + h @ whh + b
        i = jax.nn.sigmoid(gates[:, 0 * H:1 * H])
        f = jax.nn.sigmoid(gates[:, 1 * H:2 * H])
        g = jnp.tanh(gates[:, 2 * H:3 * H])
        o = jax.nn.sigmoid(gates[:, 3 * H:4 * H])
        c_new = f * c + i * g
        return o * jnp.tanh(c_new), c_new

    h0 = c0 = h1 = c1 = jnp.zeros((1, H), jnp.float32)
    outs = []
    for t in range(LENGTH):
        h0, c0 = cell(emb[t:t + 1, :], h0, c0,
                      params["wih0"], params["whh0"], params["b0"])
        h1, c1 = cell(h0, h1, c1,
                      params["wih1"], params["whh1"], params["b1"])
        outs.append(h1)
    r = jnp.concatenate(outs, axis=0)
    logits = r @ params["wout"] + params["bout"]
    return jax.nn.softmax(logits, axis=-1)


if __name__ == "__main__":
    input_size = 32    # vocab size
    n_dim = 16         # embedding dim
    hidden_size = 32   # LSTM hidden size (4H = 128 -> full lane width)

    key = jax.random.PRNGKey(0)
    k_param, k_x = jax.random.split(key)
    params = init_params(k_param, input_size, n_dim, hidden_size)

    # token id sequence, batch=1 (the PyTorch forward is only valid for batch=1)
    x = jax.random.randint(k_x, (1, LENGTH), 0, input_size, dtype=jnp.int32)

    out = jax.block_until_ready(rnn_forward(x, params))

    assert out.shape == (LENGTH, N_CLASSES), out.shape
    # softmax rows must each sum to 1
    row_sums = jnp.sum(out, axis=-1)
    assert bool(jnp.all(jnp.abs(row_sums - 1.0) < 1e-4)), row_sums
    # match the pure-JAX reference of the PyTorch forward
    ref = rnn_forward_ref(x, params)
    assert bool(jnp.all(jnp.abs(out - ref) < 2e-3)), float(jnp.max(jnp.abs(out - ref)))

    print("KERNEL_OK")
</pallas_src>

<mosaic_0001>
module attributes {stable_mosaic.version = 11 : i64} {
  func.func @_lstm_ner_kernel(%arg0: memref<15xi32, #tpu.memory_space<smem>>, %arg1: memref<32x1x16xf32, #tpu.memory_space<vmem>>, %arg2: memref<16x128xf32, #tpu.memory_space<vmem>>, %arg3: memref<32x128xf32, #tpu.memory_space<vmem>>, %arg4: memref<1x128xf32, #tpu.memory_space<vmem>>, %arg5: memref<64x128xf32, #tpu.memory_space<vmem>>, %arg6: memref<1x128xf32, #tpu.memory_space<vmem>>, %arg7: memref<32x9xf32, #tpu.memory_space<vmem>>, %arg8: memref<1x9xf32, #tpu.memory_space<vmem>>, %arg9: memref<15x9xf32, #tpu.memory_space<vmem>>, %arg10: memref<16x16xf32, #tpu.memory_space<vmem>>, %arg11: memref<16x32xf32, #tpu.memory_space<vmem>>) attributes {dimension_semantics = [], scalar_prefetch = 0 : i64, scratch_operands = 2 : i64, tpu.core_type = #tpu.core_type<tc>} {
    %cst = arith.constant 0.000000e+00 : f32
    %0 = vector.broadcast %cst : f32 to vector<16x16xf32>
    %c0 = arith.constant 0 : index
    %c0_0 = arith.constant 0 : index
    %1 = vector.load %arg10[%c0, %c0_0] : memref<16x16xf32, #tpu.memory_space<vmem>>, vector<16x16xf32>
    tpu.vector_store %arg10[%c0, %c0_0], %0 {strides = array<i32>} : memref<16x16xf32, #tpu.memory_space<vmem>>, vector<16x16xf32>,
    %c0_1 = arith.constant 0 : index
    %2 = memref.load %arg0[%c0_1] : memref<15xi32, #tpu.memory_space<smem>>
    %3 = arith.index_cast %2 : i32 to index
    %c0_2 = arith.constant 0 : index
    %c0_3 = arith.constant 0 : index
    %4 = vector.load %arg1[%3, %c0_2, %c0_3] : memref<32x1x16xf32, #tpu.memory_space<vmem>>, vector<1x1x16xf32>
    %5 = vector.shape_cast %4 : vector<1x1x16xf32> to vector<1x16xf32>
    %c0_4 = arith.constant 0 : index
    %c0_5 = arith.constant 0 : index
    %6 = vector.load %arg10[%c0_4, %c0_5] : memref<16x16xf32, #tpu.memory_space<vmem>>, vector<1x16xf32>
    tpu.vector_store %arg10[%c0_4, %c0_5], %5 {strides = array<i32>} : memref<16x16xf32, #tpu.memory_space<vmem>>, vector<1x16xf32>,
    %c1 = arith.constant 1 : index
    %7 = memref.load %arg0[%c1] : memref<15xi32, #tpu.memory_space<smem>>
    %8 = arith.index_cast %7 : i32 to index
    %c0_6 = arith.constant 0 : index
    %c0_7 = arith.constant 0 : index
    %9 = vector.load %arg1[%8, %c0_6, %c0_7] : memref<32x1x16xf32, #tpu.memory_space<vmem>>, vector<1x1x16xf32>
    %10 = vector.shape_cast %9 : vector<1x1x16xf32> to vector<1x16xf32>
    %c1_8 = arith.constant 1 : index
    %c0_9 = arith.constant 0 : index
    %11 = vector.load %arg10[%c1_8, %c0_9] : memref<16x16xf32, #tpu.memory_space<vmem>>, vector<1x16xf32>
    tpu.vector_store %arg10[%c1_8, %c0_9], %10 {strides = array<i32>} : memref<16x16xf32, #tpu.memory_space<vmem>>, vector<1x16xf32>,
    %c2 = arith.constant 2 : index
    %12 = memref.load %arg0[%c2] : memref<15xi32, #tpu.memory_space<smem>>
    %13 = arith.index_cast %12 : i32 to index
    %c0_10 = arith.constant 0 : index
    %c0_11 = arith.constant 0 : index
    %14 = vector.load %arg1[%13, %c0_10, %c0_11] : memref<32x1x16xf32, #tpu.memory_space<vmem>>, vector<1x1x16xf32>
    %15 = vector.shape_cast %14 : vector<1x1x16xf32> to vector<1x16xf32>
    %c2_12 = arith.constant 2 : index
    %c0_13 = arith.constant 0 : index
    %16 = vector.load %arg10[%c2_12, %c0_13] : memref<16x16xf32, #tpu.memory_space<vmem>>, vector<1x16xf32>
    tpu.vector_store %arg10[%c2_12, %c0_13], %15 {strides = array<i32>} : memref<16x16xf32, #tpu.memory_space<vmem>>, vector<1x16xf32>,
    %c3 = arith.constant 3 : index
    %17 = memref.load %arg0[%c3] : memref<15xi32, #tpu.memory_space<smem>>
    %18 = arith.index_cast %17 : i32 to index
    %c0_14 = arith.constant 0 : index
    %c0_15 = arith.constant 0 : index
    %19 = vector.load %arg1[%18, %c0_14, %c0_15] : memref<32x1x16xf32, #tpu.memory_space<vmem>>, vector<1x1x16xf32>
    %20 = vector.shape_cast %19 : vector<1x1x16xf32> to vector<1x16xf32>
    %c3_16 = arith.constant 3 : index
    %c0_17 = arith.constant 0 : index
    %21 = vector.load %arg10[%c3_16, %c0_17] : memref<16x16xf32, #tpu.memory_space<vmem>>, vector<1x16xf32>
    tpu.vector_store %arg10[%c3_16, %c0_17], %20 {strides = array<i32>} : memref<16x16xf32, #tpu.memory_space<vmem>>, vector<1x16xf32>,
    %c4 = arith.constant 4 : index
    %22 = memref.load %arg0[%c4] : memref<15xi32, #tpu.memory_space<smem>>
    %23 = arith.index_cast %22 : i32 to index
    %c0_18 = arith.constant 0 : index
    %c0_19 = arith.constant 0 : index
    %24 = vector.load %arg1[%23, %c0_18, %c0_19] : memref<32x1x16xf32, #tpu.memory_space<vmem>>, vector<1x1x16xf32>
    %25 = vector.shape_cast %24 : vector<1x1x16xf32> to vector<1x16xf32>
    %c4_20 = arith.constant 4 : index
    %c0_21 = arith.constant 0 : index
    %26 = vector.load %arg10[%c4_20, %c0_21] : memref<16x16xf32, #tpu.memory_space<vmem>>, vector<1x16xf32>
    tpu.vector_store %arg10[%c4_20, %c0_21], %25 {strides = array<i32>} : memref<16x16xf32, #tpu.memory_space<vmem>>, vector<1x16xf32>,
    %c5 = arith.constant 5 : index
    %27 = memref.load %arg0[%c5] : memref<15xi32, #tpu.memory_space<smem>>
    %28 = arith.index_cast %27 : i32 to index
    %c0_22 = arith.constant 0 : index
    %c0_23 = arith.constant 0 : index
    %29 = vector.load %arg1[%28, %c0_22, %c0_23] : memref<32x1x16xf32, #tpu.memory_space<vmem>>, vector<1x1x16xf32>
    %30 = vector.shape_cast %29 : vector<1x1x16xf32> to vector<1x16xf32>
    %c5_24 = arith.constant 5 : index
    %c0_25 = arith.constant 0 : index
    %31 = vector.load %arg10[%c5_24, %c0_25] : memref<16x16xf32, #tpu.memory_space<vmem>>, vector<1x16xf32>
    tpu.vector_store %arg10[%c5_24, %c0_25], %30 {strides = array<i32>} : memref<16x16xf32, #tpu.memory_space<vmem>>, vector<1x16xf32>,
    %c6 = arith.constant 6 : index
    %32 = memref.load %arg0[%c6] : memref<15xi32, #tpu.memory_space<smem>>
    %33 = arith.index_cast %32 : i32 to index
    %c0_26 = arith.constant 0 : index
    %c0_27 = arith.constant 0 : index
    %34 = vector.load %arg1[%33, %c0_26, %c0_27] : memref<32x1x16xf32, #tpu.memory_space<vmem>>, vector<1x1x16xf32>
    %35 = vector.shape_cast %34 : vector<1x1x16xf32> to vector<1x16xf32>
    %c6_28 = arith.constant 6 : index
    %c0_29 = arith.constant 0 : index
    %36 = vector.load %arg10[%c6_28, %c0_29] : memref<16x16xf32, #tpu.memory_space<vmem>>, vector<1x16xf32>
    tpu.vector_store %arg10[%c6_28, %c0_29], %35 {strides = array<i32>} : memref<16x16xf32, #tpu.memory_space<vmem>>, vector<1x16xf32>,
    %c7 = arith.constant 7 : index
    %37 = memref.load %arg0[%c7] : memref<15xi32, #tpu.memory_space<smem>>
    %38 = arith.index_cast %37 : i32 to index
    %c0_30 = arith.constant 0 : index
    %c0_31 = arith.constant 0 : index
    %39 = vector.load %arg1[%38, %c0_30, %c0_31] : memref<32x1x16xf32, #tpu.memory_space<vmem>>, vector<1x1x16xf32>
    %40 = vector.shape_cast %39 : vector<1x1x16xf32> to vector<1x16xf32>
    %c7_32 = arith.constant 7 : index
    %c0_33 = arith.constant 0 : index
    %41 = vector.load %arg10[%c7_32, %c0_33] : memref<16x16xf32, #tpu.memory_space<vmem>>, vector<1x16xf32>
    tpu.vector_store %arg10[%c7_32, %c0_33], %40 {strides = array<i32>} : memref<16x16xf32, #tpu.memory_space<vmem>>, vector<1x16xf32>,
    %c8 = arith.constant 8 : index
    %42 = memref.load %arg0[%c8] : memref<15xi32, #tpu.memory_space<smem>>
    %43 = arith.index_cast %42 : i32 to index
    %c0_34 = arith.constant 0 : index
    %c0_35 = arith.constant 0 : index
    %44 = vector.load %arg1[%43, %c0_34, %c0_35] : memref<32x1x16xf32, #tpu.memory_space<vmem>>, vector<1x1x16xf32>
    %45 = vector.shape_cast %44 : vector<1x1x16xf32> to vector<1x16xf32>
    %c8_36 = arith.constant 8 : index
    %c0_37 = arith.constant 0 : index
    %46 = vector.load %arg10[%c8_36, %c0_37] : memref<16x16xf32, #tpu.memory_space<vmem>>, vector<1x16xf32>
    tpu.vector_store %arg10[%c8_36, %c0_37], %45 {strides = array<i32>} : memref<16x16xf32, #tpu.memory_space<vmem>>, vector<1x16xf32>,
    %c9 = arith.constant 9 : index
    %47 = memref.load %arg0[%c9] : memref<15xi32, #tpu.memory_space<smem>>
    %48 = arith.index_cast %47 : i32 to index
    %c0_38 = arith.constant 0 : index
    %c0_39 = arith.constant 0 : index
    %49 = vector.load %arg1[%48, %c0_38, %c0_39] : memref<32x1x16xf32, #tpu.memory_space<vmem>>, vector<1x1x16xf32>
    %50 = vector.shape_cast %49 : vector<1x1x16xf32> to vector<1x16xf32>
    %c9_40 = arith.constant 9 : index
    %c0_41 = arith.constant 0 : index
    %51 = vector.load %arg10[%c9_40, %c0_41] : memref<16x16xf32, #tpu.memory_space<vmem>>, vector<1x16xf32>
    tpu.vector_store %arg10[%c9_40, %c0_41], %50 {strides = array<i32>} : memref<16x16xf32, #tpu.memory_space<vmem>>, vector<1x16xf32>,
    %c10 = arith.constant 10 : index
    %52 = memref.load %arg0[%c10] : memref<15xi32, #tpu.memory_space<smem>>
    %53 = arith.index_cast %52 : i32 to index
    %c0_42 = arith.constant 0 : index
    %c0_43 = arith.constant 0 : index
    %54 = vector.load %arg1[%53, %c0_42, %c0_43] : memref<32x1x16xf32, #tpu.memory_space<vmem>>, vector<1x1x16xf32>
    %55 = vector.shape_cast %54 : vector<1x1x16xf32> to vector<1x16xf32>
    %c10_44 = arith.constant 10 : index
    %c0_45 = arith.constant 0 : index
    %56 = vector.load %arg10[%c10_44, %c0_45] : memref<16x16xf32, #tpu.memory_space<vmem>>, vector<1x16xf32>
    tpu.vector_store %arg10[%c10_44, %c0_45], %55 {strides = array<i32>} : memref<16x16xf32, #tpu.memory_space<vmem>>, vector<1x16xf32>,
    %c11 = arith.constant 11 : index
    %57 = memref.load %arg0[%c11] : memref<15xi32, #tpu.memory_space<smem>>
    %58 = arith.index_cast %57 : i32 to index
    %c0_46 = arith.constant 0 : index
    %c0_47 = arith.constant 0 : index
    %59 = vector.load %arg1[%58, %c0_46, %c0_47] : memref<32x1x16xf32, #tpu.memory_space<vmem>>, vector<1x1x16xf32>
    %60 = vector.shape_cast %59 : vector<1x1x16xf32> to vector<1x16xf32>
    %c11_48 = arith.constant 11 : index
    %c0_49 = arith.constant 0 : index
    %61 = vector.load %arg10[%c11_48, %c0_49] : memref<16x16xf32, #tpu.memory_space<vmem>>, vector<1x16xf32>
    tpu.vector_store %arg10[%c11_48, %c0_49], %60 {strides = array<i32>} : memref<16x16xf32, #tpu.memory_space<vmem>>, vector<1x16xf32>,
    %c12 = arith.constant 12 : index
    %62 = memref.load %arg0[%c12] : memref<15xi32, #tpu.memory_space<smem>>
    %63 = arith.index_cast %62 : i32 to index
    %c0_50 = arith.constant 0 : index
    %c0_51 = arith.constant 0 : index
    %64 = vector.load %arg1[%63, %c0_50, %c0_51] : memref<32x1x16xf32, #tpu.memory_space<vmem>>, vector<1x1x16xf32>
    %65 = vector.shape_cast %64 : vector<1x1x16xf32> to vector<1x16xf32>
    %c12_52 = arith.constant 12 : index
    %c0_53 = arith.constant 0 : index
    %66 = vector.load %arg10[%c12_52, %c0_53] : memref<16x16xf32, #tpu.memory_space<vmem>>, vector<1x16xf32>
    tpu.vector_store %arg10[%c12_52, %c0_53], %65 {strides = array<i32>} : memref<16x16xf32, #tpu.memory_space<vmem>>, vector<1x16xf32>,
    %c13 = arith.constant 13 : index
    %67 = memref.load %arg0[%c13] : memref<15xi32, #tpu.memory_space<smem>>
    %68 = arith.index_cast %67 : i32 to index
    %c0_54 = arith.constant 0 : index
    %c0_55 = arith.constant 0 : index
    %69 = vector.load %arg1[%68, %c0_54, %c0_55] : memref<32x1x16xf32, #tpu.memory_space<vmem>>, vector<1x1x16xf32>
    %70 = vector.shape_cast %69 : vector<1x1x16xf32> to vector<1x16xf32>
    %c13_56 = arith.constant 13 : index
    %c0_57 = arith.constant 0 : index
    %71 = vector.load %arg10[%c13_56, %c0_57] : memref<16x16xf32, #tpu.memory_space<vmem>>, vector<1x16xf32>
    tpu.vector_store %arg10[%c13_56, %c0_57], %70 {strides = array<i32>} : memref<16x16xf32, #tpu.memory_space<vmem>>, vector<1x16xf32>,
    %c14 = arith.constant 14 : index
    %72 = memref.load %arg0[%c14] : memref<15xi32, #tpu.memory_space<smem>>
    %73 = arith.index_cast %72 : i32 to index
    %c0_58 = arith.constant 0 : index
    %c0_59 = arith.constant 0 : index
    %74 = vector.load %arg1[%73, %c0_58, %c0_59] : memref<32x1x16xf32, #tpu.memory_space<vmem>>, vector<1x1x16xf32>
    %75 = vector.shape_cast %74 : vector<1x1x16xf32> to vector<1x16xf32>
    %c14_60 = arith.constant 14 : index
    %c0_61 = arith.constant 0 : index
    %76 = vector.load %arg10[%c14_60, %c0_61] : memref<16x16xf32, #tpu.memory_space<vmem>>, vector<1x16xf32>
    tpu.vector_store %arg10[%c14_60, %c0_61], %75 {strides = array<i32>} : memref<16x16xf32, #tpu.memory_space<vmem>>, vector<1x16xf32>,
    %c0_62 = arith.constant 0 : index
    %c0_63 = arith.constant 0 : index
    %77 = vector.load %arg10[%c0_62, %c0_63] : memref<16x16xf32, #tpu.memory_space<vmem>>, vector<16x16xf32>
    %c0_64 = arith.constant 0 : index
    %c0_65 = arith.constant 0 : index
    %78 = vector.load %arg2[%c0_64, %c0_65] : memref<16x128xf32, #tpu.memory_space<vmem>>, vector<16x128xf32>
    %cst_66 = arith.constant dense<0.000000e+00> : vector<16x128xf32>
    %79 = tpu.matmul %77, %78, %cst_66 {dimension_numbers = #tpu.dot_dimension_numbers<[1], [0], [0], [1], [0, 0, 1, 1], [], []>} : vector<16x16xf32>, vector<16x128xf32>, vector<16x128xf32> -> vector<16x128xf32>
    %c0_67 = arith.constant 0 : index
    %c0_68 = arith.constant 0 : index
    %80 = vector.load %arg4[%c0_67, %c0_68] : memref<1x128xf32, #tpu.memory_space<vmem>>, vector<1x128xf32>
    %81 = vector.broadcast %80 : vector<1x128xf32> to vector<16x128xf32>
    %82 = arith.addf %79, %81 : vector<16x128xf32>
    %c0_69 = arith.constant 0 : index
    %c0_70 = arith.constant 0 : index
    %83 = vector.load %arg3[%c0_69, %c0_70] : memref<32x128xf32, #tpu.memory_space<vmem>>, vector<32x128xf32>
    %c0_71 = arith.constant 0 : index
    %c0_72 = arith.constant 0 : index
    %84 = vector.load %arg5[%c0_71, %c0_72] : memref<64x128xf32, #tpu.memory_space<vmem>>, vector<64x128xf32>
    %c0_73 = arith.constant 0 : index
    %c0_74 = arith.constant 0 : index
    %85 = vector.load %arg6[%c0_73, %c0_74] : memref<1x128xf32, #tpu.memory_space<vmem>>, vector<1x128xf32>
    %cst_75 = arith.constant 0.000000e+00 : f32
    %86 = vector.broadcast %cst_75 : f32 to vector<1x32xf32>
    %cst_76 = arith.constant 0.000000e+00 : f32
    %87 = vector.broadcast %cst_76 : f32 to vector<1x32xf32>
    %cst_77 = arith.constant 0.000000e+00 : f32
    %88 = vector.broadcast %cst_77 : f32 to vector<1x32xf32>
    %cst_78 = arith.constant 0.000000e+00 : f32
    %89 = vector.broadcast %cst_78 : f32 to vector<1x32xf32>
    %cst_79 = arith.constant 0.000000e+00 : f32
    %90 = vector.broadcast %cst_79 : f32 to vector<16x32xf32>
    %c0_80 = arith.constant 0 : index
    %c0_81 = arith.constant 0 : index
    %91 = vector.load %arg11[%c0_80, %c0_81] : memref<16x32xf32, #tpu.memory_space<vmem>>, vector<16x32xf32>
    tpu.vector_store %arg11[%c0_80, %c0_81], %90 {strides = array<i32>} : memref<16x32xf32, #tpu.memory_space<vmem>>, vector<16x32xf32>,
    %cst_82 = arith.constant dense<0.000000e+00> : vector<1x128xf32>
    %92 = tpu.matmul %86, %83, %cst_82 {dimension_numbers = #tpu.dot_dimension_numbers<[1], [0], [0], [1], [0, 0, 1, 1], [], []>} : vector<1x32xf32>, vector<32x128xf32>, vector<1x128xf32> -> vector<1x128xf32>
    %93 = vector.extract_strided_slice %82 {offsets = [0, 0], sizes = [1, 128], strides = [1, 1]} : vector<16x128xf32> to vector<1x128xf32>
    %94 = arith.addf %92, %93 : vector<1x128xf32>
    %95 = arith.negf %94 : vector<1x128xf32>
    %96 = math.exp %95 : vector<1x128xf32>
    %cst_83 = arith.constant 1.000000e+00 : f32
    %97 = vector.broadcast %cst_83 : f32 to vector<1x128xf32>
    %98 = arith.addf %97, %96 : vector<1x128xf32>
    %99 = arith.divf %97, %98 : vector<1x128xf32>
    %100 = math.tanh %94 : vector<1x128xf32>
    %101 = vector.extract_strided_slice %99 {offsets = [0, 0], sizes = [1, 32], strides = [1, 1]} : vector<1x128xf32> to vector<1x32xf32>
    %102 = vector.extract_strided_slice %99 {offsets = [0, 32], sizes = [1, 32], strides = [1, 1]} : vector<1x128xf32> to vector<1x32xf32>
    %103 = vector.extract_strided_slice %100 {offsets = [0, 64], sizes = [1, 32], strides = [1, 1]} : vector<1x128xf32> to vector<1x32xf32>
    %104 = vector.extract_strided_slice %99 {offsets = [0, 96], sizes = [1, 32], strides = [1, 1]} : vector<1x128xf32> to vector<1x32xf32>
    %105 = arith.mulf %102, %87 : vector<1x32xf32>
    %106 = arith.mulf %101, %103 : vector<1x32xf32>
    %107 = arith.addf %105, %106 : vector<1x32xf32>
    %108 = math.tanh %107 : vector<1x32xf32>
    %109 = arith.mulf %104, %108 : vector<1x32xf32>
    %110 = tpu.concatenate %109, %88 in 1 : vector<1x32xf32>, vector<1x32xf32> -> vector<1x64xf32>
    %cst_84 = arith.constant dense<0.000000e+00> : vector<1x128xf32>
    %111 = tpu.matmul %110, %84, %cst_84 {dimension_numbers = #tpu.dot_dimension_numbers<[1], [0], [0], [1], [0, 0, 1, 1], [], []>} : vector<1x64xf32>, vector<64x128xf32>, vector<1x128xf32> -> vector<1x128xf32>
    %112 = arith.addf %111, %85 : vector<1x128xf32>
    %113 = arith.negf %112 : vector<1x128xf32>
    %114 = math.exp %113 : vector<1x128xf32>
    %cst_85 = arith.constant 1.000000e+00 : f32
    %115 = vector.broadcast %cst_85 : f32 to vector<1x128xf32>
    %116 = arith.addf %115, %114 : vector<1x128xf32>
    %117 = arith.divf %115, %116 : vector<1x128xf32>
    %118 = math.tanh %112 : vector<1x128xf32>
    %119 = vector.extract_strided_slice %117 {offsets = [0, 0], sizes = [1, 32], strides = [1, 1]} : vector<1x128xf32> to vector<1x32xf32>
    %120 = vector.extract_strided_slice %117 {offsets = [0, 32], sizes = [1, 32], strides = [1, 1]} : vector<1x128xf32> to vector<1x32xf32>
    %121 = vector.extract_strided_slice %118 {offsets = [0, 64], sizes = [1, 32], strides = [1, 1]} : vector<1x128xf32> to vector<1x32xf32>
    %122 = vector.extract_strided_slice %117 {offsets = [0, 96], sizes = [1, 32], strides = [1, 1]} : vector<1x128xf32> to vector<1x32xf32>
    %123 = arith.mulf %120, %89 : vector<1x32xf32>
    %124 = arith.mulf %119, %121 : vector<1x32xf32>
    %125 = arith.addf %123, %124 : vector<1x32xf32>
    %126 = math.tanh %125 : vector<1x32xf32>
    %127 = arith.mulf %122, %126 : vector<1x32xf32>
    %c0_86 = arith.constant 0 : index
    %c0_87 = arith.constant 0 : index
    %128 = vector.load %arg11[%c0_86, %c0_87] : memref<16x32xf32, #tpu.memory_space<vmem>>, vector<1x32xf32>
    tpu.vector_store %arg11[%c0_86, %c0_87], %127 {strides = array<i32>} : memref<16x32xf32, #tpu.memory_space<vmem>>, vector<1x32xf32>,
    %cst_88 = arith.constant dense<0.000000e+00> : vector<1x128xf32>
    %129 = tpu.matmul %109, %83, %cst_88 {dimension_numbers = #tpu.dot_dimension_numbers<[1], [0], [0], [1], [0, 0, 1, 1], [], []>} : vector<1x32xf32>, vector<32x128xf32>, vector<1x128xf32> -> vector<1x128xf32>
    %130 = vector.extract_strided_slice %82 {offsets = [1, 0], sizes = [1, 128], strides = [1, 1]} : vector<16x128xf32> to vector<1x128xf32>
    %131 = arith.addf %129, %130 : vector<1x128xf32>
    %132 = arith.negf %131 : vector<1x128xf32>
    %133 = math.exp %132 : vector<1x128xf32>
    %cst_89 = arith.constant 1.000000e+00 : f32
    %134 = vector.broadcast %cst_89 : f32 to vector<1x128xf32>
    %135 = arith.addf %134, %133 : vector<1x128xf32>
    %136 = arith.divf %134, %135 : vector<1x128xf32>
    %137 = math.tanh %131 : vector<1x128xf32>
    %138 = vector.extract_strided_slice %136 {offsets = [0, 0], sizes = [1, 32], strides = [1, 1]} : vector<1x128xf32> to vector<1x32xf32>
    %139 = vector.extract_strided_slice %136 {offsets = [0, 32], sizes = [1, 32], strides = [1, 1]} : vector<1x128xf32> to vector<1x32xf32>
    %140 = vector.extract_strided_slice %137 {offsets = [0, 64], sizes = [1, 32], strides = [1, 1]} : vector<1x128xf32> to vector<1x32xf32>
    %141 = vector.extract_strided_slice %136 {offsets = [0, 96], sizes = [1, 32], strides = [1, 1]} : vector<1x128xf32> to vector<1x32xf32>
    %142 = arith.mulf %139, %107 : vector<1x32xf32>
    %143 = arith.mulf %138, %140 : vector<1x32xf32>
    %144 = arith.addf %142, %143 : vector<1x32xf32>
    %145 = math.tanh %144 : vector<1x32xf32>
    %146 = arith.mulf %141, %145 : vector<1x32xf32>
    %147 = tpu.concatenate %146, %127 in 1 : vector<1x32xf32>, vector<1x32xf32> -> vector<1x64xf32>
    %cst_90 = arith.constant dense<0.000000e+00> : vector<1x128xf32>
    %148 = tpu.matmul %147, %84, %cst_90 {dimension_numbers = #tpu.dot_dimension_numbers<[1], [0], [0], [1], [0, 0, 1, 1], [], []>} : vector<1x64xf32>, vector<64x128xf32>, vector<1x128xf32> -> vector<1x128xf32>
    %149 = arith.addf %148, %85 : vector<1x128xf32>
    %150 = arith.negf %149 : vector<1x128xf32>
    %151 = math.exp %150 : vector<1x128xf32>
    %cst_91 = arith.constant 1.000000e+00 : f32
    %152 = vector.broadcast %cst_91 : f32 to vector<1x128xf32>
    %153 = arith.addf %152, %151 : vector<1x128xf32>
    %154 = arith.divf %152, %153 : vector<1x128xf32>
    %155 = math.tanh %149 : vector<1x128xf32>
    %156 = vector.extract_strided_slice %154 {offsets = [0, 0], sizes = [1, 32], strides = [1, 1]} : vector<1x128xf32> to vector<1x32xf32>
    %157 = vector.extract_strided_slice %154 {offsets = [0, 32], sizes = [1, 32], strides = [1, 1]} : vector<1x128xf32> to vector<1x32xf32>
    %158 = vector.extract_strided_slice %155 {offsets = [0, 64], sizes = [1, 32], strides = [1, 1]} : vector<1x128xf32> to vector<1x32xf32>
    %159 = vector.extract_strided_slice %154 {offsets = [0, 96], sizes = [1, 32], strides = [1, 1]} : vector<1x128xf32> to vector<1x32xf32>
    %160 = arith.mulf %157, %125 : vector<1x32xf32>
    %161 = arith.mulf %156, %158 : vector<1x32xf32>
    %162 = arith.addf %160, %161 : vector<1x32xf32>
    %163 = math.tanh %162 : vector<1x32xf32>
    %164 = arith.mulf %159, %163 : vector<1x32xf32>
    %c1_92 = arith.constant 1 : index
    %c0_93 = arith.constant 0 : index
    %165 = vector.load %arg11[%c1_92, %c0_93] : memref<16x32xf32, #tpu.memory_space<vmem>>, vector<1x32xf32>
    tpu.vector_store %arg11[%c1_92, %c0_93], %164 {strides = array<i32>} : memref<16x32xf32, #tpu.memory_space<vmem>>, vector<1x32xf32>,
    %cst_94 = arith.constant dense<0.000000e+00> : vector<1x128xf32>
    %166 = tpu.matmul %146, %83, %cst_94 {dimension_numbers = #tpu.dot_dimension_numbers<[1], [0], [0], [1], [0, 0, 1, 1], [], []>} : vector<1x32xf32>, vector<32x128xf32>, vector<1x128xf32> -> vector<1x128xf32>
    %167 = vector.extract_strided_slice %82 {offsets = [2, 0], sizes = [1, 128], strides = [1, 1]} : vector<16x128xf32> to vector<1x128xf32>
    %168 = arith.addf %166, %167 : vector<1x128xf32>
    %169 = arith.negf %168 : vector<1x128xf32>
    %170 = math.exp %169 : vector<1x128xf32>
    %cst_95 = arith.constant 1.000000e+00 : f32
    %171 = vector.broadcast %cst_95 : f32 to vector<1x128xf32>
    %172 = arith.addf %171, %170 : vector<1x128xf32>
    %173 = arith.divf %171, %172 : vector<1x128xf32>
    %174 = math.tanh %168 : vector<1x128xf32>
    %175 = vector.extract_strided_slice %173 {offsets = [0, 0], sizes = [1, 32], strides = [1, 1]} : vector<1x128xf32> to vector<1x32xf32>
    %176 = vector.extract_strided_slice %173 {offsets = [0, 32], sizes = [1, 32], strides = [1, 1]} : vector<1x128xf32> to vector<1x32xf32>
    %177 = vector.extract_strided_slice %174 {offsets = [0, 64], sizes = [1, 32], strides = [1, 1]} : vector<1x128xf32> to vector<1x32xf32>
    %178 = vector.extract_strided_slice %173 {offsets = [0, 96], sizes = [1, 32], strides = [1, 1]} : vector<1x128xf32> to vector<1x32xf32>
    %179 = arith.mulf %176, %144 : vector<1x32xf32>
    %180 = arith.mulf %175, %177 : vector<1x32xf32>
    %181 = arith.addf %179, %180 : vector<1x32xf32>
    %182 = math.tanh %181 : vector<1x32xf32>
    %183 = arith.mulf %178, %182 : vector<1x32xf32>
    %184 = tpu.concatenate %183, %164 in 1 : vector<1x32xf32>, vector<1x32xf32> -> vector<1x64xf32>
    %cst_96 = arith.constant dense<0.000000e+00> : vector<1x128xf32>
    %185 = tpu.matmul %184, %84, %cst_96 {dimension_numbers = #tpu.dot_dimension_numbers<[1], [0], [0], [1], [0, 0, 1, 1], [], []>} : vector<1x64xf32>, vector<64x128xf32>, vector<1x128xf32> -> vector<1x128xf32>
    %186 = arith.addf %185, %85 : vector<1x128xf32>
    %187 = arith.negf %186 : vector<1x128xf32>
    %188 = math.exp %187 : vector<1x128xf32>
    %cst_97 = arith.constant 1.000000e+00 : f32
    %189 = vector.broadcast %cst_97 : f32 to vector<1x128xf32>
    %190 = arith.addf %189, %188 : vector<1x128xf32>
    %191 = arith.divf %189, %190 : vector<1x128xf32>
    %192 = math.tanh %186 : vector<1x128xf32>
    %193 = vector.extract_strided_slice %191 {offsets = [0, 0], sizes = [1, 32], strides = [1, 1]} : vector<1x128xf32> to vector<1x32xf32>
    %194 = vector.extract_strided_slice %191 {offsets = [0, 32], sizes = [1, 32], strides = [1, 1]} : vector<1x128xf32> to vector<1x32xf32>
    %195 = vector.extract_strided_slice %192 {offsets = [0, 64], sizes = [1, 32], strides = [1, 1]} : vector<1x128xf32> to vector<1x32xf32>
    %196 = vector.extract_strided_slice %191 {offsets = [0, 96], sizes = [1, 32], strides = [1, 1]} : vector<1x128xf32> to vector<1x32xf32>
    %197 = arith.mulf %194, %162 : vector<1x32xf32>
    %198 = arith.mulf %193, %195 : vector<1x32xf32>
    %199 = arith.addf %197, %198 : vector<1x32xf32>
    %200 = math.tanh %199 : vector<1x32xf32>
    %201 = arith.mulf %196, %200 : vector<1x32xf32>
    %c2_98 = arith.constant 2 : index
    %c0_99 = arith.constant 0 : index
    %202 = vector.load %arg11[%c2_98, %c0_99] : memref<16x32xf32, #tpu.memory_space<vmem>>, vector<1x32xf32>
    tpu.vector_store %arg11[%c2_98, %c0_99], %201 {strides = array<i32>} : memref<16x32xf32, #tpu.memory_space<vmem>>, vector<1x32xf32>,
    %cst_100 = arith.constant dense<0.000000e+00> : vector<1x128xf32>
    %203 = tpu.matmul %183, %83, %cst_100 {dimension_numbers = #tpu.dot_dimension_numbers<[1], [0], [0], [1], [0, 0, 1, 1], [], []>} : vector<1x32xf32>, vector<32x128xf32>, vector<1x128xf32> -> vector<1x128xf32>
    %204 = vector.extract_strided_slice %82 {offsets = [3, 0], sizes = [1, 128], strides = [1, 1]} : vector<16x128xf32> to vector<1x128xf32>
    %205 = arith.addf %203, %204 : vector<1x128xf32>
    %206 = arith.negf %205 : vector<1x128xf32>
    %207 = math.exp %206 : vector<1x128xf32>
    %cst_101 = arith.constant 1.000000e+00 : f32
    %208 = vector.broadcast %cst_101 : f32 to vector<1x128xf32>
    %209 = arith.addf %208, %207 : vector<1x128xf32>
    %210 = arith.divf %208, %209 : vector<1x128xf32>
    %211 = math.tanh %205 : vector<1x128xf32>
    %212 = vector.extract_strided_slice %210 {offsets = [0, 0], sizes = [1, 32], strides = [1, 1]} : vector<1x128xf32> to vector<1x32xf32>
    %213 = vector.extract_strided_slice %210 {offsets = [0, 32], sizes = [1, 32], strides = [1, 1]} : vector<1x128xf32> to vector<1x32xf32>
    %214 = vector.extract_strided_slice %211 {offsets = [0, 64], sizes = [1, 32], strides = [1, 1]} : vector<1x128xf32> to vector<1x32xf32>
    %215 = vector.extract_strided_slice %210 {offsets = [0, 96], sizes = [1, 32], strides = [1, 1]} : vector<1x128xf32> to vector<1x32xf32>
    %216 = arith.mulf %213, %181 : vector<1x32xf32>
    %217 = arith.mulf %212, %214 : vector<1x32xf32>
    %218 = arith.addf %216, %217 : vector<1x32xf32>
    %219 = math.tanh %218 : vector<1x32xf32>
    %220 = arith.mulf %215, %219 : vector<1x32xf32>
    %221 = tpu.concatenate %220, %201 in 1 : vector<1x32xf32>, vector<1x32xf32> -> vector<1x64xf32>
    %cst_102 = arith.constant dense<0.000000e+00> : vector<1x128xf32>
    %222 = tpu.matmul %221, %84, %cst_102 {dimension_numbers = #tpu.dot_dimension_numbers<[1], [0], [0], [1], [0, 0, 1, 1], [], []>} : vector<1x64xf32>, vector<64x128xf32>, vector<1x128xf32> -> vector<1x128xf32>
    %223 = arith.addf %222, %85 : vector<1x128xf32>
    %224 = arith.negf %223 : vector<1x128xf32>
    %225 = math.exp %224 : vector<1x128xf32>
    %cst_103 = arith.constant 1.000000e+00 : f32
    %226 = vector.broadcast %cst_103 : f32 to vector<1x128xf32>
    %227 = arith.addf %226, %225 : vector<1x128xf32>
    %228 = arith.divf %226, %227 : vector<1x128xf32>
    %229 = math.tanh %223 : vector<1x128xf32>
    %230 = vector.extract_strided_slice %228 {offsets = [0, 0], sizes = [1, 32], strides = [1, 1]} : vector<1x128xf32> to vector<1x32xf32>
    %231 = vector.extract_strided_slice %228 {offsets = [0, 32], sizes = [1, 32], strides = [1, 1]} : vector<1x128xf32> to vector<1x32xf32>
    %232 = vector.extract_strided_slice %229 {offsets = [0, 64], sizes = [1, 32], strides = [1, 1]} : vector<1x128xf32> to vector<1x32xf32>
    %233 = vector.extract_strided_slice %228 {offsets = [0, 96], sizes = [1, 32], strides = [1, 1]} : vector<1x128xf32> to vector<1x32xf32>
    %234 = arith.mulf %231, %199 : vector<1x32xf32>
    %235 = arith.mulf %230, %232 : vector<1x32xf32>
    %236 = arith.addf %234, %235 : vector<1x32xf32>
    %237 = math.tanh %236 : vector<1x32xf32>
    %238 = arith.mulf %233, %237 : vector<1x32xf32>
    %c3_104 = arith.constant 3 : index
    %c0_105 = arith.constant 0 : index
    %239 = vector.load %arg11[%c3_104, %c0_105] : memref<16x32xf32, #tpu.memory_space<vmem>>, vector<1x32xf32>
    tpu.vector_store %arg11[%c3_104, %c0_105], %238 {strides = array<i32>} : memref<16x32xf32, #tpu.memory_space<vmem>>, vector<1x32xf32>,
    %cst_106 = arith.constant dense<0.000000e+00> : vector<1x128xf32>
    %240 = tpu.matmul %220, %83, %cst_106 {dimension_numbers = #tpu.dot_dimension_numbers<[1], [0], [0], [1], [0, 0, 1, 1], [], []>} : vector<1x32xf32>, vector<32x128xf32>, vector<1x128xf32> -> vector<1x128xf32>
    %241 = vector.extract_strided_slice %82 {offsets = [4, 0], sizes = [1, 128], strides = [1, 1]} : vector<16x128xf32> to vector<1x128xf32>
    %242 = arith.addf %240, %241 : vector<1x128xf32>
    %243 = arith.negf %242 : vector<1x128xf32>
    %244 = math.exp %243 : vector<1x128xf32>
    %cst_107 = arith.constant 1.000000e+00 : f32
    %245 = vector.broadcast %cst_107 : f32 to vector<1x128xf32>
    %246 = arith.addf %245, %244 : vector<1x128xf32>
    %247 = arith.divf %245, %246 : vector<1x128xf32>
    %248 = math.tanh %242 : vector<1x128xf32>
    %249 = vector.extract_strided_slice %247 {offsets = [0, 0], sizes = [1, 32], strides = [1, 1]} : vector<1x128xf32> to vector<1x32xf32>
    %250 = vector.extract_strided_slice %247 {offsets = [0, 32], sizes = [1, 32], strides = [1, 1]} : vector<1x128xf32> to vector<1x32xf32>
    %251 = vector.extract_strided_slice %248 {offsets = [0, 64], sizes = [1, 32], strides = [1, 1]} : vector<1x128xf32> to vector<1x32xf32>
    %252 = vector.extract_strided_slice %247 {offsets = [0, 96], sizes = [1, 32], strides = [1, 1]} : vector<1x128xf32> to vector<1x32xf32>
    %253 = arith.mulf %250, %218 : vector<1x32xf32>
    %254 = arith.mulf %249, %251 : vector<1x32xf32>
    %255 = arith.addf %253, %254 : vector<1x32xf32>
    %256 = math.tanh %255 : vector<1x32xf32>
    %257 = arith.mulf %252, %256 : vector<1x32xf32>
    %258 = tpu.concatenate %257, %238 in 1 : vector<1x32xf32>, vector<1x32xf32> -> vector<1x64xf32>
    %cst_108 = arith.constant dense<0.000000e+00> : vector<1x128xf32>
    %259 = tpu.matmul %258, %84, %cst_108 {dimension_numbers = #tpu.dot_dimension_numbers<[1], [0], [0], [1], [0, 0, 1, 1], [], []>} : vector<1x64xf32>, vector<64x128xf32>, vector<1x128xf32> -> vector<1x128xf32>
    %260 = arith.addf %259, %85 : vector<1x128xf32>
    %261 = arith.negf %260 : vector<1x128xf32>
    %262 = math.exp %261 : vector<1x128xf32>
    %cst_109 = arith.constant 1.000000e+00 : f32
    %263 = vector.broadcast %cst_109 : f32 to vector<1x128xf32>
    %264 = arith.addf %263, %262 : vector<1x128xf32>
    %265 = arith.divf %263, %264 : vector<1x128xf32>
    %266 = math.tanh %260 : vector<1x128xf32>
    %267 = vector.extract_strided_slice %265 {offsets = [0, 0], sizes = [1, 32], strides = [1, 1]} : vector<1x128xf32> to vector<1x32xf32>
    %268 = vector.extract_strided_slice %265 {offsets = [0, 32], sizes = [1, 32], strides = [1, 1]} : vector<1x128xf32> to vector<1x32xf32>
    %269 = vector.extract_strided_slice %266 {offsets = [0, 64], sizes = [1, 32], strides = [1, 1]} : vector<1x128xf32> to vector<1x32xf32>
    %270 = vector.extract_strided_slice %265 {offsets = [0, 96], sizes = [1, 32], strides = [1, 1]} : vector<1x128xf32> to vector<1x32xf32>
    %271 = arith.mulf %268, %236 : vector<1x32xf32>
    %272 = arith.mulf %267, %269 : vector<1x32xf32>
    %273 = arith.addf %271, %272 : vector<1x32xf32>
    %274 = math.tanh %273 : vector<1x32xf32>
    %275 = arith.mulf %270, %274 : vector<1x32xf32>
    %c4_110 = arith.constant 4 : index
    %c0_111 = arith.constant 0 : index
    %276 = vector.load %arg11[%c4_110, %c0_111] : memref<16x32xf32, #tpu.memory_space<vmem>>, vector<1x32xf32>
    tpu.vector_store %arg11[%c4_110, %c0_111], %275 {strides = array<i32>} : memref<16x32xf32, #tpu.memory_space<vmem>>, vector<1x32xf32>,
    %cst_112 = arith.constant dense<0.000000e+00> : vector<1x128xf32>
    %277 = tpu.matmul %257, %83, %cst_112 {dimension_numbers = #tpu.dot_dimension_numbers<[1], [0], [0], [1], [0, 0, 1, 1], [], []>} : vector<1x32xf32>, vector<32x128xf32>, vector<1x128xf32> -> vector<1x128xf32>
    %278 = vector.extract_strided_slice %82 {offsets = [5, 0], sizes = [1, 128], strides = [1, 1]} : vector<16x128xf32> to vector<1x128xf32>
    %279 = arith.addf %277, %278 : vector<1x128xf32>
    %280 = arith.negf %279 : vector<1x128xf32>
    %281 = math.exp %280 : vector<1x128xf32>
    %cst_113 = arith.constant 1.000000e+00 : f32
    %282 = vector.broadcast %cst_113 : f32 to vector<1x128xf32>
    %283 = arith.addf %282, %281 : vector<1x128xf32>
    %284 = arith.divf %282, %283 : vector<1x128xf32>
    %285 = math.tanh %279 : vector<1x128xf32>
    %286 = vector.extract_strided_slice %284 {offsets = [0, 0], sizes = [1, 32], strides = [1, 1]} : vector<1x128xf32> to vector<1x32xf32>
    %287 = vector.extract_strided_slice %284 {offsets = [0, 32], sizes = [1, 32], strides = [1, 1]} : vector<1x128xf32> to vector<1x32xf32>
    %288 = vector.extract_strided_slice %285 {offsets = [0, 64], sizes = [1, 32], strides = [1, 1]} : vector<1x128xf32> to vector<1x32xf32>
    %289 = vector.extract_strided_slice %284 {offsets = [0, 96], sizes = [1, 32], strides = [1, 1]} : vector<1x128xf32> to vector<1x32xf32>
    %290 = arith.mulf %287, %255 : vector<1x32xf32>
    %291 = arith.mulf %286, %288 : vector<1x32xf32>
    %292 = arith.addf %290, %291 : vector<1x32xf32>
    %293 = math.tanh %292 : vector<1x32xf32>
    %294 = arith.mulf %289, %293 : vector<1x32xf32>
    %295 = tpu.concatenate %294, %275 in 1 : vector<1x32xf32>, vector<1x32xf32> -> vector<1x64xf32>
    %cst_114 = arith.constant dense<0.000000e+00> : vector<1x128xf32>
    %296 = tpu.matmul %295, %84, %cst_114 {dimension_numbers = #tpu.dot_dimension_numbers<[1], [0], [0], [1], [0, 0, 1, 1], [], []>} : vector<1x64xf32>, vector<64x128xf32>, vector<1x128xf32> -> vector<1x128xf32>
    %297 = arith.addf %296, %85 : vector<1x128xf32>
    %298 = arith.negf %297 : vector<1x128xf32>
    %299 = math.exp %298 : vector<1x128xf32>
    %cst_115 = arith.constant 1.000000e+00 : f32
    %300 = vector.broadcast %cst_115 : f32 to vector<1x128xf32>
    %301 = arith.addf %300, %299 : vector<1x128xf32>
    %302 = arith.divf %300, %301 : vector<1x128xf32>
    %303 = math.tanh %297 : vector<1x128xf32>
    %304 = vector.extract_strided_slice %302 {offsets = [0, 0], sizes = [1, 32], strides = [1, 1]} : vector<1x128xf32> to vector<1x32xf32>
    %305 = vector.extract_strided_slice %302 {offsets = [0, 32], sizes = [1, 32], strides = [1, 1]} : vector<1x128xf32> to vector<1x32xf32>
    %306 = vector.extract_strided_slice %303 {offsets = [0, 64], sizes = [1, 32], strides = [1, 1]} : vector<1x128xf32> to vector<1x32xf32>
    %307 = vector.extract_strided_slice %302 {offsets = [0, 96], sizes = [1, 32], strides = [1, 1]} : vector<1x128xf32> to vector<1x32xf32>
    %308 = arith.mulf %305, %273 : vector<1x32xf32>
    %309 = arith.mulf %304, %306 : vector<1x32xf32>
    %310 = arith.addf %308, %309 : vector<1x32xf32>
    %311 = math.tanh %310 : vector<1x32xf32>
    %312 = arith.mulf %307, %311 : vector<1x32xf32>
    %c5_116 = arith.constant 5 : index
    %c0_117 = arith.constant 0 : index
    %313 = vector.load %arg11[%c5_116, %c0_117] : memref<16x32xf32, #tpu.memory_space<vmem>>, vector<1x32xf32>
    tpu.vector_store %arg11[%c5_116, %c0_117], %312 {strides = array<i32>} : memref<16x32xf32, #tpu.memory_space<vmem>>, vector<1x32xf32>,
    %cst_118 = arith.constant dense<0.000000e+00> : vector<1x128xf32>
    %314 = tpu.matmul %294, %83, %cst_118 {dimension_numbers = #tpu.dot_dimension_numbers<[1], [0], [0], [1], [0, 0, 1, 1], [], []>} : vector<1x32xf32>, vector<32x128xf32>, vector<1x128xf32> -> vector<1x128xf32>
    %315 = vector.extract_strided_slice %82 {offsets = [6, 0], sizes = [1, 128], strides = [1, 1]} : vector<16x128xf32> to vector<1x128xf32>
    %316 = arith.addf %314, %315 : vector<1x128xf32>
    %317 = arith.negf %316 : vector<1x128xf32>
    %318 = math.exp %317 : vector<1x128xf32>
    %cst_119 = arith.constant 1.000000e+00 : f32
    %319 = vector.broadcast %cst_119 : f32 to vector<1x128xf32>
    %320 = arith.addf %319, %318 : vector<1x128xf32>
    %321 = arith.divf %319, %320 : vector<1x128xf32>
    %322 = math.tanh %316 : vector<1x128xf32>
    %323 = vector.extract_strided_slice %321 {offsets = [0, 0], sizes = [1, 32], strides = [1, 1]} : vector<1x128xf32> to vector<1x32xf32>
    %324 = vector.extract_strided_slice %321 {offsets = [0, 32], sizes = [1, 32], strides = [1, 1]} : vector<1x128xf32> to vector<1x32xf32>
    %325 = vector.extract_strided_slice %322 {offsets = [0, 64], sizes = [1, 32], strides = [1, 1]} : vector<1x128xf32> to vector<1x32xf32>
    %326 = vector.extract_strided_slice %321 {offsets = [0, 96], sizes = [1, 32], strides = [1, 1]} : vector<1x128xf32> to vector<1x32xf32>
    %327 = arith.mulf %324, %292 : vector<1x32xf32>
    %328 = arith.mulf %323, %325 : vector<1x32xf32>
    %329 = arith.addf %327, %328 : vector<1x32xf32>
    %330 = math.tanh %329 : vector<1x32xf32>
    %331 = arith.mulf %326, %330 : vector<1x32xf32>
    %332 = tpu.concatenate %331, %312 in 1 : vector<1x32xf32>, vector<1x32xf32> -> vector<1x64xf32>
    %cst_120 = arith.constant dense<0.000000e+00> : vector<1x128xf32>
    %333 = tpu.matmul %332, %84, %cst_120 {dimension_numbers = #tpu.dot_dimension_numbers<[1], [0], [0], [1], [0, 0, 1, 1], [], []>} : vector<1x64xf32>, vector<64x128xf32>, vector<1x128xf32> -> vector<1x128xf32>
    %334 = arith.addf %333, %85 : vector<1x128xf32>
    %335 = arith.negf %334 : vector<1x128xf32>
    %336 = math.exp %335 : vector<1x128xf32>
    %cst_121 = arith.constant 1.000000e+00 : f32
    %337 = vector.broadcast %cst_121 : f32 to vector<1x128xf32>
    %338 = arith.addf %337, %336 : vector<1x128xf32>
    %339 = arith.divf %337, %338 : vector<1x128xf32>
    %340 = math.tanh %334 : vector<1x128xf32>
    %341 = vector.extract_strided_slice %339 {offsets = [0, 0], sizes = [1, 32], strides = [1, 1]} : vector<1x128xf32> to vector<1x32xf32>
    %342 = vector.extract_strided_slice %339 {offsets = [0, 32], sizes = [1, 32], strides = [1, 1]} : vector<1x128xf32> to vector<1x32xf32>
    %343 = vector.extract_strided_slice %340 {offsets = [0, 64], sizes = [1, 32], strides = [1, 1]} : vector<1x128xf32> to vector<1x32xf32>
    %344 = vector.extract_strided_slice %339 {offsets = [0, 96], sizes = [1, 32], strides = [1, 1]} : vector<1x128xf32> to vector<1x32xf32>
    %345 = arith.mulf %342, %310 : vector<1x32xf32>
    %346 = arith.mulf %341, %343 : vector<1x32xf32>
    %347 = arith.addf %345, %346 : vector<1x32xf32>
    %348 = math.tanh %347 : vector<1x32xf32>
    %349 = arith.mulf %344, %348 : vector<1x32xf32>
    %c6_122 = arith.constant 6 : index
    %c0_123 = arith.constant 0 : index
    %350 = vector.load %arg11[%c6_122, %c0_123] : memref<16x32xf32, #tpu.memory_space<vmem>>, vector<1x32xf32>
    tpu.vector_store %arg11[%c6_122, %c0_123], %349 {strides = array<i32>} : memref<16x32xf32, #tpu.memory_space<vmem>>, vector<1x32xf32>,
    %cst_124 = arith.constant dense<0.000000e+00> : vector<1x128xf32>
    %351 = tpu.matmul %331, %83, %cst_124 {dimension_numbers = #tpu.dot_dimension_numbers<[1], [0], [0], [1], [0, 0, 1, 1], [], []>} : vector<1x32xf32>, vector<32x128xf32>, vector<1x128xf32> -> vector<1x128xf32>
    %352 = vector.extract_strided_slice %82 {offsets = [7, 0], sizes = [1, 128], strides = [1, 1]} : vector<16x128xf32> to vector<1x128xf32>
    %353 = arith.addf %351, %352 : vector<1x128xf32>
    %354 = arith.negf %353 : vector<1x128xf32>
    %355 = math.exp %354 : vector<1x128xf32>
    %cst_125 = arith.constant 1.000000e+00 : f32
    %356 = vector.broadcast %cst_125 : f32 to vector<1x128xf32>
    %357 = arith.addf %356, %355 : vector<1x128xf32>
    %358 = arith.divf %356, %357 : vector<1x128xf32>
    %359 = math.tanh %353 : vector<1x128xf32>
    %360 = vector.extract_strided_slice %358 {offsets = [0, 0], sizes = [1, 32], strides = [1, 1]} : vector<1x128xf32> to vector<1x32xf32>
    %361 = vector.extract_strided_slice %358 {offsets = [0, 32], sizes = [1, 32], strides = [1, 1]} : vector<1x128xf32> to vector<1x32xf32>
    %362 = vector.extract_strided_slice %359 {offsets = [0, 64], sizes = [1, 32], strides = [1, 1]} : vector<1x128xf32> to vector<1x32xf32>
    %363 = vector.extract_strided_slice %358 {offsets = [0, 96], sizes = [1, 32], strides = [1, 1]} : vector<1x128xf32> to vector<1x32xf32>
    %364 = arith.mulf %361, %329 : vector<1x32xf32>
    %365 = arith.mulf %360, %362 : vector<1x32xf32>
    %366 = arith.addf %364, %365 : vector<1x32xf32>
    %367 = math.tanh %366 : vector<1x32xf32>
    %368 = arith.mulf %363, %367 : vector<1x32xf32>
    %369 = tpu.concatenate %368, %349 in 1 : vector<1x32xf32>, vector<1x32xf32> -> vector<1x64xf32>
    %cst_126 = arith.constant dense<0.000000e+00> : vector<1x128xf32>
    %370 = tpu.matmul %369, %84, %cst_126 {dimension_numbers = #tpu.dot_dimension_numbers<[1], [0], [0], [1], [0, 0, 1, 1], [], []>} : vector<1x64xf32>, vector<64x128xf32>, vector<1x128xf32> -> vector<1x128xf32>
    %371 = arith.addf %370, %85 : vector<1x128xf32>
    %372 = arith.negf %371 : vector<1x128xf32>
    %373 = math.exp %372 : vector<1x128xf32>
    %cst_127 = arith.constant 1.000000e+00 : f32
    %374 = vector.broadcast %cst_127 : f32 to vector<1x128xf32>
    %375 = arith.addf %374, %373 : vector<1x128xf32>
    %376 = arith.divf %374, %375 : vector<1x128xf32>
    %377 = math.tanh %371 : vector<1x128xf32>
    %378 = vector.extract_strided_slice %376 {offsets = [0, 0], sizes = [1, 32], strides = [1, 1]} : vector<1x128xf32> to vector<1x32xf32>
    %379 = vector.extract_strided_slice %376 {offsets = [0, 32], sizes = [1, 32], strides = [1, 1]} : vector<1x128xf32> to vector<1x32xf32>
    %380 = vector.extract_strided_slice %377 {offsets = [0, 64], sizes = [1, 32], strides = [1, 1]} : vector<1x128xf32> to vector<1x32xf32>
    %381 = vector.extract_strided_slice %376 {offsets = [0, 96], sizes = [1, 32], strides = [1, 1]} : vector<1x128xf32> to vector<1x32xf32>
    %382 = arith.mulf %379, %347 : vector<1x32xf32>
    %383 = arith.mulf %378, %380 : vector<1x32xf32>
    %384 = arith.addf %382, %383 : vector<1x32xf32>
    %385 = math.tanh %384 : vector<1x32xf32>
    %386 = arith.mulf %381, %385 : vector<1x32xf32>
    %c7_128 = arith.constant 7 : index
    %c0_129 = arith.constant 0 : index
    %387 = vector.load %arg11[%c7_128, %c0_129] : memref<16x32xf32, #tpu.memory_space<vmem>>, vector<1x32xf32>
    tpu.vector_store %arg11[%c7_128, %c0_129], %386 {strides = array<i32>} : memref<16x32xf32, #tpu.memory_space<vmem>>, vector<1x32xf32>,
    %cst_130 = arith.constant dense<0.000000e+00> : vector<1x128xf32>
    %388 = tpu.matmul %368, %83, %cst_130 {dimension_numbers = #tpu.dot_dimension_numbers<[1], [0], [0], [1], [0, 0, 1, 1], [], []>} : vector<1x32xf32>, vector<32x128xf32>, vector<1x128xf32> -> vector<1x128xf32>
    %389 = vector.extract_strided_slice %82 {offsets = [8, 0], sizes = [1, 128], strides = [1, 1]} : vector<16x128xf32> to vector<1x128xf32>
    %390 = arith.addf %388, %389 : vector<1x128xf32>
    %391 = arith.negf %390 : vector<1x128xf32>
    %392 = math.exp %391 : vector<1x128xf32>
    %cst_131 = arith.constant 1.000000e+00 : f32
    %393 = vector.broadcast %cst_131 : f32 to vector<1x128xf32>
    %394 = arith.addf %393, %392 : vector<1x128xf32>
    %395 = arith.divf %393, %394 : vector<1x128xf32>
    %396 = math.tanh %390 : vector<1x128xf32>
    %397 = vector.extract_strided_slice %395 {offsets = [0, 0], sizes = [1, 32], strides = [1, 1]} : vector<1x128xf32> to vector<1x32xf32>
    %398 = vector.extract_strided_slice %395 {offsets = [0, 32], sizes = [1, 32], strides = [1, 1]} : vector<1x128xf32> to vector<1x32xf32>
    %399 = vector.extract_strided_slice %396 {offsets = [0, 64], sizes = [1, 32], strides = [1, 1]} : vector<1x128xf32> to vector<1x32xf32>
    %400 = vector.extract_strided_slice %395 {offsets = [0, 96], sizes = [1, 32], strides = [1, 1]} : vector<1x128xf32> to vector<1x32xf32>
    %401 = arith.mulf %398, %366 : vector<1x32xf32>
    %402 = arith.mulf %397, %399 : vector<1x32xf32>
    %403 = arith.addf %401, %402 : vector<1x32xf32>
    %404 = math.tanh %403 : vector<1x32xf32>
    %405 = arith.mulf %400, %404 : vector<1x32xf32>
    %406 = tpu.concatenate %405, %386 in 1 : vector<1x32xf32>, vector<1x32xf32> -> vector<1x64xf32>
    %cst_132 = arith.constant dense<0.000000e+00> : vector<1x128xf32>
    %407 = tpu.matmul %406, %84, %cst_132 {dimension_numbers = #tpu.dot_dimension_numbers<[1], [0], [0], [1], [0, 0, 1, 1], [], []>} : vector<1x64xf32>, vector<64x128xf32>, vector<1x128xf32> -> vector<1x128xf32>
    %408 = arith.addf %407, %85 : vector<1x128xf32>
    %409 = arith.negf %408 : vector<1x128xf32>
    %410 = math.exp %409 : vector<1x128xf32>
    %cst_133 = arith.constant 1.000000e+00 : f32
    %411 = vector.broadcast %cst_133 : f32 to vector<1x128xf32>
    %412 = arith.addf %411, %410 : vector<1x128xf32>
    %413 = arith.divf %411, %412 : vector<1x128xf32>
    %414 = math.tanh %408 : vector<1x128xf32>
    %415 = vector.extract_strided_slice %413 {offsets = [0, 0], sizes = [1, 32], strides = [1, 1]} : vector<1x128xf32> to vector<1x32xf32>
    %416 = vector.extract_strided_slice %413 {offsets = [0, 32], sizes = [1, 32], strides = [1, 1]} : vector<1x128xf32> to vector<1x32xf32>
    %417 = vector.extract_strided_slice %414 {offsets = [0, 64], sizes = [1, 32], strides = [1, 1]} : vector<1x128xf32> to vector<1x32xf32>
    %418 = vector.extract_strided_slice %413 {offsets = [0, 96], sizes = [1, 32], strides = [1, 1]} : vector<1x128xf32> to vector<1x32xf32>
    %419 = arith.mulf %416, %384 : vector<1x32xf32>
    %420 = arith.mulf %415, %417 : vector<1x32xf32>
    %421 = arith.addf %419, %420 : vector<1x32xf32>
    %422 = math.tanh %421 : vector<1x32xf32>
    %423 = arith.mulf %418, %422 : vector<1x32xf32>
    %c8_134 = arith.constant 8 : index
    %c0_135 = arith.constant 0 : index
    %424 = vector.load %arg11[%c8_134, %c0_135] : memref<16x32xf32, #tpu.memory_space<vmem>>, vector<1x32xf32>
    tpu.vector_store %arg11[%c8_134, %c0_135], %423 {strides = array<i32>} : memref<16x32xf32, #tpu.memory_space<vmem>>, vector<1x32xf32>,
    %cst_136 = arith.constant dense<0.000000e+00> : vector<1x128xf32>
    %425 = tpu.matmul %405, %83, %cst_136 {dimension_numbers = #tpu.dot_dimension_numbers<[1], [0], [0], [1], [0, 0, 1, 1], [], []>} : vector<1x32xf32>, vector<32x128xf32>, vector<1x128xf32> -> vector<1x128xf32>
    %426 = vector.extract_strided_slice %82 {offsets = [9, 0], sizes = [1, 128], strides = [1, 1]} : vector<16x128xf32> to vector<1x128xf32>
    %427 = arith.addf %425, %426 : vector<1x128xf32>
    %428 = arith.negf %427 : vector<1x128xf32>
    %429 = math.exp %428 : vector<1x128xf32>
    %cst_137 = arith.constant 1.000000e+00 : f32
    %430 = vector.broadcast %cst_137 : f32 to vector<1x128xf32>
    %431 = arith.addf %430, %429 : vector<1x128xf32>
    %432 = arith.divf %430, %431 : vector<1x128xf32>
    %433 = math.tanh %427 : vector<1x128xf32>
    %434 = vector.extract_strided_slice %432 {offsets = [0, 0], sizes = [1, 32], strides = [1, 1]} : vector<1x128xf32> to vector<1x32xf32>
    %435 = vector.extract_strided_slice %432 {offsets = [0, 32], sizes = [1, 32], strides = [1, 1]} : vector<1x128xf32> to vector<1x32xf32>
    %436 = vector.extract_strided_slice %433 {offsets = [0, 64], sizes = [1, 32], strides = [1, 1]} : vector<1x128xf32> to vector<1x32xf32>
    %437 = vector.extract_strided_slice %432 {offsets = [0, 96], sizes = [1, 32], strides = [1, 1]} : vector<1x128xf32> to vector<1x32xf32>
    %438 = arith.mulf %435, %403 : vector<1x32xf32>
    %439 = arith.mulf %434, %436 : vector<1x32xf32>
    %440 = arith.addf %438, %439 : vector<1x32xf32>
    %441 = math.tanh %440 : vector<1x32xf32>
    %442 = arith.mulf %437, %441 : vector<1x32xf32>
    %443 = tpu.concatenate %442, %423 in 1 : vector<1x32xf32>, vector<1x32xf32> -> vector<1x64xf32>
    %cst_138 = arith.constant dense<0.000000e+00> : vector<1x128xf32>
    %444 = tpu.matmul %443, %84, %cst_138 {dimension_numbers = #tpu.dot_dimension_numbers<[1], [0], [0], [1], [0, 0, 1, 1], [], []>} : vector<1x64xf32>, vector<64x128xf32>, vector<1x128xf32> -> vector<1x128xf32>
    %445 = arith.addf %444, %85 : vector<1x128xf32>
    %446 = arith.negf %445 : vector<1x128xf32>
    %447 = math.exp %446 : vector<1x128xf32>
    %cst_139 = arith.constant 1.000000e+00 : f32
    %448 = vector.broadcast %cst_139 : f32 to vector<1x128xf32>
    %449 = arith.addf %448, %447 : vector<1x128xf32>
    %450 = arith.divf %448, %449 : vector<1x128xf32>
    %451 = math.tanh %445 : vector<1x128xf32>
    %452 = vector.extract_strided_slice %450 {offsets = [0, 0], sizes = [1, 32], strides = [1, 1]} : vector<1x128xf32> to vector<1x32xf32>
    %453 = vector.extract_strided_slice %450 {offsets = [0, 32], sizes = [1, 32], strides = [1, 1]} : vector<1x128xf32> to vector<1x32xf32>
    %454 = vector.extract_strided_slice %451 {offsets = [0, 64], sizes = [1, 32], strides = [1, 1]} : vector<1x128xf32> to vector<1x32xf32>
    %455 = vector.extract_strided_slice %450 {offsets = [0, 96], sizes = [1, 32], strides = [1, 1]} : vector<1x128xf32> to vector<1x32xf32>
    %456 = arith.mulf %453, %421 : vector<1x32xf32>
    %457 = arith.mulf %452, %454 : vector<1x32xf32>
    %458 = arith.addf %456, %457 : vector<1x32xf32>
    %459 = math.tanh %458 : vector<1x32xf32>
    %460 = arith.mulf %455, %459 : vector<1x32xf32>
    %c9_140 = arith.constant 9 : index
    %c0_141 = arith.constant 0 : index
    %461 = vector.load %arg11[%c9_140, %c0_141] : memref<16x32xf32, #tpu.memory_space<vmem>>, vector<1x32xf32>
    tpu.vector_store %arg11[%c9_140, %c0_141], %460 {strides = array<i32>} : memref<16x32xf32, #tpu.memory_space<vmem>>, vector<1x32xf32>,
    %cst_142 = arith.constant dense<0.000000e+00> : vector<1x128xf32>
    %462 = tpu.matmul %442, %83, %cst_142 {dimension_numbers = #tpu.dot_dimension_numbers<[1], [0], [0], [1], [0, 0, 1, 1], [], []>} : vector<1x32xf32>, vector<32x128xf32>, vector<1x128xf32> -> vector<1x128xf32>
    %463 = vector.extract_strided_slice %82 {offsets = [10, 0], sizes = [1, 128], strides = [1, 1]} : vector<16x128xf32> to vector<1x128xf32>
    %464 = arith.addf %462, %463 : vector<1x128xf32>
    %465 = arith.negf %464 : vector<1x128xf32>
    %466 = math.exp %465 : vector<1x128xf32>
    %cst_143 = arith.constant 1.000000e+00 : f32
    %467 = vector.broadcast %cst_143 : f32 to vector<1x128xf32>
    %468 = arith.addf %467, %466 : vector<1x128xf32>
    %469 = arith.divf %467, %468 : vector<1x128xf32>
    %470 = math.tanh %464 : vector<1x128xf32>
    %471 = vector.extract_strided_slice %469 {offsets = [0, 0], sizes = [1, 32], strides = [1, 1]} : vector<1x128xf32> to vector<1x32xf32>
    %472 = vector.extract_strided_slice %469 {offsets = [0, 32], sizes = [1, 32], strides = [1, 1]} : vector<1x128xf32> to vector<1x32xf32>
    %473 = vector.extract_strided_slice %470 {offsets = [0, 64], sizes = [1, 32], strides = [1, 1]} : vector<1x128xf32> to vector<1x32xf32>
    %474 = vector.extract_strided_slice %469 {offsets = [0, 96], sizes = [1, 32], strides = [1, 1]} : vector<1x128xf32> to vector<1x32xf32>
    %475 = arith.mulf %472, %440 : vector<1x32xf32>
    %476 = arith.mulf %471, %473 : vector<1x32xf32>
    %477 = arith.addf %475, %476 : vector<1x32xf32>
    %478 = math.tanh %477 : vector<1x32xf32>
    %479 = arith.mulf %474, %478 : vector<1x32xf32>
    %480 = tpu.concatenate %479, %460 in 1 : vector<1x32xf32>, vector<1x32xf32> -> vector<1x64xf32>
    %cst_144 = arith.constant dense<0.000000e+00> : vector<1x128xf32>
    %481 = tpu.matmul %480, %84, %cst_144 {dimension_numbers = #tpu.dot_dimension_numbers<[1], [0], [0], [1], [0, 0, 1, 1], [], []>} : vector<1x64xf32>, vector<64x128xf32>, vector<1x128xf32> -> vector<1x128xf32>
    %482 = arith.addf %481, %85 : vector<1x128xf32>
    %483 = arith.negf %482 : vector<1x128xf32>
    %484 = math.exp %483 : vector<1x128xf32>
    %cst_145 = arith.constant 1.000000e+00 : f32
    %485 = vector.broadcast %cst_145 : f32 to vector<1x128xf32>
    %486 = arith.addf %485, %484 : vector<1x128xf32>
    %487 = arith.divf %485, %486 : vector<1x128xf32>
    %488 = math.tanh %482 : vector<1x128xf32>
    %489 = vector.extract_strided_slice %487 {offsets = [0, 0], sizes = [1, 32], strides = [1, 1]} : vector<1x128xf32> to vector<1x32xf32>
    %490 = vector.extract_strided_slice %487 {offsets = [0, 32], sizes = [1, 32], strides = [1, 1]} : vector<1x128xf32> to vector<1x32xf32>
    %491 = vector.extract_strided_slice %488 {offsets = [0, 64], sizes = [1, 32], strides = [1, 1]} : vector<1x128xf32> to vector<1x32xf32>
    %492 = vector.extract_strided_slice %487 {offsets = [0, 96], sizes = [1, 32], strides = [1, 1]} : vector<1x128xf32> to vector<1x32xf32>
    %493 = arith.mulf %490, %458 : vector<1x32xf32>
    %494 = arith.mulf %489, %491 : vector<1x32xf32>
    %495 = arith.addf %493, %494 : vector<1x32xf32>
    %496 = math.tanh %495 : vector<1x32xf32>
    %497 = arith.mulf %492, %496 : vector<1x32xf32>
    %c10_146 = arith.constant 10 : index
    %c0_147 = arith.constant 0 : index
    %498 = vector.load %arg11[%c10_146, %c0_147] : memref<16x32xf32, #tpu.memory_space<vmem>>, vector<1x32xf32>
    tpu.vector_store %arg11[%c10_146, %c0_147], %497 {strides = array<i32>} : memref<16x32xf32, #tpu.memory_space<vmem>>, vector<1x32xf32>,
    %cst_148 = arith.constant dense<0.000000e+00> : vector<1x128xf32>
    %499 = tpu.matmul %479, %83, %cst_148 {dimension_numbers = #tpu.dot_dimension_numbers<[1], [0], [0], [1], [0, 0, 1, 1], [], []>} : vector<1x32xf32>, vector<32x128xf32>, vector<1x128xf32> -> vector<1x128xf32>
    %500 = vector.extract_strided_slice %82 {offsets = [11, 0], sizes = [1, 128], strides = [1, 1]} : vector<16x128xf32> to vector<1x128xf32>
    %501 = arith.addf %499, %500 : vector<1x128xf32>
    %502 = arith.negf %501 : vector<1x128xf32>
    %503 = math.exp %502 : vector<1x128xf32>
    %cst_149 = arith.constant 1.000000e+00 : f32
    %504 = vector.broadcast %cst_149 : f32 to vector<1x128xf32>
    %505 = arith.addf %504, %503 : vector<1x128xf32>
    %506 = arith.divf %504, %505 : vector<1x128xf32>
    %507 = math.tanh %501 : vector<1x128xf32>
    %508 = vector.extract_strided_slice %506 {offsets = [0, 0], sizes = [1, 32], strides = [1, 1]} : vector<1x128xf32> to vector<1x32xf32>
    %509 = vector.extract_strided_slice %506 {offsets = [0, 32], sizes = [1, 32], strides = [1, 1]} : vector<1x128xf32> to vector<1x32xf32>
    %510 = vector.extract_strided_slice %507 {offsets = [0, 64], sizes = [1, 32], strides = [1, 1]} : vector<1x128xf32> to vector<1x32xf32>
    %511 = vector.extract_strided_slice %506 {offsets = [0, 96], sizes = [1, 32], strides = [1, 1]} : vector<1x128xf32> to vector<1x32xf32>
    %512 = arith.mulf %509, %477 : vector<1x32xf32>
    %513 = arith.mulf %508, %510 : vector<1x32xf32>
    %514 = arith.addf %512, %513 : vector<1x32xf32>
    %515 = math.tanh %514 : vector<1x32xf32>
    %516 = arith.mulf %511, %515 : vector<1x32xf32>
    %517 = tpu.concatenate %516, %497 in 1 : vector<1x32xf32>, vector<1x32xf32> -> vector<1x64xf32>
    %cst_150 = arith.constant dense<0.000000e+00> : vector<1x128xf32>
    %518 = tpu.matmul %517, %84, %cst_150 {dimension_numbers = #tpu.dot_dimension_numbers<[1], [0], [0], [1], [0, 0, 1, 1], [], []>} : vector<1x64xf32>, vector<64x128xf32>, vector<1x128xf32> -> vector<1x128xf32>
    %519 = arith.addf %518, %85 : vector<1x128xf32>
    %520 = arith.negf %519 : vector<1x128xf32>
    %521 = math.exp %520 : vector<1x128xf32>
    %cst_151 = arith.constant 1.000000e+00 : f32
    %522 = vector.broadcast %cst_151 : f32 to vector<1x128xf32>
    %523 = arith.addf %522, %521 : vector<1x128xf32>
    %524 = arith.divf %522, %523 : vector<1x128xf32>
    %525 = math.tanh %519 : vector<1x128xf32>
    %526 = vector.extract_strided_slice %524 {offsets = [0, 0], sizes = [1, 32], strides = [1, 1]} : vector<1x128xf32> to vector<1x32xf32>
    %527 = vector.extract_strided_slice %524 {offsets = [0, 32], sizes = [1, 32], strides = [1, 1]} : vector<1x128xf32> to vector<1x32xf32>
    %528 = vector.extract_strided_slice %525 {offsets = [0, 64], sizes = [1, 32], strides = [1, 1]} : vector<1x128xf32> to vector<1x32xf32>
    %529 = vector.extract_strided_slice %524 {offsets = [0, 96], sizes = [1, 32], strides = [1, 1]} : vector<1x128xf32> to vector<1x32xf32>
    %530 = arith.mulf %527, %495 : vector<1x32xf32>
    %531 = arith.mulf %526, %528 : vector<1x32xf32>
    %532 = arith.addf %530, %531 : vector<1x32xf32>
    %533 = math.tanh %532 : vector<1x32xf32>
    %534 = arith.mulf %529, %533 : vector<1x32xf32>
    %c11_152 = arith.constant 11 : index
    %c0_153 = arith.constant 0 : index
    %535 = vector.load %arg11[%c11_152, %c0_153] : memref<16x32xf32, #tpu.memory_space<vmem>>, vector<1x32xf32>
    tpu.vector_store %arg11[%c11_152, %c0_153], %534 {strides = array<i32>} : memref<16x32xf32, #tpu.memory_space<vmem>>, vector<1x32xf32>,
    %cst_154 = arith.constant dense<0.000000e+00> : vector<1x128xf32>
    %536 = tpu.matmul %516, %83, %cst_154 {dimension_numbers = #tpu.dot_dimension_numbers<[1], [0], [0], [1], [0, 0, 1, 1], [], []>} : vector<1x32xf32>, vector<32x128xf32>, vector<1x128xf32> -> vector<1x128xf32>
    %537 = vector.extract_strided_slice %82 {offsets = [12, 0], sizes = [1, 128], strides = [1, 1]} : vector<16x128xf32> to vector<1x128xf32>
    %538 = arith.addf %536, %537 : vector<1x128xf32>
    %539 = arith.negf %538 : vector<1x128xf32>
    %540 = math.exp %539 : vector<1x128xf32>
    %cst_155 = arith.constant 1.000000e+00 : f32
    %541 = vector.broadcast %cst_155 : f32 to vector<1x128xf32>
    %542 = arith.addf %541, %540 : vector<1x128xf32>
    %543 = arith.divf %541, %542 : vector<1x128xf32>
    %544 = math.tanh %538 : vector<1x128xf32>
    %545 = vector.extract_strided_slice %543 {offsets = [0, 0], sizes = [1, 32], strides = [1, 1]} : vector<1x128xf32> to vector<1x32xf32>
    %546 = vector.extract_strided_slice %543 {offsets = [0, 32], sizes = [1, 32], strides = [1, 1]} : vector<1x128xf32> to vector<1x32xf32>
    %547 = vector.extract_strided_slice %544 {offsets = [0, 64], sizes = [1, 32], strides = [1, 1]} : vector<1x128xf32> to vector<1x32xf32>
    %548 = vector.extract_strided_slice %543 {offsets = [0, 96], sizes = [1, 32], strides = [1, 1]} : vector<1x128xf32> to vector<1x32xf32>
    %549 = arith.mulf %546, %514 : vector<1x32xf32>
    %550 = arith.mulf %545, %547 : vector<1x32xf32>
    %551 = arith.addf %549, %550 : vector<1x32xf32>
    %552 = math.tanh %551 : vector<1x32xf32>
    %553 = arith.mulf %548, %552 : vector<1x32xf32>
    %554 = tpu.concatenate %553, %534 in 1 : vector<1x32xf32>, vector<1x32xf32> -> vector<1x64xf32>
    %cst_156 = arith.constant dense<0.000000e+00> : vector<1x128xf32>
    %555 = tpu.matmul %554, %84, %cst_156 {dimension_numbers = #tpu.dot_dimension_numbers<[1], [0], [0], [1], [0, 0, 1, 1], [], []>} : vector<1x64xf32>, vector<64x128xf32>, vector<1x128xf32> -> vector<1x128xf32>
    %556 = arith.addf %555, %85 : vector<1x128xf32>
    %557 = arith.negf %556 : vector<1x128xf32>
    %558 = math.exp %557 : vector<1x128xf32>
    %cst_157 = arith.constant 1.000000e+00 : f32
    %559 = vector.broadcast %cst_157 : f32 to vector<1x128xf32>
    %560 = arith.addf %559, %558 : vector<1x128xf32>
    %561 = arith.divf %559, %560 : vector<1x128xf32>
    %562 = math.tanh %556 : vector<1x128xf32>
    %563 = vector.extract_strided_slice %561 {offsets = [0, 0], sizes = [1, 32], strides = [1, 1]} : vector<1x128xf32> to vector<1x32xf32>
    %564 = vector.extract_strided_slice %561 {offsets = [0, 32], sizes = [1, 32], strides = [1, 1]} : vector<1x128xf32> to vector<1x32xf32>
    %565 = vector.extract_strided_slice %562 {offsets = [0, 64], sizes = [1, 32], strides = [1, 1]} : vector<1x128xf32> to vector<1x32xf32>
    %566 = vector.extract_strided_slice %561 {offsets = [0, 96], sizes = [1, 32], strides = [1, 1]} : vector<1x128xf32> to vector<1x32xf32>
    %567 = arith.mulf %564, %532 : vector<1x32xf32>
    %568 = arith.mulf %563, %565 : vector<1x32xf32>
    %569 = arith.addf %567, %568 : vector<1x32xf32>
    %570 = math.tanh %569 : vector<1x32xf32>
    %571 = arith.mulf %566, %570 : vector<1x32xf32>
    %c12_158 = arith.constant 12 : index
    %c0_159 = arith.constant 0 : index
    %572 = vector.load %arg11[%c12_158, %c0_159] : memref<16x32xf32, #tpu.memory_space<vmem>>, vector<1x32xf32>
    tpu.vector_store %arg11[%c12_158, %c0_159], %571 {strides = array<i32>} : memref<16x32xf32, #tpu.memory_space<vmem>>, vector<1x32xf32>,
    %cst_160 = arith.constant dense<0.000000e+00> : vector<1x128xf32>
    %573 = tpu.matmul %553, %83, %cst_160 {dimension_numbers = #tpu.dot_dimension_numbers<[1], [0], [0], [1], [0, 0, 1, 1], [], []>} : vector<1x32xf32>, vector<32x128xf32>, vector<1x128xf32> -> vector<1x128xf32>
    %574 = vector.extract_strided_slice %82 {offsets = [13, 0], sizes = [1, 128], strides = [1, 1]} : vector<16x128xf32> to vector<1x128xf32>
    %575 = arith.addf %573, %574 : vector<1x128xf32>
    %576 = arith.negf %575 : vector<1x128xf32>
    %577 = math.exp %576 : vector<1x128xf32>
    %cst_161 = arith.constant 1.000000e+00 : f32
    %578 = vector.broadcast %cst_161 : f32 to vector<1x128xf32>
    %579 = arith.addf %578, %577 : vector<1x128xf32>
    %580 = arith.divf %578, %579 : vector<1x128xf32>
    %581 = math.tanh %575 : vector<1x128xf32>
    %582 = vector.extract_strided_slice %580 {offsets = [0, 0], sizes = [1, 32], strides = [1, 1]} : vector<1x128xf32> to vector<1x32xf32>
    %583 = vector.extract_strided_slice %580 {offsets = [0, 32], sizes = [1, 32], strides = [1, 1]} : vector<1x128xf32> to vector<1x32xf32>
    %584 = vector.extract_strided_slice %581 {offsets = [0, 64], sizes = [1, 32], strides = [1, 1]} : vector<1x128xf32> to vector<1x32xf32>
    %585 = vector.extract_strided_slice %580 {offsets = [0, 96], sizes = [1, 32], strides = [1, 1]} : vector<1x128xf32> to vector<1x32xf32>
    %586 = arith.mulf %583, %551 : vector<1x32xf32>
    %587 = arith.mulf %582, %584 : vector<1x32xf32>
    %588 = arith.addf %586, %587 : vector<1x32xf32>
    %589 = math.tanh %588 : vector<1x32xf32>
    %590 = arith.mulf %585, %589 : vector<1x32xf32>
    %591 = tpu.concatenate %590, %571 in 1 : vector<1x32xf32>, vector<1x32xf32> -> vector<1x64xf32>
    %cst_162 = arith.constant dense<0.000000e+00> : vector<1x128xf32>
    %592 = tpu.matmul %591, %84, %cst_162 {dimension_numbers = #tpu.dot_dimension_numbers<[1], [0], [0], [1], [0, 0, 1, 1], [], []>} : vector<1x64xf32>, vector<64x128xf32>, vector<1x128xf32> -> vector<1x128xf32>
    %593 = arith.addf %592, %85 : vector<1x128xf32>
    %594 = arith.negf %593 : vector<1x128xf32>
    %595 = math.exp %594 : vector<1x128xf32>
    %cst_163 = arith.constant 1.000000e+00 : f32
    %596 = vector.broadcast %cst_163 : f32 to vector<1x128xf32>
    %597 = arith.addf %596, %595 : vector<1x128xf32>
    %598 = arith.divf %596, %597 : vector<1x128xf32>
    %599 = math.tanh %593 : vector<1x128xf32>
    %600 = vector.extract_strided_slice %598 {offsets = [0, 0], sizes = [1, 32], strides = [1, 1]} : vector<1x128xf32> to vector<1x32xf32>
    %601 = vector.extract_strided_slice %598 {offsets = [0, 32], sizes = [1, 32], strides = [1, 1]} : vector<1x128xf32> to vector<1x32xf32>
    %602 = vector.extract_strided_slice %599 {offsets = [0, 64], sizes = [1, 32], strides = [1, 1]} : vector<1x128xf32> to vector<1x32xf32>
    %603 = vector.extract_strided_slice %598 {offsets = [0, 96], sizes = [1, 32], strides = [1, 1]} : vector<1x128xf32> to vector<1x32xf32>
    %604 = arith.mulf %601, %569 : vector<1x32xf32>
    %605 = arith.mulf %600, %602 : vector<1x32xf32>
    %606 = arith.addf %604, %605 : vector<1x32xf32>
    %607 = math.tanh %606 : vector<1x32xf32>
    %608 = arith.mulf %603, %607 : vector<1x32xf32>
    %c13_164 = arith.constant 13 : index
    %c0_165 = arith.constant 0 : index
    %609 = vector.load %arg11[%c13_164, %c0_165] : memref<16x32xf32, #tpu.memory_space<vmem>>, vector<1x32xf32>
    tpu.vector_store %arg11[%c13_164, %c0_165], %608 {strides = array<i32>} : memref<16x32xf32, #tpu.memory_space<vmem>>, vector<1x32xf32>,
    %cst_166 = arith.constant dense<0.000000e+00> : vector<1x128xf32>
    %610 = tpu.matmul %590, %83, %cst_166 {dimension_numbers = #tpu.dot_dimension_numbers<[1], [0], [0], [1], [0, 0, 1, 1], [], []>} : vector<1x32xf32>, vector<32x128xf32>, vector<1x128xf32> -> vector<1x128xf32>
    %611 = vector.extract_strided_slice %82 {offsets = [14, 0], sizes = [1, 128], strides = [1, 1]} : vector<16x128xf32> to vector<1x128xf32>
    %612 = arith.addf %610, %611 : vector<1x128xf32>
    %613 = arith.negf %612 : vector<1x128xf32>
    %614 = math.exp %613 : vector<1x128xf32>
    %cst_167 = arith.constant 1.000000e+00 : f32
    %615 = vector.broadcast %cst_167 : f32 to vector<1x128xf32>
    %616 = arith.addf %615, %614 : vector<1x128xf32>
    %617 = arith.divf %615, %616 : vector<1x128xf32>
    %618 = math.tanh %612 : vector<1x128xf32>
    %619 = vector.extract_strided_slice %617 {offsets = [0, 0], sizes = [1, 32], strides = [1, 1]} : vector<1x128xf32> to vector<1x32xf32>
    %620 = vector.extract_strided_slice %617 {offsets = [0, 32], sizes = [1, 32], strides = [1, 1]} : vector<1x128xf32> to vector<1x32xf32>
    %621 = vector.extract_strided_slice %618 {offsets = [0, 64], sizes = [1, 32], strides = [1, 1]} : vector<1x128xf32> to vector<1x32xf32>
    %622 = vector.extract_strided_slice %617 {offsets = [0, 96], sizes = [1, 32], strides = [1, 1]} : vector<1x128xf32> to vector<1x32xf32>
    %623 = arith.mulf %620, %588 : vector<1x32xf32>
    %624 = arith.mulf %619, %621 : vector<1x32xf32>
    %625 = arith.addf %623, %624 : vector<1x32xf32>
    %626 = math.tanh %625 : vector<1x32xf32>
    %627 = arith.mulf %622, %626 : vector<1x32xf32>
    %628 = tpu.concatenate %627, %608 in 1 : vector<1x32xf32>, vector<1x32xf32> -> vector<1x64xf32>
    %cst_168 = arith.constant dense<0.000000e+00> : vector<1x128xf32>
    %629 = tpu.matmul %628, %84, %cst_168 {dimension_numbers = #tpu.dot_dimension_numbers<[1], [0], [0], [1], [0, 0, 1, 1], [], []>} : vector<1x64xf32>, vector<64x128xf32>, vector<1x128xf32> -> vector<1x128xf32>
    %630 = arith.addf %629, %85 : vector<1x128xf32>
    %631 = arith.negf %630 : vector<1x128xf32>
    %632 = math.exp %631 : vector<1x128xf32>
    %cst_169 = arith.constant 1.000000e+00 : f32
    %633 = vector.broadcast %cst_169 : f32 to vector<1x128xf32>
    %634 = arith.addf %633, %632 : vector<1x128xf32>
    %635 = arith.divf %633, %634 : vector<1x128xf32>
    %636 = math.tanh %630 : vector<1x128xf32>
    %637 = vector.extract_strided_slice %635 {offsets = [0, 0], sizes = [1, 32], strides = [1, 1]} : vector<1x128xf32> to vector<1x32xf32>
    %638 = vector.extract_strided_slice %635 {offsets = [0, 32], sizes = [1, 32], strides = [1, 1]} : vector<1x128xf32> to vector<1x32xf32>
    %639 = vector.extract_strided_slice %636 {offsets = [0, 64], sizes = [1, 32], strides = [1, 1]} : vector<1x128xf32> to vector<1x32xf32>
    %640 = vector.extract_strided_slice %635 {offsets = [0, 96], sizes = [1, 32], strides = [1, 1]} : vector<1x128xf32> to vector<1x32xf32>
    %641 = arith.mulf %638, %606 : vector<1x32xf32>
    %642 = arith.mulf %637, %639 : vector<1x32xf32>
    %643 = arith.addf %641, %642 : vector<1x32xf32>
    %644 = math.tanh %643 : vector<1x32xf32>
    %645 = arith.mulf %640, %644 : vector<1x32xf32>
    %c14_170 = arith.constant 14 : index
    %c0_171 = arith.constant 0 : index
    %646 = vector.load %arg11[%c14_170, %c0_171] : memref<16x32xf32, #tpu.memory_space<vmem>>, vector<1x32xf32>
    tpu.vector_store %arg11[%c14_170, %c0_171], %645 {strides = array<i32>} : memref<16x32xf32, #tpu.memory_space<vmem>>, vector<1x32xf32>,
    %c0_172 = arith.constant 0 : index
    %c0_173 = arith.constant 0 : index
    %647 = vector.load %arg11[%c0_172, %c0_173] : memref<16x32xf32, #tpu.memory_space<vmem>>, vector<16x32xf32>
    %c0_174 = arith.constant 0 : index
    %c0_175 = arith.constant 0 : index
    %648 = vector.load %arg7[%c0_174, %c0_175] : memref<32x9xf32, #tpu.memory_space<vmem>>, vector<32x9xf32>
    %cst_176 = arith.constant dense<0.000000e+00> : vector<16x9xf32>
    %649 = tpu.matmul %647, %648, %cst_176 {dimension_numbers = #tpu.dot_dimension_numbers<[1], [0], [0], [1], [0, 0, 1, 1], [], []>} : vector<16x32xf32>, vector<32x9xf32>, vector<16x9xf32> -> vector<16x9xf32>
    %c0_177 = arith.constant 0 : index
    %c0_178 = arith.constant 0 : index
    %650 = vector.load %arg8[%c0_177, %c0_178] : memref<1x9xf32, #tpu.memory_space<vmem>>, vector<1x9xf32>
    %651 = vector.broadcast %650 : vector<1x9xf32> to vector<16x9xf32>
    %652 = arith.addf %649, %651 : vector<16x9xf32>
    %cst_179 = arith.constant dense<0xFF800000> : vector<16xf32>
    %653 = vector.multi_reduction <maximumf>, %652, %cst_179 [1] : vector<16x9xf32> to vector<16xf32>
    %654 = vector.shape_cast %653 : vector<16xf32> to vector<16x1xf32>
    %655 = vector.broadcast %654 : vector<16x1xf32> to vector<16x9xf32>
    %656 = arith.subf %652, %655 : vector<16x9xf32>
    %657 = math.exp %656 : vector<16x9xf32>
    %cst_180 = arith.constant dense<0.000000e+00> : vector<16xf32>
    %658 = vector.multi_reduction <add>, %657, %cst_180 [1] : vector<16x9xf32> to vector<16xf32>
    %659 = vector.shape_cast %658 : vector<16xf32> to vector<16x1xf32>
    %660 = vector.broadcast %659 : vector<16x1xf32> to vector<16x9xf32>
    %661 = arith.divf %657, %660 : vector<16x9xf32>
    %662 = vector.extract_strided_slice %661 {offsets = [0, 0], sizes = [15, 9], strides = [1, 1]} : vector<16x9xf32> to vector<15x9xf32>
    %c0_181 = arith.constant 0 : index
    %c0_182 = arith.constant 0 : index
    %663 = vector.load %arg9[%c0_181, %c0_182] : memref<15x9xf32, #tpu.memory_space<vmem>>, vector<15x9xf32>
    tpu.vector_store %arg9[%c0_181, %c0_182], %662 {strides = array<i32>} : memref<15x9xf32, #tpu.memory_space<vmem>>, vector<15x9xf32>,
    return
  }
}

</mosaic_0001>

<llo_original>
// kernel: rnn_forward.1
$region0: #{rnn_forward.1}
  #allocation0 [shape = 'u32[]', space=smem, size = 0x4, offset = 0x4, fixed_abs, tag = 'smem constant byte address 0x4 - core index']
  #allocation1 [shape = 'u32[72,128]{1,0:T(1,128)}', space=vmem, size = 0x9000, scoped, tag = 'internal scratch']
  #allocation2 [shape = 'f32[16,16]{1,0:T(8,128)}', space=vmem, size = 0x2000, scoped, tag = 'scratch operand']
  #allocation3 [shape = 'f32[16,32]{1,0:T(8,128)}', space=vmem, size = 0x2000, scoped, tag = 'scratch operand']
  %s0 = inlined_call_operand.vmem [shape: s32[15], index: 0, kind: input, shape index: {}]
  %s1 = inlined_call_operand.vmem [shape: f32[32,1,16], index: 1, kind: input, shape index: {}]
  %s2 = inlined_call_operand.vmem [shape: f32[16,128], index: 2, kind: input, shape index: {}]
  %s3 = inlined_call_operand.vmem [shape: f32[32,128], index: 3, kind: input, shape index: {}]
  %s4 = inlined_call_operand.vmem [shape: f32[1,128], index: 4, kind: input, shape index: {}]
  %s5 = inlined_call_operand.vmem [shape: f32[64,128], index: 5, kind: input, shape index: {}]
  %s6 = inlined_call_operand.vmem [shape: f32[1,128], index: 6, kind: input, shape index: {}]
  %s7 = inlined_call_operand.vmem [shape: f32[32,9], index: 7, kind: input, shape index: {}]
  %s8 = inlined_call_operand.vmem [shape: f32[1,9], index: 8, kind: input, shape index: {}]
  %s9 = inlined_call_operand.hbm [shape: f32[15,9], index: 9, kind: output, shape index: {}]
  %s10 = sld [smem:[#allocation0]]
  $region50: #{rnn_forward.1} parent=0
    _
  %s12 = ssub.s32 1, %s10
  %s13 = scalar_select 0, %s12, %s10
  $region1: #{rnn_forward.1} parent=0
    #allocation4 [shape = 'u8[512]{0}', space=smem, size = 0x200, scoped, tag = 'input window, operand 0, single buffered']
    #allocation5 [shape = 's32[1]{0}', space=sflag, size = 0x4, scoped, tag = 'scoped memory for rnn_forward.1']
    #allocation6 [shape = 's32[1]{0}', space=sflag, size = 0x4, scoped, tag = 'scoped memory for rnn_forward.1']
    #allocation7 [shape = 'u8[8192]{0}', space=vmem, size = 0x2000, scoped, tag = 'output window, operand 0, single buffered']
    %14 = vsyncpa [#allocation6], 0
    %15 = vsyncpa [#allocation5], 0
    // Predicated region
    $region2: #{rnn_forward.1} parent=1 // pred_check
      _
    $region3: #{rnn_forward.1} parent=1 // pred_check_branch
      %17 = sbr.rel (0) target = $region5
    $region4: #{rnn_forward.1} parent=1 // pred_region
      %19 = vsyncadd [#allocation6], 0
      %s21 = sshll.u32 %s0, 4
      %s22 = int_to_ptr.vmem [resolvable:$true] %s21
      %24 = dma.vmem_to_smem %s22, 16, [#allocation4], [#allocation6]
    $region5: #{rnn_forward.1} parent=1 // pred_fallthru
      _
    // Predicated region
    $region6: #{rnn_forward.1} parent=1 // pred_check
      _
    $region7: #{rnn_forward.1} parent=1 // pred_check_branch
      %26 = sbr.rel (0) target = $region9
    $region8: #{rnn_forward.1} parent=1 // pred_region
      _
    $region9: #{rnn_forward.1} parent=1 // pred_fallthru
      _
    // Predicated region
    $region10: #{rnn_forward.1} parent=1 // pred_check
      _
    $region11: #{rnn_forward.1} parent=1 // pred_check_branch
      %28 = sbr.rel (0) target = $region13
    $region12: #{rnn_forward.1} parent=1 // pred_region
      _
    $region13: #{rnn_forward.1} parent=1 // pred_fallthru
      _
    // Predicated region
    $region14: #{rnn_forward.1} parent=1 // pred_check
      _
    $region15: #{rnn_forward.1} parent=1 // pred_check_branch
      %30 = sbr.rel (0) target = $region17
    $region16: #{rnn_forward.1} parent=1 // pred_region
      _
    $region17: #{rnn_forward.1} parent=1 // pred_fallthru
      _
    // Predicated region
    $region18: #{rnn_forward.1} parent=1 // pred_check
      _
    $region19: #{rnn_forward.1} parent=1 // pred_check_branch
      %32 = sbr.rel (0) target = $region21
    $region20: #{rnn_forward.1} parent=1 // pred_region
      _
    $region21: #{rnn_forward.1} parent=1 // pred_fallthru
      _
    // Predicated region
    $region22: #{rnn_forward.1} parent=1 // pred_check
      _
    $region23: #{rnn_forward.1} parent=1 // pred_check_branch
      %34 = sbr.rel (0) target = $region25
    $region24: #{rnn_forward.1} parent=1 // pred_region
      _
    $region25: #{rnn_forward.1} parent=1 // pred_fallthru
      _
    // Predicated region
    $region26: #{rnn_forward.1} parent=1 // pred_check
      _
    $region27: #{rnn_forward.1} parent=1 // pred_check_branch
      %36 = sbr.rel (0) target = $region29
    $region28: #{rnn_forward.1} parent=1 // pred_region
      _
    $region29: #{rnn_forward.1} parent=1 // pred_fallthru
      _
    // Predicated region
    $region30: #{rnn_forward.1} parent=1 // pred_check
      _
    $region31: #{rnn_forward.1} parent=1 // pred_check_branch
      %38 = sbr.rel (0) target = $region33
    $region32: #{rnn_forward.1} parent=1 // pred_region
      _
    $region33: #{rnn_forward.1} parent=1 // pred_fallthru
      _
    // Predicated region
    $region34: #{rnn_forward.1} parent=1 // pred_check
      _
    $region35: #{rnn_forward.1} parent=1 // pred_check_branch
      %40 = sbr.rel (0) target = $region37
    $region36: #{rnn_forward.1} parent=1 // pred_region
      _
    $region37: #{rnn_forward.1} parent=1 // pred_fallthru
      _
    // Predicated region
    $region38: #{rnn_forward.1} parent=1 // pred_check
      _
    $region39: #{rnn_forward.1} parent=1 // pred_check_branch
      %42 = sbr.rel (0) target = $region41
    $region40: #{rnn_forward.1} parent=1 // pred_region
      %44 = dma.done [#allocation6], 16
    $region41: #{rnn_forward.1} parent=1 // pred_fallthru
      _
    %45 = sfence
    %vm46 = vcmask 130048
    %47 = vst.msk [vmem:[#allocation2] sm:$0xff] %vm46, 0.0
    %48 = vst.msk [vmem:[#allocation2 + $0x8] sm:$0xff] %vm46, 0.0
    %s49 = sld [smem:[#allocation4]]
    %s50 = scalar_lea.vmem %s1, %s49
    %v51 = vld [vmem:[%s50] sm:$0x1]
    %vm52 = vcmask 122880
    %53 = vst.msk [vmem:[#allocation2] sm:$0x1] %vm52, %v51
    %s54 = sld [smem:[#allocation4 + $0x1]]
    %s55 = scalar_lea.vmem %s1, %s54
    %v56 = vld [vmem:[%s55] sm:$0x1]
    %57 = vst.msk [vmem:[#allocation2 + $0x1] sm:$0x1] %vm52, %v56
    %s58 = sld [smem:[#allocation4 + $0x2]]
    %s59 = scalar_lea.vmem %s1, %s58
    %v60 = vld [vmem:[%s59] sm:$0x1]
    %61 = vst.msk [vmem:[#allocation2 + $0x2] sm:$0x1] %vm52, %v60
    %s62 = sld [smem:[#allocation4 + $0x3]]
    %s63 = scalar_lea.vmem %s1, %s62
    %v64 = vld [vmem:[%s63] sm:$0x1]
    %65 = vst.msk [vmem:[#allocation2 + $0x3] sm:$0x1] %vm52, %v64
    %s66 = sld [smem:[#allocation4 + $0x4]]
    %s67 = scalar_lea.vmem %s1, %s66
    %v68 = vld [vmem:[%s67] sm:$0x1]
    %69 = vst.msk [vmem:[#allocation2 + $0x4] sm:$0x1] %vm52, %v68
    %s70 = sld [smem:[#allocation4 + $0x5]]
    %s71 = scalar_lea.vmem %s1, %s70
    %v72 = vld [vmem:[%s71] sm:$0x1]
    %73 = vst.msk [vmem:[#allocation2 + $0x5] sm:$0x1] %vm52, %v72
    %s74 = sld [smem:[#allocation4 + $0x6]]
    %s75 = scalar_lea.vmem %s1, %s74
    %v76 = vld [vmem:[%s75] sm:$0x1]
    %77 = vst.msk [vmem:[#allocation2 + $0x6] sm:$0x1] %vm52, %v76
    %s78 = sld [smem:[#allocation4 + $0x7]]
    %s79 = scalar_lea.vmem %s1, %s78
    %v80 = vld [vmem:[%s79] sm:$0x1]
    %81 = vst.msk [vmem:[#allocation2 + $0x7] sm:$0x1] %vm52, %v80
    %s82 = sld [smem:[#allocation4 + $0x8]]
    %s83 = scalar_lea.vmem %s1, %s82
    %v84 = vld [vmem:[%s83] sm:$0x1]
    %85 = vst.msk [vmem:[#allocation2 + $0x8] sm:$0x1] %vm52, %v84
    %s86 = sld [smem:[#allocation4 + $0x9]]
    %s87 = scalar_lea.vmem %s1, %s86
    %v88 = vld [vmem:[%s87] sm:$0x1]
    %89 = vst.msk [vmem:[#allocation2 + $0x9] sm:$0x1] %vm52, %v88
    %s90 = sld [smem:[#allocation4 + $0xa]]
    %s91 = scalar_lea.vmem %s1, %s90
    %v92 = vld [vmem:[%s91] sm:$0x1]
    %93 = vst.msk [vmem:[#allocation2 + $0xa] sm:$0x1] %vm52, %v92
    %s94 = sld [smem:[#allocation4 + $0xb]]
    %s95 = scalar_lea.vmem %s1, %s94
    %v96 = vld [vmem:[%s95] sm:$0x1]
    %97 = vst.msk [vmem:[#allocation2 + $0xb] sm:$0x1] %vm52, %v96
    %s98 = sld [smem:[#allocation4 + $0xc]]
    %s99 = scalar_lea.vmem %s1, %s98
    %v100 = vld [vmem:[%s99] sm:$0x1]
    %101 = vst.msk [vmem:[#allocation2 + $0xc] sm:$0x1] %vm52, %v100
    %s102 = sld [smem:[#allocation4 + $0xd]]
    %s103 = scalar_lea.vmem %s1, %s102
    %v104 = vld [vmem:[%s103] sm:$0x1]
    %105 = vst.msk [vmem:[#allocation2 + $0xd] sm:$0x1] %vm52, %v104
    %s106 = sld [smem:[#allocation4 + $0xe]]
    %s107 = scalar_lea.vmem %s1, %s106
    %v108 = vld [vmem:[%s107] sm:$0x1]
    %109 = vst.msk [vmem:[#allocation2 + $0xe] sm:$0x1] %vm52, %v108
    %v110 = vld [vmem:[#allocation2] sm:$0xff]
    %v111 = vld [vmem:[#allocation2 + $0x8] sm:$0xff]
    %v112 = vld [vmem:[%s2] sm:$0xff]
    %v113 = vld [vmem:[%s2 + $0x8] sm:$0xff]
    %v114 = vld [vmem:[%s4] sm:$0x1]
    %v116 = vperm.slane %v114, 0
    %v119 = vsel %vm46, %v110, 0
    %v122 = vsel %vm46, %v111, 0
    %124 = vmatpush.msra.mxu0 0.0
    %125 = vmatpush.msra.mxu0 0.0
    %126 = vmatpush.msra.mxu0 0.0
    %127 = vmatpush.msra.mxu0 0.0
    %128 = vmatpush.msra.mxu0 0.0
    %129 = vmatpush.msra.mxu0 0.0
    %130 = vmatpush.msra.mxu0 0.0
    %131 = vmatpush.msra.mxu0 0.0
    %132 = vmatpush.msra.mxu0 0.0
    %133 = vmatpush.msra.mxu0 0.0
    %134 = vmatpush.msra.mxu0 0.0
    %135 = vmatpush.msra.mxu0 0.0
    %136 = vmatpush.msra.mxu0 0.0
    %137 = vmatpush.msra.mxu0 0.0
    %138 = vmatpush.msra.mxu0 %v113
    %139 = vmatpush.msra.mxu0 %v112
    %140 = vmatmul.f32.gmra.mxu0 %v119
    %v141 = vpop.f32.mrf.mxu0
    %v142 = vadd.f32 %v116, %v141
    %143 = vmatmul.f32.gmra.mxu0 %v122
    %v144 = vpop.f32.mrf.mxu0
    %v145 = vadd.f32 %v116, %v144
    %146 = vdwg.mxu0
    %v147 = vld [vmem:[%s3] sm:$0xff]
    %v148 = vld [vmem:[%s3 + $0x8] sm:$0xff]
    %v149 = vld [vmem:[%s3 + $0x10] sm:$0xff]
    %v150 = vld [vmem:[%s3 + $0x18] sm:$0xff]
    %v151 = vld [vmem:[%s5] sm:$0xff]
    %v152 = vld [vmem:[%s5 + $0x8] sm:$0xff]
    %v153 = vld [vmem:[%s5 + $0x10] sm:$0xff]
    %v154 = vld [vmem:[%s5 + $0x18] sm:$0xff]
    %v155 = vld [vmem:[%s5 + $0x20] sm:$0xff]
    %v156 = vld [vmem:[%s5 + $0x28] sm:$0xff]
    %v157 = vld [vmem:[%s5 + $0x30] sm:$0xff]
    %v158 = vld [vmem:[%s5 + $0x38] sm:$0xff]
    %v159 = vld [vmem:[%s6] sm:$0x1]
    %vm160 = vcmask 261120
    %161 = vst.msk [vmem:[#allocation3] sm:$0xff] %vm160, 0.0
    %162 = vst.msk [vmem:[#allocation3 + $0x8] sm:$0xff] %vm160, 0.0
    %v164 = vsel %vm160, 0.0, 0
    %166 = vmatpush.msra.mxu0 0.0
    %167 = vmatpush.msra.mxu0 0.0
    %168 = vmatpush.msra.mxu0 0.0
    %169 = vmatpush.msra.mxu0 0.0
    %170 = vmatpush.msra.mxu0 0.0
    %171 = vmatpush.msra.mxu0 0.0
    %172 = vmatpush.msra.mxu0 0.0
    %173 = vmatpush.msra.mxu0 0.0
    %174 = vmatpush.msra.mxu0 0.0
    %175 = vmatpush.msra.mxu0 0.0
    %176 = vmatpush.msra.mxu0 0.0
    %177 = vmatpush.msra.mxu0 0.0
    %178 = vmatpush.msra.mxu0 %v150
    %179 = vmatpush.msra.mxu0 %v149
    %180 = vmatpush.msra.mxu0 %v148
    %181 = vmatpush.msra.mxu0 %v147
    %182 = vmatmul.f32.gmra.mxu0 %v164
    %v183 = vpop.f32.mrf.mxu0
    %v184 = vadd.f32 %v142, %v183
    %185 = vdwg.mxu0
    %v186 = vxor.u32 %v184, 2147483648
    %v187 = vmul.f32 %v186, 1.442695
    %v188 = vpow.pop %v187
    %v189 = vadd.f32 %v188, 1.0
    %v190 = vrcp.pop %v189
    %v191 = vmul.f32 %v189, %v190
    %v192 = vsub.f32 1.0, %v191
    %v193 = vmul.f32 %v190, %v192
    %v194 = vadd.f32 %v190, %v193
    %vm195 = vweird.f32 %v189
    %vm196 = vweird.f32 %v190
    %vm197 = vmor %vm195, %vm196
    %v198 = vsel %vm197, %v190, %v194
    %v199 = vand.u32 2147483647, %v189
    %vm200 = vcmp.eq.f32.partialorder %v199, 8.507059e+37
    %v201 = vand.u32 %v189, 2147483648
    %v202 = vor.u32 1.1754944e-38, %v201
    %v203 = vsel %vm200, %v202, %v198
    %v204 = vmul.f32 1.0, %v203
    %v205 = vtanh.pop %v184
    %v206 = vmul.f32 %v204, 0.0
    %208 = vrot.lane.b32.xlu0 %v205, 64
    %v209 = vpop.permute.xlu0 %208
    %v211 = vmul.f32 %v204, %v209
    %213 = vrot.lane.b32.xlu0 %v211, 32
    %v214 = vpop.permute.xlu0 %213
    %v216 = vadd.f32 %v206, %v214
    %v217 = vtanh.pop %v216
    %219 = vrot.lane.b32.xlu0 %v217, 64
    %v220 = vpop.permute.xlu0 %219
    %v222 = vmul.f32 %v204, %v220
    %224 = vrot.lane.b32.xlu0 %v222, 32
    %v225 = vpop.permute.xlu0 %224
    %v227 = vsel %vm160, %v225, 0.0
    %vm228 = vcmask 523264
    %v230 = vsel %vm228, %v227, 0
    %232 = vmatpush.msra.mxu0 0.0
    %233 = vmatpush.msra.mxu0 0.0
    %234 = vmatpush.msra.mxu0 0.0
    %235 = vmatpush.msra.mxu0 0.0
    %236 = vmatpush.msra.mxu0 0.0
    %237 = vmatpush.msra.mxu0 0.0
    %238 = vmatpush.msra.mxu0 0.0
    %239 = vmatpush.msra.mxu0 0.0
    %240 = vmatpush.msra.mxu0 %v158
    %241 = vmatpush.msra.mxu0 %v157
    %242 = vmatpush.msra.mxu0 %v156
    %243 = vmatpush.msra.mxu0 %v155
    %244 = vmatpush.msra.mxu0 %v154
    %245 = vmatpush.msra.mxu0 %v153
    %246 = vmatpush.msra.mxu0 %v152
    %247 = vmatpush.msra.mxu0 %v151
    %248 = vmatmul.f32.gmra.mxu0 %v230
    %v249 = vpop.f32.mrf.mxu0
    %v250 = vadd.f32 %v159, %v249
    %251 = vdwg.mxu0
    %v252 = vxor.u32 %v250, 2147483648
    %v253 = vmul.f32 %v252, 1.442695
    %v254 = vpow.pop %v253
    %v255 = vadd.f32 %v254, 1.0
    %v256 = vrcp.pop %v255
    %v257 = vmul.f32 %v255, %v256
    %v258 = vsub.f32 1.0, %v257
    %v259 = vmul.f32 %v256, %v258
    %v260 = vadd.f32 %v256, %v259
    %vm261 = vweird.f32 %v255
    %vm262 = vweird.f32 %v256
    %vm263 = vmor %vm261, %vm262
    %v264 = vsel %vm263, %v256, %v260
    %v265 = vand.u32 2147483647, %v255
    %vm266 = vcmp.eq.f32.partialorder %v265, 8.507059e+37
    %v267 = vand.u32 %v255, 2147483648
    %v268 = vor.u32 1.1754944e-38, %v267
    %v269 = vsel %vm266, %v268, %v264
    %v270 = vmul.f32 1.0, %v269
    %v271 = vtanh.pop %v250
    %v272 = vmul.f32 %v270, 0.0
    %274 = vrot.lane.b32.xlu0 %v271, 64
    %v275 = vpop.permute.xlu0 %274
    %v277 = vmul.f32 %v270, %v275
    %279 = vrot.lane.b32.xlu0 %v277, 32
    %v280 = vpop.permute.xlu0 %279
    %v282 = vadd.f32 %v272, %v280
    %v283 = vtanh.pop %v282
    %285 = vrot.lane.b32.xlu0 %v283, 64
    %v286 = vpop.permute.xlu0 %285
    %v288 = vmul.f32 %v270, %v286
    %290 = vrot.lane.b32.xlu0 %v288, 32
    %v291 = vpop.permute.xlu0 %290
    %vm293 = vcmask 253952
    %294 = vst.msk [vmem:[#allocation3] sm:$0x1] %vm293, %v291
    %v296 = vrot.slane %v142, 1
    %v298 = vsel %vm160, %v225, 0
    %300 = vmatpush.msra.mxu0 0.0
    %301 = vmatpush.msra.mxu0 0.0
    %302 = vmatpush.msra.mxu0 0.0
    %303 = vmatpush.msra.mxu0 0.0
    %304 = vmatpush.msra.mxu0 0.0
    %305 = vmatpush.msra.mxu0 0.0
    %306 = vmatpush.msra.mxu0 0.0
    %307 = vmatpush.msra.mxu0 0.0
    %308 = vmatpush.msra.mxu0 0.0
    %309 = vmatpush.msra.mxu0 0.0
    %310 = vmatpush.msra.mxu0 0.0
    %311 = vmatpush.msra.mxu0 0.0
    %312 = vmatpush.msra.mxu0 %v150
    %313 = vmatpush.msra.mxu0 %v149
    %314 = vmatpush.msra.mxu0 %v148
    %315 = vmatpush.msra.mxu0 %v147
    %316 = vmatmul.f32.gmra.mxu0 %v298
    %v317 = vpop.f32.mrf.mxu0
    %v318 = vadd.f32 %v296, %v317
    %319 = vdwg.mxu0
    %v320 = vxor.u32 %v318, 2147483648
    %v321 = vmul.f32 %v320, 1.442695
    %v322 = vpow.pop %v321
    %v323 = vadd.f32 %v322, 1.0
    %v324 = vrcp.pop %v323
    %v325 = vmul.f32 %v323, %v324
    %v326 = vsub.f32 1.0, %v325
    %v327 = vmul.f32 %v324, %v326
    %v328 = vadd.f32 %v324, %v327
    %vm329 = vweird.f32 %v323
    %vm330 = vweird.f32 %v324
    %vm331 = vmor %vm329, %vm330
    %v332 = vsel %vm331, %v324, %v328
    %v333 = vand.u32 2147483647, %v323
    %vm334 = vcmp.eq.f32.partialorder %v333, 8.507059e+37
    %v335 = vand.u32 %v323, 2147483648
    %v336 = vor.u32 1.1754944e-38, %v335
    %v337 = vsel %vm334, %v336, %v332
    %v338 = vmul.f32 1.0, %v337
    %v339 = vtanh.pop %v318
    %v340 = vmul.f32 %v338, %v216
    %342 = vrot.lane.b32.xlu0 %v339, 64
    %v343 = vpop.permute.xlu0 %342
    %v345 = vmul.f32 %v338, %v343
    %347 = vrot.lane.b32.xlu0 %v345, 32
    %v348 = vpop.permute.xlu0 %347
    %v350 = vadd.f32 %v340, %v348
    %v351 = vtanh.pop %v350
    %353 = vrot.lane.b32.xlu0 %v351, 64
    %v354 = vpop.permute.xlu0 %353
    %v356 = vmul.f32 %v338, %v354
    %358 = vrot.lane.b32.xlu0 %v356, 32
    %v359 = vpop.permute.xlu0 %358
    %361 = vrot.lane.b32.xlu0 %v288, 64
    %v362 = vpop.permute.xlu0 %361
    %v364 = vsel %vm160, %v359, %v362
    %v366 = vsel %vm228, %v364, 0
    %368 = vmatpush.msra.mxu0 0.0
    %369 = vmatpush.msra.mxu0 0.0
    %370 = vmatpush.msra.mxu0 0.0
    %371 = vmatpush.msra.mxu0 0.0
    %372 = vmatpush.msra.mxu0 0.0
    %373 = vmatpush.msra.mxu0 0.0
    %374 = vmatpush.msra.mxu0 0.0
    %375 = vmatpush.msra.mxu0 0.0
    %376 = vmatpush.msra.mxu0 %v158
    %377 = vmatpush.msra.mxu0 %v157
    %378 = vmatpush.msra.mxu0 %v156
    %379 = vmatpush.msra.mxu0 %v155
    %380 = vmatpush.msra.mxu0 %v154
    %381 = vmatpush.msra.mxu0 %v153
    %382 = vmatpush.msra.mxu0 %v152
    %383 = vmatpush.msra.mxu0 %v151
    %384 = vmatmul.f32.gmra.mxu0 %v366
    %v385 = vpop.f32.mrf.mxu0
    %v386 = vadd.f32 %v159, %v385
    %387 = vdwg.mxu0
    %v388 = vxor.u32 %v386, 2147483648
    %v389 = vmul.f32 %v388, 1.442695
    %v390 = vpow.pop %v389
    %v391 = vadd.f32 %v390, 1.0
    %v392 = vrcp.pop %v391
    %v393 = vmul.f32 %v391, %v392
    %v394 = vsub.f32 1.0, %v393
    %v395 = vmul.f32 %v392, %v394
    %v396 = vadd.f32 %v392, %v395
    %vm397 = vweird.f32 %v391
    %vm398 = vweird.f32 %v392
    %vm399 = vmor %vm397, %vm398
    %v400 = vsel %vm399, %v392, %v396
    %v401 = vand.u32 2147483647, %v391
    %vm402 = vcmp.eq.f32.partialorder %v401, 8.507059e+37
    %v403 = vand.u32 %v391, 2147483648
    %v404 = vor.u32 1.1754944e-38, %v403
    %v405 = vsel %vm402, %v404, %v400
    %v406 = vmul.f32 1.0, %v405
    %v407 = vtanh.pop %v386
    %v408 = vmul.f32 %v406, %v282
    %410 = vrot.lane.b32.xlu0 %v407, 64
    %v411 = vpop.permute.xlu0 %410
    %v413 = vmul.f32 %v406, %v411
    %415 = vrot.lane.b32.xlu0 %v413, 32
    %v416 = vpop.permute.xlu0 %415
    %v418 = vadd.f32 %v408, %v416
    %v419 = vtanh.pop %v418
    %421 = vrot.lane.b32.xlu0 %v419, 64
    %v422 = vpop.permute.xlu0 %421
    %v424 = vmul.f32 %v406, %v422
    %426 = vrot.lane.b32.xlu0 %v424, 32
    %v427 = vpop.permute.xlu0 %426
    %429 = vst.msk [vmem:[#allocation3 + $0x1] sm:$0x1] %vm293, %v427
    %v430 = vrot.slane %v142, 2
    %v432 = vsel %vm160, %v359, 0
    %434 = vmatpush.msra.mxu0 0.0
    %435 = vmatpush.msra.mxu0 0.0
    %436 = vmatpush.msra.mxu0 0.0
    %437 = vmatpush.msra.mxu0 0.0
    %438 = vmatpush.msra.mxu0 0.0
    %439 = vmatpush.msra.mxu0 0.0
    %440 = vmatpush.msra.mxu0 0.0
    %441 = vmatpush.msra.mxu0 0.0
    %442 = vmatpush.msra.mxu0 0.0
    %443 = vmatpush.msra.mxu0 0.0
    %444 = vmatpush.msra.mxu0 0.0
    %445 = vmatpush.msra.mxu0 0.0
    %446 = vmatpush.msra.mxu0 %v150
    %447 = vmatpush.msra.mxu0 %v149
    %448 = vmatpush.msra.mxu0 %v148
    %449 = vmatpush.msra.mxu0 %v147
    %450 = vmatmul.f32.gmra.mxu0 %v432
    %v451 = vpop.f32.mrf.mxu0
    %v452 = vadd.f32 %v430, %v451
    %453 = vdwg.mxu0
    %v454 = vxor.u32 %v452, 2147483648
    %v455 = vmul.f32 %v454, 1.442695
    %v456 = vpow.pop %v455
    %v457 = vadd.f32 %v456, 1.0
    %v458 = vrcp.pop %v457
    %v459 = vmul.f32 %v457, %v458
    %v460 = vsub.f32 1.0, %v459
    %v461 = vmul.f32 %v458, %v460
    %v462 = vadd.f32 %v458, %v461
    %vm463 = vweird.f32 %v457
    %vm464 = vweird.f32 %v458
    %vm465 = vmor %vm463, %vm464
    %v466 = vsel %vm465, %v458, %v462
    %v467 = vand.u32 2147483647, %v457
    %vm468 = vcmp.eq.f32.partialorder %v467, 8.507059e+37
    %v469 = vand.u32 %v457, 2147483648
    %v470 = vor.u32 1.1754944e-38, %v469
    %v471 = vsel %vm468, %v470, %v466
    %v472 = vmul.f32 1.0, %v471
    %v473 = vtanh.pop %v452
    %v474 = vmul.f32 %v472, %v350
    %476 = vrot.lane.b32.xlu0 %v473, 64
    %v477 = vpop.permute.xlu0 %476
    %v479 = vmul.f32 %v472, %v477
    %481 = vrot.lane.b32.xlu0 %v479, 32
    %v482 = vpop.permute.xlu0 %481
    %v484 = vadd.f32 %v474, %v482
    %v485 = vtanh.pop %v484
    %487 = vrot.lane.b32.xlu0 %v485, 64
    %v488 = vpop.permute.xlu0 %487
    %v490 = vmul.f32 %v472, %v488
    %492 = vrot.lane.b32.xlu0 %v490, 32
    %v493 = vpop.permute.xlu0 %492
    %495 = vrot.lane.b32.xlu0 %v424, 64
    %v496 = vpop.permute.xlu0 %495
    %v498 = vsel %vm160, %v493, %v496
    %v500 = vsel %vm228, %v498, 0
    %502 = vmatpush.msra.mxu0 0.0
    %503 = vmatpush.msra.mxu0 0.0
    %504 = vmatpush.msra.mxu0 0.0
    %505 = vmatpush.msra.mxu0 0.0
    %506 = vmatpush.msra.mxu0 0.0
    %507 = vmatpush.msra.mxu0 0.0
    %508 = vmatpush.msra.mxu0 0.0
    %509 = vmatpush.msra.mxu0 0.0
    %510 = vmatpush.msra.mxu0 %v158
    %511 = vmatpush.msra.mxu0 %v157
    %512 = vmatpush.msra.mxu0 %v156
    %513 = vmatpush.msra.mxu0 %v155
    %514 = vmatpush.msra.mxu0 %v154
    %515 = vmatpush.msra.mxu0 %v153
    %516 = vmatpush.msra.mxu0 %v152
    %517 = vmatpush.msra.mxu0 %v151
    %518 = vmatmul.f32.gmra.mxu0 %v500
    %v519 = vpop.f32.mrf.mxu0
    %v520 = vadd.f32 %v159, %v519
    %521 = vdwg.mxu0
    %v522 = vxor.u32 %v520, 2147483648
    %v523 = vmul.f32 %v522, 1.442695
    %v524 = vpow.pop %v523
    %v525 = vadd.f32 %v524, 1.0
    %v526 = vrcp.pop %v525
    %v527 = vmul.f32 %v525, %v526
    %v528 = vsub.f32 1.0, %v527
    %v529 = vmul.f32 %v526, %v528
    %v530 = vadd.f32 %v526, %v529
    %vm531 = vweird.f32 %v525
    %vm532 = vweird.f32 %v526
    %vm533 = vmor %vm531, %vm532
    %v534 = vsel %vm533, %v526, %v530
    %v535 = vand.u32 2147483647, %v525
    %vm536 = vcmp.eq.f32.partialorder %v535, 8.507059e+37
    %v537 = vand.u32 %v525, 2147483648
    %v538 = vor.u32 1.1754944e-38, %v537
    %v539 = vsel %vm536, %v538, %v534
    %v540 = vmul.f32 1.0, %v539
    %v541 = vtanh.pop %v520
    %v542 = vmul.f32 %v540, %v418
    %544 = vrot.lane.b32.xlu0 %v541, 64
    %v545 = vpop.permute.xlu0 %544
    %v547 = vmul.f32 %v540, %v545
    %549 = vrot.lane.b32.xlu0 %v547, 32
    %v550 = vpop.permute.xlu0 %549
    %v552 = vadd.f32 %v542, %v550
    %v553 = vtanh.pop %v552
    %555 = vrot.lane.b32.xlu0 %v553, 64
    %v556 = vpop.permute.xlu0 %555
    %v558 = vmul.f32 %v540, %v556
    %560 = vrot.lane.b32.xlu0 %v558, 32
    %v561 = vpop.permute.xlu0 %560
    %563 = vst.msk [vmem:[#allocation3 + $0x2] sm:$0x1] %vm293, %v561
    %v564 = vrot.slane %v142, 3
    %v566 = vsel %vm160, %v493, 0
    %568 = vmatpush.msra.mxu0 0.0
    %569 = vmatpush.msra.mxu0 0.0
    %570 = vmatpush.msra.mxu0 0.0
    %571 = vmatpush.msra.mxu0 0.0
    %572 = vmatpush.msra.mxu0 0.0
    %573 = vmatpush.msra.mxu0 0.0
    %574 = vmatpush.msra.mxu0 0.0
    %575 = vmatpush.msra.mxu0 0.0
    %576 = vmatpush.msra.mxu0 0.0
    %577 = vmatpush.msra.mxu0 0.0
    %578 = vmatpush.msra.mxu0 0.0
    %579 = vmatpush.msra.mxu0 0.0
    %580 = vmatpush.msra.mxu0 %v150
    %581 = vmatpush.msra.mxu0 %v149
    %582 = vmatpush.msra.mxu0 %v148
    %583 = vmatpush.msra.mxu0 %v147
    %584 = vmatmul.f32.gmra.mxu0 %v566
    %v585 = vpop.f32.mrf.mxu0
    %v586 = vadd.f32 %v564, %v585
    %587 = vdwg.mxu0
    %v588 = vxor.u32 %v586, 2147483648
    %v589 = vmul.f32 %v588, 1.442695
    %v590 = vpow.pop %v589
    %v591 = vadd.f32 %v590, 1.0
    %v592 = vrcp.pop %v591
    %v593 = vmul.f32 %v591, %v592
    %v594 = vsub.f32 1.0, %v593
    %v595 = vmul.f32 %v592, %v594
    %v596 = vadd.f32 %v592, %v595
    %vm597 = vweird.f32 %v591
    %vm598 = vweird.f32 %v592
    %vm599 = vmor %vm597, %vm598
    %v600 = vsel %vm599, %v592, %v596
    %v601 = vand.u32 2147483647, %v591
    %vm602 = vcmp.eq.f32.partialorder %v601, 8.507059e+37
    %v603 = vand.u32 %v591, 2147483648
    %v604 = vor.u32 1.1754944e-38, %v603
    %v605 = vsel %vm602, %v604, %v600
    %v606 = vmul.f32 1.0, %v605
    %v607 = vtanh.pop %v586
    %v608 = vmul.f32 %v606, %v484
    %610 = vrot.lane.b32.xlu0 %v607, 64
    %v611 = vpop.permute.xlu0 %610
    %v613 = vmul.f32 %v606, %v611
    %615 = vrot.lane.b32.xlu0 %v613, 32
    %v616 = vpop.permute.xlu0 %615
    %v618 = vadd.f32 %v608, %v616
    %v619 = vtanh.pop %v618
    %621 = vrot.lane.b32.xlu0 %v619, 64
    %v622 = vpop.permute.xlu0 %621
    %v624 = vmul.f32 %v606, %v622
    %626 = vrot.lane.b32.xlu0 %v624, 32
    %v627 = vpop.permute.xlu0 %626
    %629 = vrot.lane.b32.xlu0 %v558, 64
    %v630 = vpop.permute.xlu0 %629
    %v632 = vsel %vm160, %v627, %v630
    %v634 = vsel %vm228, %v632, 0
    %636 = vmatpush.msra.mxu0 0.0
    %637 = vmatpush.msra.mxu0 0.0
    %638 = vmatpush.msra.mxu0 0.0
    %639 = vmatpush.msra.mxu0 0.0
    %640 = vmatpush.msra.mxu0 0.0
    %641 = vmatpush.msra.mxu0 0.0
    %642 = vmatpush.msra.mxu0 0.0
    %643 = vmatpush.msra.mxu0 0.0
    %644 = vmatpush.msra.mxu0 %v158
    %645 = vmatpush.msra.mxu0 %v157
    %646 = vmatpush.msra.mxu0 %v156
    %647 = vmatpush.msra.mxu0 %v155
    %648 = vmatpush.msra.mxu0 %v154
    %649 = vmatpush.msra.mxu0 %v153
    %650 = vmatpush.msra.mxu0 %v152
    %651 = vmatpush.msra.mxu0 %v151
    %652 = vmatmul.f32.gmra.mxu0 %v634
    %v653 = vpop.f32.mrf.mxu0
    %v654 = vadd.f32 %v159, %v653
    %655 = vdwg.mxu0
    %v656 = vxor.u32 %v654, 2147483648
    %v657 = vmul.f32 %v656, 1.442695
    %v658 = vpow.pop %v657
    %v659 = vadd.f32 %v658, 1.0
    %v660 = vrcp.pop %v659
    %v661 = vmul.f32 %v659, %v660
    %v662 = vsub.f32 1.0, %v661
    %v663 = vmul.f32 %v660, %v662
    %v664 = vadd.f32 %v660, %v663
    %vm665 = vweird.f32 %v659
    %vm666 = vweird.f32 %v660
    %vm667 = vmor %vm665, %vm666
    %v668 = vsel %vm667, %v660, %v664
    %v669 = vand.u32 2147483647, %v659
    %vm670 = vcmp.eq.f32.partialorder %v669, 8.507059e+37
    %v671 = vand.u32 %v659, 2147483648
    %v672 = vor.u32 1.1754944e-38, %v671
    %v673 = vsel %vm670, %v672, %v668
    %v674 = vmul.f32 1.0, %v673
    %v675 = vtanh.pop %v654
    %v676 = vmul.f32 %v674, %v552
    %678 = vrot.lane.b32.xlu0 %v675, 64
    %v679 = vpop.permute.xlu0 %678
    %v681 = vmul.f32 %v674, %v679
    %683 = vrot.lane.b32.xlu0 %v681, 32
    %v684 = vpop.permute.xlu0 %683
    %v686 = vadd.f32 %v676, %v684
    %v687 = vtanh.pop %v686
    %689 = vrot.lane.b32.xlu0 %v687, 64
    %v690 = vpop.permute.xlu0 %689
    %v692 = vmul.f32 %v674, %v690
    %694 = vrot.lane.b32.xlu0 %v692, 32
    %v695 = vpop.permute.xlu0 %694
    %697 = vst.msk [vmem:[#allocation3 + $0x3] sm:$0x1] %vm293, %v695
    %v698 = vrot.slane %v142, 4
    %v700 = vsel %vm160, %v627, 0
    %702 = vmatpush.msra.mxu0 0.0
    %703 = vmatpush.msra.mxu0 0.0
    %704 = vmatpush.msra.mxu0 0.0
    %705 = vmatpush.msra.mxu0 0.0
    %706 = vmatpush.msra.mxu0 0.0
    %707 = vmatpush.msra.mxu0 0.0
    %708 = vmatpush.msra.mxu0 0.0
    %709 = vmatpush.msra.mxu0 0.0
    %710 = vmatpush.msra.mxu0 0.0
    %711 = vmatpush.msra.mxu0 0.0
    %712 = vmatpush.msra.mxu0 0.0
    %713 = vmatpush.msra.mxu0 0.0
    %714 = vmatpush.msra.mxu0 %v150
    %715 = vmatpush.msra.mxu0 %v149
    %716 = vmatpush.msra.mxu0 %v148
    %717 = vmatpush.msra.mxu0 %v147
    %718 = vmatmul.f32.gmra.mxu0 %v700
    %v719 = vpop.f32.mrf.mxu0
    %v720 = vadd.f32 %v698, %v719
    %721 = vdwg.mxu0
    %v722 = vxor.u32 %v720, 2147483648
    %v723 = vmul.f32 %v722, 1.442695
    %v724 = vpow.pop %v723
    %v725 = vadd.f32 %v724, 1.0
    %v726 = vrcp.pop %v725
    %v727 = vmul.f32 %v725, %v726
    %v728 = vsub.f32 1.0, %v727
    %v729 = vmul.f32 %v726, %v728
    %v730 = vadd.f32 %v726, %v729
    %vm731 = vweird.f32 %v725
    %vm732 = vweird.f32 %v726
    %vm733 = vmor %vm731, %vm732
    %v734 = vsel %vm733, %v726, %v730
    %v735 = vand.u32 2147483647, %v725
    %vm736 = vcmp.eq.f32.partialorder %v735, 8.507059e+37
    %v737 = vand.u32 %v725, 2147483648
    %v738 = vor.u32 1.1754944e-38, %v737
    %v739 = vsel %vm736, %v738, %v734
    %v740 = vmul.f32 1.0, %v739
    %v741 = vtanh.pop %v720
    %v742 = vmul.f32 %v740, %v618
    %744 = vrot.lane.b32.xlu0 %v741, 64
    %v745 = vpop.permute.xlu0 %744
    %v747 = vmul.f32 %v740, %v745
    %749 = vrot.lane.b32.xlu0 %v747, 32
    %v750 = vpop.permute.xlu0 %749
    %v752 = vadd.f32 %v742, %v750
    %v753 = vtanh.pop %v752
    %755 = vrot.lane.b32.xlu0 %v753, 64
    %v756 = vpop.permute.xlu0 %755
    %v758 = vmul.f32 %v740, %v756
    %760 = vrot.lane.b32.xlu0 %v758, 32
    %v761 = vpop.permute.xlu0 %760
    %763 = vrot.lane.b32.xlu0 %v692, 64
    %v764 = vpop.permute.xlu0 %763
    %v766 = vsel %vm160, %v761, %v764
    %v768 = vsel %vm228, %v766, 0
    %770 = vmatpush.msra.mxu0 0.0
    %771 = vmatpush.msra.mxu0 0.0
    %772 = vmatpush.msra.mxu0 0.0
    %773 = vmatpush.msra.mxu0 0.0
    %774 = vmatpush.msra.mxu0 0.0
    %775 = vmatpush.msra.mxu0 0.0
    %776 = vmatpush.msra.mxu0 0.0
    %777 = vmatpush.msra.mxu0 0.0
    %778 = vmatpush.msra.mxu0 %v158
    %779 = vmatpush.msra.mxu0 %v157
    %780 = vmatpush.msra.mxu0 %v156
    %781 = vmatpush.msra.mxu0 %v155
    %782 = vmatpush.msra.mxu0 %v154
    %783 = vmatpush.msra.mxu0 %v153
    %784 = vmatpush.msra.mxu0 %v152
    %785 = vmatpush.msra.mxu0 %v151
    %786 = vmatmul.f32.gmra.mxu0 %v768
    %v787 = vpop.f32.mrf.mxu0
    %v788 = vadd.f32 %v159, %v787
    %789 = vdwg.mxu0
    %v790 = vxor.u32 %v788, 2147483648
    %v791 = vmul.f32 %v790, 1.442695
    %v792 = vpow.pop %v791
    %v793 = vadd.f32 %v792, 1.0
    %v794 = vrcp.pop %v793
    %v795 = vmul.f32 %v793, %v794
    %v796 = vsub.f32 1.0, %v795
    %v797 = vmul.f32 %v794, %v796
    %v798 = vadd.f32 %v794, %v797
    %vm799 = vweird.f32 %v793
    %vm800 = vweird.f32 %v794
    %vm801 = vmor %vm799, %vm800
    %v802 = vsel %vm801, %v794, %v798
    %v803 = vand.u32 2147483647, %v793
    %vm804 = vcmp.eq.f32.partialorder %v803, 8.507059e+37
    %v805 = vand.u32 %v793, 2147483648
    %v806 = vor.u32 1.1754944e-38, %v805
    %v807 = vsel %vm804, %v806, %v802
    %v808 = vmul.f32 1.0, %v807
    %v809 = vtanh.pop %v788
    %v810 = vmul.f32 %v808, %v686
    %812 = vrot.lane.b32.xlu0 %v809, 64
    %v813 = vpop.permute.xlu0 %812
    %v815 = vmul.f32 %v808, %v813
    %817 = vrot.lane.b32.xlu0 %v815, 32
    %v818 = vpop.permute.xlu0 %817
    %v820 = vadd.f32 %v810, %v818
    %v821 = vtanh.pop %v820
    %823 = vrot.lane.b32.xlu0 %v821, 64
    %v824 = vpop.permute.xlu0 %823
    %v826 = vmul.f32 %v808, %v824
    %828 = vrot.lane.b32.xlu0 %v826, 32
    %v829 = vpop.permute.xlu0 %828
    %831 = vst.msk [vmem:[#allocation3 + $0x4] sm:$0x1] %vm293, %v829
    %v832 = vrot.slane %v142, 5
    %v834 = vsel %vm160, %v761, 0
    %836 = vmatpush.msra.mxu0 0.0
    %837 = vmatpush.msra.mxu0 0.0
    %838 = vmatpush.msra.mxu0 0.0
    %839 = vmatpush.msra.mxu0 0.0
    %840 = vmatpush.msra.mxu0 0.0
    %841 = vmatpush.msra.mxu0 0.0
    %842 = vmatpush.msra.mxu0 0.0
    %843 = vmatpush.msra.mxu0 0.0
    %844 = vmatpush.msra.mxu0 0.0
    %845 = vmatpush.msra.mxu0 0.0
    %846 = vmatpush.msra.mxu0 0.0
    %847 = vmatpush.msra.mxu0 0.0
    %848 = vmatpush.msra.mxu0 %v150
    %849 = vmatpush.msra.mxu0 %v149
    %850 = vmatpush.msra.mxu0 %v148
    %851 = vmatpush.msra.mxu0 %v147
    %852 = vmatmul.f32.gmra.mxu0 %v834
    %v853 = vpop.f32.mrf.mxu0
    %v854 = vadd.f32 %v832, %v853
    %855 = vdwg.mxu0
    %v856 = vxor.u32 %v854, 2147483648
    %v857 = vmul.f32 %v856, 1.442695
    %v858 = vpow.pop %v857
    %v859 = vadd.f32 %v858, 1.0
    %v860 = vrcp.pop %v859
    %v861 = vmul.f32 %v859, %v860
    %v862 = vsub.f32 1.0, %v861
    %v863 = vmul.f32 %v860, %v862
    %v864 = vadd.f32 %v860, %v863
    %vm865 = vweird.f32 %v859
    %vm866 = vweird.f32 %v860
    %vm867 = vmor %vm865, %vm866
    %v868 = vsel %vm867, %v860, %v864
    %v869 = vand.u32 2147483647, %v859
    %vm870 = vcmp.eq.f32.partialorder %v869, 8.507059e+37
    %v871 = vand.u32 %v859, 2147483648
    %v872 = vor.u32 1.1754944e-38, %v871
    %v873 = vsel %vm870, %v872, %v868
    %v874 = vmul.f32 1.0, %v873
    %v875 = vtanh.pop %v854
    %v876 = vmul.f32 %v874, %v752
    %878 = vrot.lane.b32.xlu0 %v875, 64
    %v879 = vpop.permute.xlu0 %878
    %v881 = vmul.f32 %v874, %v879
    %883 = vrot.lane.b32.xlu0 %v881, 32
    %v884 = vpop.permute.xlu0 %883
    %v886 = vadd.f32 %v876, %v884
    %v887 = vtanh.pop %v886
    %889 = vrot.lane.b32.xlu0 %v887, 64
    %v890 = vpop.permute.xlu0 %889
    %v892 = vmul.f32 %v874, %v890
    %894 = vrot.lane.b32.xlu0 %v892, 32
    %v895 = vpop.permute.xlu0 %894
    %897 = vrot.lane.b32.xlu0 %v826, 64
    %v898 = vpop.permute.xlu0 %897
    %v900 = vsel %vm160, %v895, %v898
    %v902 = vsel %vm228, %v900, 0
    %904 = vmatpush.msra.mxu0 0.0
    %905 = vmatpush.msra.mxu0 0.0
    %906 = vmatpush.msra.mxu0 0.0
    %907 = vmatpush.msra.mxu0 0.0
    %908 = vmatpush.msra.mxu0 0.0
    %909 = vmatpush.msra.mxu0 0.0
    %910 = vmatpush.msra.mxu0 0.0
    %911 = vmatpush.msra.mxu0 0.0
    %912 = vmatpush.msra.mxu0 %v158
    %913 = vmatpush.msra.mxu0 %v157
    %914 = vmatpush.msra.mxu0 %v156
    %915 = vmatpush.msra.mxu0 %v155
    %916 = vmatpush.msra.mxu0 %v154
    %917 = vmatpush.msra.mxu0 %v153
    %918 = vmatpush.msra.mxu0 %v152
    %919 = vmatpush.msra.mxu0 %v151
    %920 = vmatmul.f32.gmra.mxu0 %v902
    %v921 = vpop.f32.mrf.mxu0
    %v922 = vadd.f32 %v159, %v921
    %923 = vdwg.mxu0
    %v924 = vxor.u32 %v922, 2147483648
    %v925 = vmul.f32 %v924, 1.442695
    %v926 = vpow.pop %v925
    %v927 = vadd.f32 %v926, 1.0
    %v928 = vrcp.pop %v927
    %v929 = vmul.f32 %v927, %v928
    %v930 = vsub.f32 1.0, %v929
    %v931 = vmul.f32 %v928, %v930
    %v932 = vadd.f32 %v928, %v931
    %vm933 = vweird.f32 %v927
    %vm934 = vweird.f32 %v928
    %vm935 = vmor %vm933, %vm934
    %v936 = vsel %vm935, %v928, %v932
    %v937 = vand.u32 2147483647, %v927
    %vm938 = vcmp.eq.f32.partialorder %v937, 8.507059e+37
    %v939 = vand.u32 %v927, 2147483648
    %v940 = vor.u32 1.1754944e-38, %v939
    %v941 = vsel %vm938, %v940, %v936
    %v942 = vmul.f32 1.0, %v941
    %v943 = vtanh.pop %v922
    %v944 = vmul.f32 %v942, %v820
    %946 = vrot.lane.b32.xlu0 %v943, 64
    %v947 = vpop.permute.xlu0 %946
    %v949 = vmul.f32 %v942, %v947
    %951 = vrot.lane.b32.xlu0 %v949, 32
    %v952 = vpop.permute.xlu0 %951
    %v954 = vadd.f32 %v944, %v952
    %v955 = vtanh.pop %v954
    %957 = vrot.lane.b32.xlu0 %v955, 64
    %v958 = vpop.permute.xlu0 %957
    %v960 = vmul.f32 %v942, %v958
    %962 = vrot.lane.b32.xlu0 %v960, 32
    %v963 = vpop.permute.xlu0 %962
    %965 = vst.msk [vmem:[#allocation3 + $0x5] sm:$0x1] %vm293, %v963
    %v966 = vrot.slane %v142, 6
    %v968 = vsel %vm160, %v895, 0
    %970 = vmatpush.msra.mxu0 0.0
    %971 = vmatpush.msra.mxu0 0.0
    %972 = vmatpush.msra.mxu0 0.0
    %973 = vmatpush.msra.mxu0 0.0
    %974 = vmatpush.msra.mxu0 0.0
    %975 = vmatpush.msra.mxu0 0.0
    %976 = vmatpush.msra.mxu0 0.0
    %977 = vmatpush.msra.mxu0 0.0
    %978 = vmatpush.msra.mxu0 0.0
    %979 = vmatpush.msra.mxu0 0.0
    %980 = vmatpush.msra.mxu0 0.0
    %981 = vmatpush.msra.mxu0 0.0
    %982 = vmatpush.msra.mxu0 %v150
    %983 = vmatpush.msra.mxu0 %v149
    %984 = vmatpush.msra.mxu0 %v148
    %985 = vmatpush.msra.mxu0 %v147
    %986 = vmatmul.f32.gmra.mxu0 %v968
    %v987 = vpop.f32.mrf.mxu0
    %v988 = vadd.f32 %v966, %v987
    %989 = vdwg.mxu0
    %v990 = vxor.u32 %v988, 2147483648
    %v991 = vmul.f32 %v990, 1.442695
    %v992 = vpow.pop %v991
    %v993 = vadd.f32 %v992, 1.0
    %v994 = vrcp.pop %v993
    %v995 = vmul.f32 %v993, %v994
    %v996 = vsub.f32 1.0, %v995
    %v997 = vmul.f32 %v994, %v996
    %v998 = vadd.f32 %v994, %v997
    %vm999 = vweird.f32 %v993
    %vm1000 = vweird.f32 %v994
    %vm1001 = vmor %vm999, %vm1000
    %v1002 = vsel %vm1001, %v994, %v998
    %v1003 = vand.u32 2147483647, %v993
    %vm1004 = vcmp.eq.f32.partialorder %v1003, 8.507059e+37
    %v1005 = vand.u32 %v993, 2147483648
    %v1006 = vor.u32 1.1754944e-38, %v1005
    %v1007 = vsel %vm1004, %v1006, %v1002
    %v1008 = vmul.f32 1.0, %v1007
    %v1009 = vtanh.pop %v988
    %v1010 = vmul.f32 %v1008, %v886
    %1012 = vrot.lane.b32.xlu0 %v1009, 64
    %v1013 = vpop.permute.xlu0 %1012
    %v1015 = vmul.f32 %v1008, %v1013
    %1017 = vrot.lane.b32.xlu0 %v1015, 32
    %v1018 = vpop.permute.xlu0 %1017
    %v1020 = vadd.f32 %v1010, %v1018
    %v1021 = vtanh.pop %v1020
    %1023 = vrot.lane.b32.xlu0 %v1021, 64
    %v1024 = vpop.permute.xlu0 %1023
    %v1026 = vmul.f32 %v1008, %v1024
    %1028 = vrot.lane.b32.xlu0 %v1026, 32
    %v1029 = vpop.permute.xlu0 %1028
    %1031 = vrot.lane.b32.xlu0 %v960, 64
    %v1032 = vpop.permute.xlu0 %1031
    %v1034 = vsel %vm160, %v1029, %v1032
    %v1036 = vsel %vm228, %v1034, 0
    %1038 = vmatpush.msra.mxu0 0.0
    %1039 = vmatpush.msra.mxu0 0.0
    %1040 = vmatpush.msra.mxu0 0.0
    %1041 = vmatpush.msra.mxu0 0.0
    %1042 = vmatpush.msra.mxu0 0.0
    %1043 = vmatpush.msra.mxu0 0.0
    %1044 = vmatpush.msra.mxu0 0.0
    %1045 = vmatpush.msra.mxu0 0.0
    %1046 = vmatpush.msra.mxu0 %v158
    %1047 = vmatpush.msra.mxu0 %v157
    %1048 = vmatpush.msra.mxu0 %v156
    %1049 = vmatpush.msra.mxu0 %v155
    %1050 = vmatpush.msra.mxu0 %v154
    %1051 = vmatpush.msra.mxu0 %v153
    %1052 = vmatpush.msra.mxu0 %v152
    %1053 = vmatpush.msra.mxu0 %v151
    %1054 = vmatmul.f32.gmra.mxu0 %v1036
    %v1055 = vpop.f32.mrf.mxu0
    %v1056 = vadd.f32 %v159, %v1055
    %1057 = vdwg.mxu0
    %v1058 = vxor.u32 %v1056, 2147483648
    %v1059 = vmul.f32 %v1058, 1.442695
    %v1060 = vpow.pop %v1059
    %v1061 = vadd.f32 %v1060, 1.0
    %v1062 = vrcp.pop %v1061
    %v1063 = vmul.f32 %v1061, %v1062
    %v1064 = vsub.f32 1.0, %v1063
    %v1065 = vmul.f32 %v1062, %v1064
    %v1066 = vadd.f32 %v1062, %v1065
    %vm1067 = vweird.f32 %v1061
    %vm1068 = vweird.f32 %v1062
    %vm1069 = vmor %vm1067, %vm1068
    %v1070 = vsel %vm1069, %v1062, %v1066
    %v1071 = vand.u32 2147483647, %v1061
    %vm1072 = vcmp.eq.f32.partialorder %v1071, 8.507059e+37
    %v1073 = vand.u32 %v1061, 2147483648
    %v1074 = vor.u32 1.1754944e-38, %v1073
    %v1075 = vsel %vm1072, %v1074, %v1070
    %v1076 = vmul.f32 1.0, %v1075
    %v1077 = vtanh.pop %v1056
    %v1078 = vmul.f32 %v1076, %v954
    %1080 = vrot.lane.b32.xlu0 %v1077, 64
    %v1081 = vpop.permute.xlu0 %1080
    %v1083 = vmul.f32 %v1076, %v1081
    %1085 = vrot.lane.b32.xlu0 %v1083, 32
    %v1086 = vpop.permute.xlu0 %1085
    %v1088 = vadd.f32 %v1078, %v1086
    %v1089 = vtanh.pop %v1088
    %1091 = vrot.lane.b32.xlu0 %v1089, 64
    %v1092 = vpop.permute.xlu0 %1091
    %v1094 = vmul.f32 %v1076, %v1092
    %1096 = vrot.lane.b32.xlu0 %v1094, 32
    %v1097 = vpop.permute.xlu0 %1096
    %1099 = vst.msk [vmem:[#allocation3 + $0x6] sm:$0x1] %vm293, %v1097
    %v1100 = vrot.slane %v142, 7
    %v1102 = vsel %vm160, %v1029, 0
    %1104 = vmatpush.msra.mxu0 0.0
    %1105 = vmatpush.msra.mxu0 0.0
    %1106 = vmatpush.msra.mxu0 0.0
    %1107 = vmatpush.msra.mxu0 0.0
    %1108 = vmatpush.msra.mxu0 0.0
    %1109 = vmatpush.msra.mxu0 0.0
    %1110 = vmatpush.msra.mxu0 0.0
    %1111 = vmatpush.msra.mxu0 0.0
    %1112 = vmatpush.msra.mxu0 0.0
    %1113 = vmatpush.msra.mxu0 0.0
    %1114 = vmatpush.msra.mxu0 0.0
    %1115 = vmatpush.msra.mxu0 0.0
    %1116 = vmatpush.msra.mxu0 %v150
    %1117 = vmatpush.msra.mxu0 %v149
    %1118 = vmatpush.msra.mxu0 %v148
    %1119 = vmatpush.msra.mxu0 %v147
    %1120 = vmatmul.f32.gmra.mxu0 %v1102
    %v1121 = vpop.f32.mrf.mxu0
    %v1122 = vadd.f32 %v1100, %v1121
    %1123 = vdwg.mxu0
    %v1124 = vxor.u32 %v1122, 2147483648
    %v1125 = vmul.f32 %v1124, 1.442695
    %v1126 = vpow.pop %v1125
    %v1127 = vadd.f32 %v1126, 1.0
    %v1128 = vrcp.pop %v1127
    %v1129 = vmul.f32 %v1127, %v1128
    %v1130 = vsub.f32 1.0, %v1129
    %v1131 = vmul.f32 %v1128, %v1130
    %v1132 = vadd.f32 %v1128, %v1131
    %vm1133 = vweird.f32 %v1127
    %vm1134 = vweird.f32 %v1128
    %vm1135 = vmor %vm1133, %vm1134
    %v1136 = vsel %vm1135, %v1128, %v1132
    %v1137 = vand.u32 2147483647, %v1127
    %vm1138 = vcmp.eq.f32.partialorder %v1137, 8.507059e+37
    %v1139 = vand.u32 %v1127, 2147483648
    %v1140 = vor.u32 1.1754944e-38, %v1139
    %v1141 = vsel %vm1138, %v1140, %v1136
    %v1142 = vmul.f32 1.0, %v1141
    %v1143 = vtanh.pop %v1122
    %v1144 = vmul.f32 %v1142, %v1020
    %1146 = vrot.lane.b32.xlu0 %v1143, 64
    %v1147 = vpop.permute.xlu0 %1146
    %v1149 = vmul.f32 %v1142, %v1147
    %1151 = vrot.lane.b32.xlu0 %v1149, 32
    %v1152 = vpop.permute.xlu0 %1151
    %v1154 = vadd.f32 %v1144, %v1152
    %v1155 = vtanh.pop %v1154
    %1157 = vrot.lane.b32.xlu0 %v1155, 64
    %v1158 = vpop.permute.xlu0 %1157
    %v1160 = vmul.f32 %v1142, %v1158
    %1162 = vrot.lane.b32.xlu0 %v1160, 32
    %v1163 = vpop.permute.xlu0 %1162
    %1165 = vrot.lane.b32.xlu0 %v1094, 64
    %v1166 = vpop.permute.xlu0 %1165
    %v1168 = vsel %vm160, %v1163, %v1166
    %v1170 = vsel %vm228, %v1168, 0
    %1172 = vmatpush.msra.mxu0 0.0
    %1173 = vmatpush.msra.mxu0 0.0
    %1174 = vmatpush.msra.mxu0 0.0
    %1175 = vmatpush.msra.mxu0 0.0
    %1176 = vmatpush.msra.mxu0 0.0
    %1177 = vmatpush.msra.mxu0 0.0
    %1178 = vmatpush.msra.mxu0 0.0
    %1179 = vmatpush.msra.mxu0 0.0
    %1180 = vmatpush.msra.mxu0 %v158
    %1181 = vmatpush.msra.mxu0 %v157
    %1182 = vmatpush.msra.mxu0 %v156
    %1183 = vmatpush.msra.mxu0 %v155
    %1184 = vmatpush.msra.mxu0 %v154
    %1185 = vmatpush.msra.mxu0 %v153
    %1186 = vmatpush.msra.mxu0 %v152
    %1187 = vmatpush.msra.mxu0 %v151
    %1188 = vmatmul.f32.gmra.mxu0 %v1170
    %v1189 = vpop.f32.mrf.mxu0
    %v1190 = vadd.f32 %v159, %v1189
    %1191 = vdwg.mxu0
    %v1192 = vxor.u32 %v1190, 2147483648
    %v1193 = vmul.f32 %v1192, 1.442695
    %v1194 = vpow.pop %v1193
    %v1195 = vadd.f32 %v1194, 1.0
    %v1196 = vrcp.pop %v1195
    %v1197 = vmul.f32 %v1195, %v1196
    %v1198 = vsub.f32 1.0, %v1197
    %v1199 = vmul.f32 %v1196, %v1198
    %v1200 = vadd.f32 %v1196, %v1199
    %vm1201 = vweird.f32 %v1195
    %vm1202 = vweird.f32 %v1196
    %vm1203 = vmor %vm1201, %vm1202
    %v1204 = vsel %vm1203, %v1196, %v1200
    %v1205 = vand.u32 2147483647, %v1195
    %vm1206 = vcmp.eq.f32.partialorder %v1205, 8.507059e+37
    %v1207 = vand.u32 %v1195, 2147483648
    %v1208 = vor.u32 1.1754944e-38, %v1207
    %v1209 = vsel %vm1206, %v1208, %v1204
    %v1210 = vmul.f32 1.0, %v1209
    %v1211 = vtanh.pop %v1190
    %v1212 = vmul.f32 %v1210, %v1088
    %1214 = vrot.lane.b32.xlu0 %v1211, 64
    %v1215 = vpop.permute.xlu0 %1214
    %v1217 = vmul.f32 %v1210, %v1215
    %1219 = vrot.lane.b32.xlu0 %v1217, 32
    %v1220 = vpop.permute.xlu0 %1219
    %v1222 = vadd.f32 %v1212, %v1220
    %v1223 = vtanh.pop %v1222
    %1225 = vrot.lane.b32.xlu0 %v1223, 64
    %v1226 = vpop.permute.xlu0 %1225
    %v1228 = vmul.f32 %v1210, %v1226
    %1230 = vrot.lane.b32.xlu0 %v1228, 32
    %v1231 = vpop.permute.xlu0 %1230
    %1233 = vst.msk [vmem:[#allocation3 + $0x7] sm:$0x1] %vm293, %v1231
    %v1234 = vsel %vm160, %v1163, 0
    %1236 = vmatpush.msra.mxu0 0.0
    %1237 = vmatpush.msra.mxu0 0.0
    %1238 = vmatpush.msra.mxu0 0.0
    %1239 = vmatpush.msra.mxu0 0.0
    %1240 = vmatpush.msra.mxu0 0.0
    %1241 = vmatpush.msra.mxu0 0.0
    %1242 = vmatpush.msra.mxu0 0.0
    %1243 = vmatpush.msra.mxu0 0.0
    %1244 = vmatpush.msra.mxu0 0.0
    %1245 = vmatpush.msra.mxu0 0.0
    %1246 = vmatpush.msra.mxu0 0.0
    %1247 = vmatpush.msra.mxu0 0.0
    %1248 = vmatpush.msra.mxu0 %v150
    %1249 = vmatpush.msra.mxu0 %v149
    %1250 = vmatpush.msra.mxu0 %v148
    %1251 = vmatpush.msra.mxu0 %v147
    %1252 = vmatmul.f32.gmra.mxu0 %v1234
    %v1253 = vpop.f32.mrf.mxu0
    %v1254 = vadd.f32 %v145, %v1253
    %1255 = vdwg.mxu0
    %v1256 = vxor.u32 %v1254, 2147483648
    %v1257 = vmul.f32 %v1256, 1.442695
    %v1258 = vpow.pop %v1257
    %v1259 = vadd.f32 %v1258, 1.0
    %v1260 = vrcp.pop %v1259
    %v1261 = vmul.f32 %v1259, %v1260
    %v1262 = vsub.f32 1.0, %v1261
    %v1263 = vmul.f32 %v1260, %v1262
    %v1264 = vadd.f32 %v1260, %v1263
    %vm1265 = vweird.f32 %v1259
    %vm1266 = vweird.f32 %v1260
    %vm1267 = vmor %vm1265, %vm1266
    %v1268 = vsel %vm1267, %v1260, %v1264
    %v1269 = vand.u32 2147483647, %v1259
    %vm1270 = vcmp.eq.f32.partialorder %v1269, 8.507059e+37
    %v1271 = vand.u32 %v1259, 2147483648
    %v1272 = vor.u32 1.1754944e-38, %v1271
    %v1273 = vsel %vm1270, %v1272, %v1268
    %v1274 = vmul.f32 1.0, %v1273
    %v1275 = vtanh.pop %v1254
    %v1276 = vmul.f32 %v1274, %v1154
    %1278 = vrot.lane.b32.xlu0 %v1275, 64
    %v1279 = vpop.permute.xlu0 %1278
    %v1281 = vmul.f32 %v1274, %v1279
    %1283 = vrot.lane.b32.xlu0 %v1281, 32
    %v1284 = vpop.permute.xlu0 %1283
    %v1286 = vadd.f32 %v1276, %v1284
    %v1287 = vtanh.pop %v1286
    %1289 = vrot.lane.b32.xlu0 %v1287, 64
    %v1290 = vpop.permute.xlu0 %1289
    %v1292 = vmul.f32 %v1274, %v1290
    %1294 = vrot.lane.b32.xlu0 %v1292, 32
    %v1295 = vpop.permute.xlu0 %1294
    %1297 = vrot.lane.b32.xlu0 %v1228, 64
    %v1298 = vpop.permute.xlu0 %1297
    %v1300 = vsel %vm160, %v1295, %v1298
    %v1302 = vsel %vm228, %v1300, 0
    %1304 = vmatpush.msra.mxu0 0.0
    %1305 = vmatpush.msra.mxu0 0.0
    %1306 = vmatpush.msra.mxu0 0.0
    %1307 = vmatpush.msra.mxu0 0.0
    %1308 = vmatpush.msra.mxu0 0.0
    %1309 = vmatpush.msra.mxu0 0.0
    %1310 = vmatpush.msra.mxu0 0.0
    %1311 = vmatpush.msra.mxu0 0.0
    %1312 = vmatpush.msra.mxu0 %v158
    %1313 = vmatpush.msra.mxu0 %v157
    %1314 = vmatpush.msra.mxu0 %v156
    %1315 = vmatpush.msra.mxu0 %v155
    %1316 = vmatpush.msra.mxu0 %v154
    %1317 = vmatpush.msra.mxu0 %v153
    %1318 = vmatpush.msra.mxu0 %v152
    %1319 = vmatpush.msra.mxu0 %v151
    %1320 = vmatmul.f32.gmra.mxu0 %v1302
    %v1321 = vpop.f32.mrf.mxu0
    %v1322 = vadd.f32 %v159, %v1321
    %1323 = vdwg.mxu0
    %v1324 = vxor.u32 %v1322, 2147483648
    %v1325 = vmul.f32 %v1324, 1.442695
    %v1326 = vpow.pop %v1325
    %v1327 = vadd.f32 %v1326, 1.0
    %v1328 = vrcp.pop %v1327
    %v1329 = vmul.f32 %v1327, %v1328
    %v1330 = vsub.f32 1.0, %v1329
    %v1331 = vmul.f32 %v1328, %v1330
    %v1332 = vadd.f32 %v1328, %v1331
    %vm1333 = vweird.f32 %v1327
    %vm1334 = vweird.f32 %v1328
    %vm1335 = vmor %vm1333, %vm1334
    %v1336 = vsel %vm1335, %v1328, %v1332
    %v1337 = vand.u32 2147483647, %v1327
    %vm1338 = vcmp.eq.f32.partialorder %v1337, 8.507059e+37
    %v1339 = vand.u32 %v1327, 2147483648
    %v1340 = vor.u32 1.1754944e-38, %v1339
    %v1341 = vsel %vm1338, %v1340, %v1336
    %v1342 = vmul.f32 1.0, %v1341
    %v1343 = vtanh.pop %v1322
    %v1344 = vmul.f32 %v1342, %v1222
    %1346 = vrot.lane.b32.xlu0 %v1343, 64
    %v1347 = vpop.permute.xlu0 %1346
    %v1349 = vmul.f32 %v1342, %v1347
    %1351 = vrot.lane.b32.xlu0 %v1349, 32
    %v1352 = vpop.permute.xlu0 %1351
    %v1354 = vadd.f32 %v1344, %v1352
    %v1355 = vtanh.pop %v1354
    %1357 = vrot.lane.b32.xlu0 %v1355, 64
    %v1358 = vpop.permute.xlu0 %1357
    %v1360 = vmul.f32 %v1342, %v1358
    %1362 = vrot.lane.b32.xlu0 %v1360, 32
    %v1363 = vpop.permute.xlu0 %1362
    %1365 = vst.msk [vmem:[#allocation3 + $0x8] sm:$0x1] %vm293, %v1363
    %v1367 = vrot.slane %v145, 1
    %v1369 = vsel %vm160, %v1295, 0
    %1371 = vmatpush.msra.mxu0 0.0
    %1372 = vmatpush.msra.mxu0 0.0
    %1373 = vmatpush.msra.mxu0 0.0
    %1374 = vmatpush.msra.mxu0 0.0
    %1375 = vmatpush.msra.mxu0 0.0
    %1376 = vmatpush.msra.mxu0 0.0
    %1377 = vmatpush.msra.mxu0 0.0
    %1378 = vmatpush.msra.mxu0 0.0
    %1379 = vmatpush.msra.mxu0 0.0
    %1380 = vmatpush.msra.mxu0 0.0
    %1381 = vmatpush.msra.mxu0 0.0
    %1382 = vmatpush.msra.mxu0 0.0
    %1383 = vmatpush.msra.mxu0 %v150
    %1384 = vmatpush.msra.mxu0 %v149
    %1385 = vmatpush.msra.mxu0 %v148
    %1386 = vmatpush.msra.mxu0 %v147
    %1387 = vmatmul.f32.gmra.mxu0 %v1369
    %v1388 = vpop.f32.mrf.mxu0
    %v1389 = vadd.f32 %v1367, %v1388
    %1390 = vdwg.mxu0
    %v1391 = vxor.u32 %v1389, 2147483648
    %v1392 = vmul.f32 %v1391, 1.442695
    %v1393 = vpow.pop %v1392
    %v1394 = vadd.f32 %v1393, 1.0
    %v1395 = vrcp.pop %v1394
    %v1396 = vmul.f32 %v1394, %v1395
    %v1397 = vsub.f32 1.0, %v1396
    %v1398 = vmul.f32 %v1395, %v1397
    %v1399 = vadd.f32 %v1395, %v1398
    %vm1400 = vweird.f32 %v1394
    %vm1401 = vweird.f32 %v1395
    %vm1402 = vmor %vm1400, %vm1401
    %v1403 = vsel %vm1402, %v1395, %v1399
    %v1404 = vand.u32 2147483647, %v1394
    %vm1405 = vcmp.eq.f32.partialorder %v1404, 8.507059e+37
    %v1406 = vand.u32 %v1394, 2147483648
    %v1407 = vor.u32 1.1754944e-38, %v1406
    %v1408 = vsel %vm1405, %v1407, %v1403
    %v1409 = vmul.f32 1.0, %v1408
    %v1410 = vtanh.pop %v1389
    %v1411 = vmul.f32 %v1409, %v1286
    %1413 = vrot.lane.b32.xlu0 %v1410, 64
    %v1414 = vpop.permute.xlu0 %1413
    %v1416 = vmul.f32 %v1409, %v1414
    %1418 = vrot.lane.b32.xlu0 %v1416, 32
    %v1419 = vpop.permute.xlu0 %1418
    %v1421 = vadd.f32 %v1411, %v1419
    %v1422 = vtanh.pop %v1421
    %1424 = vrot.lane.b32.xlu0 %v1422, 64
    %v1425 = vpop.permute.xlu0 %1424
    %v1427 = vmul.f32 %v1409, %v1425
    %1429 = vrot.lane.b32.xlu0 %v1427, 32
    %v1430 = vpop.permute.xlu0 %1429
    %1432 = vrot.lane.b32.xlu0 %v1360, 64
    %v1433 = vpop.permute.xlu0 %1432
    %v1435 = vsel %vm160, %v1430, %v1433
    %v1437 = vsel %vm228, %v1435, 0
    %1439 = vmatpush.msra.mxu0 0.0
    %1440 = vmatpush.msra.mxu0 0.0
    %1441 = vmatpush.msra.mxu0 0.0
    %1442 = vmatpush.msra.mxu0 0.0
    %1443 = vmatpush.msra.mxu0 0.0
    %1444 = vmatpush.msra.mxu0 0.0
    %1445 = vmatpush.msra.mxu0 0.0
    %1446 = vmatpush.msra.mxu0 0.0
    %1447 = vmatpush.msra.mxu0 %v158
    %1448 = vmatpush.msra.mxu0 %v157
    %1449 = vmatpush.msra.mxu0 %v156
    %1450 = vmatpush.msra.mxu0 %v155
    %1451 = vmatpush.msra.mxu0 %v154
    %1452 = vmatpush.msra.mxu0 %v153
    %1453 = vmatpush.msra.mxu0 %v152
    %1454 = vmatpush.msra.mxu0 %v151
    %1455 = vmatmul.f32.gmra.mxu0 %v1437
    %v1456 = vpop.f32.mrf.mxu0
    %v1457 = vadd.f32 %v159, %v1456
    %1458 = vdwg.mxu0
    %v1459 = vxor.u32 %v1457, 2147483648
    %v1460 = vmul.f32 %v1459, 1.442695
    %v1461 = vpow.pop %v1460
    %v1462 = vadd.f32 %v1461, 1.0
    %v1463 = vrcp.pop %v1462
    %v1464 = vmul.f32 %v1462, %v1463
    %v1465 = vsub.f32 1.0, %v1464
    %v1466 = vmul.f32 %v1463, %v1465
    %v1467 = vadd.f32 %v1463, %v1466
    %vm1468 = vweird.f32 %v1462
    %vm1469 = vweird.f32 %v1463
    %vm1470 = vmor %vm1468, %vm1469
    %v1471 = vsel %vm1470, %v1463, %v1467
    %v1472 = vand.u32 2147483647, %v1462
    %vm1473 = vcmp.eq.f32.partialorder %v1472, 8.507059e+37
    %v1474 = vand.u32 %v1462, 2147483648
    %v1475 = vor.u32 1.1754944e-38, %v1474
    %v1476 = vsel %vm1473, %v1475, %v1471
    %v1477 = vmul.f32 1.0, %v1476
    %v1478 = vtanh.pop %v1457
    %v1479 = vmul.f32 %v1477, %v1354
    %1481 = vrot.lane.b32.xlu0 %v1478, 64
    %v1482 = vpop.permute.xlu0 %1481
    %v1484 = vmul.f32 %v1477, %v1482
    %1486 = vrot.lane.b32.xlu0 %v1484, 32
    %v1487 = vpop.permute.xlu0 %1486
    %v1489 = vadd.f32 %v1479, %v1487
    %v1490 = vtanh.pop %v1489
    %1492 = vrot.lane.b32.xlu0 %v1490, 64
    %v1493 = vpop.permute.xlu0 %1492
    %v1495 = vmul.f32 %v1477, %v1493
    %1497 = vrot.lane.b32.xlu0 %v1495, 32
    %v1498 = vpop.permute.xlu0 %1497
    %1500 = vst.msk [vmem:[#allocation3 + $0x9] sm:$0x1] %vm293, %v1498
    %v1501 = vrot.slane %v145, 2
    %v1503 = vsel %vm160, %v1430, 0
    %1505 = vmatpush.msra.mxu0 0.0
    %1506 = vmatpush.msra.mxu0 0.0
    %1507 = vmatpush.msra.mxu0 0.0
    %1508 = vmatpush.msra.mxu0 0.0
    %1509 = vmatpush.msra.mxu0 0.0
    %1510 = vmatpush.msra.mxu0 0.0
    %1511 = vmatpush.msra.mxu0 0.0
    %1512 = vmatpush.msra.mxu0 0.0
    %1513 = vmatpush.msra.mxu0 0.0
    %1514 = vmatpush.msra.mxu0 0.0
    %1515 = vmatpush.msra.mxu0 0.0
    %1516 = vmatpush.msra.mxu0 0.0
    %1517 = vmatpush.msra.mxu0 %v150
    %1518 = vmatpush.msra.mxu0 %v149
    %1519 = vmatpush.msra.mxu0 %v148
    %1520 = vmatpush.msra.mxu0 %v147
    %1521 = vmatmul.f32.gmra.mxu0 %v1503
    %v1522 = vpop.f32.mrf.mxu0
    %v1523 = vadd.f32 %v1501, %v1522
    %1524 = vdwg.mxu0
    %v1525 = vxor.u32 %v1523, 2147483648
    %v1526 = vmul.f32 %v1525, 1.442695
    %v1527 = vpow.pop %v1526
    %v1528 = vadd.f32 %v1527, 1.0
    %v1529 = vrcp.pop %v1528
    %v1530 = vmul.f32 %v1528, %v1529
    %v1531 = vsub.f32 1.0, %v1530
    %v1532 = vmul.f32 %v1529, %v1531
    %v1533 = vadd.f32 %v1529, %v1532
    %vm1534 = vweird.f32 %v1528
    %vm1535 = vweird.f32 %v1529
    %vm1536 = vmor %vm1534, %vm1535
    %v1537 = vsel %vm1536, %v1529, %v1533
    %v1538 = vand.u32 2147483647, %v1528
    %vm1539 = vcmp.eq.f32.partialorder %v1538, 8.507059e+37
    %v1540 = vand.u32 %v1528, 2147483648
    %v1541 = vor.u32 1.1754944e-38, %v1540
    %v1542 = vsel %vm1539, %v1541, %v1537
    %v1543 = vmul.f32 1.0, %v1542
    %v1544 = vtanh.pop %v1523
    %v1545 = vmul.f32 %v1543, %v1421
    %1547 = vrot.lane.b32.xlu0 %v1544, 64
    %v1548 = vpop.permute.xlu0 %1547
    %v1550 = vmul.f32 %v1543, %v1548
    %1552 = vrot.lane.b32.xlu0 %v1550, 32
    %v1553 = vpop.permute.xlu0 %1552
    %v1555 = vadd.f32 %v1545, %v1553
    %v1556 = vtanh.pop %v1555
    %1558 = vrot.lane.b32.xlu0 %v1556, 64
    %v1559 = vpop.permute.xlu0 %1558
    %v1561 = vmul.f32 %v1543, %v1559
    %1563 = vrot.lane.b32.xlu0 %v1561, 32
    %v1564 = vpop.permute.xlu0 %1563
    %1566 = vrot.lane.b32.xlu0 %v1495, 64
    %v1567 = vpop.permute.xlu0 %1566
    %v1569 = vsel %vm160, %v1564, %v1567
    %v1571 = vsel %vm228, %v1569, 0
    %1573 = vmatpush.msra.mxu0 0.0
    %1574 = vmatpush.msra.mxu0 0.0
    %1575 = vmatpush.msra.mxu0 0.0
    %1576 = vmatpush.msra.mxu0 0.0
    %1577 = vmatpush.msra.mxu0 0.0
    %1578 = vmatpush.msra.mxu0 0.0
    %1579 = vmatpush.msra.mxu0 0.0
    %1580 = vmatpush.msra.mxu0 0.0
    %1581 = vmatpush.msra.mxu0 %v158
    %1582 = vmatpush.msra.mxu0 %v157
    %1583 = vmatpush.msra.mxu0 %v156
    %1584 = vmatpush.msra.mxu0 %v155
    %1585 = vmatpush.msra.mxu0 %v154
    %1586 = vmatpush.msra.mxu0 %v153
    %1587 = vmatpush.msra.mxu0 %v152
    %1588 = vmatpush.msra.mxu0 %v151
    %1589 = vmatmul.f32.gmra.mxu0 %v1571
    %v1590 = vpop.f32.mrf.mxu0
    %v1591 = vadd.f32 %v159, %v1590
    %1592 = vdwg.mxu0
    %v1593 = vxor.u32 %v1591, 2147483648
    %v1594 = vmul.f32 %v1593, 1.442695
    %v1595 = vpow.pop %v1594
    %v1596 = vadd.f32 %v1595, 1.0
    %v1597 = vrcp.pop %v1596
    %v1598 = vmul.f32 %v1596, %v1597
    %v1599 = vsub.f32 1.0, %v1598
    %v1600 = vmul.f32 %v1597, %v1599
    %v1601 = vadd.f32 %v1597, %v1600
    %vm1602 = vweird.f32 %v1596
    %vm1603 = vweird.f32 %v1597
    %vm1604 = vmor %vm1602, %vm1603
    %v1605 = vsel %vm1604, %v1597, %v1601
    %v1606 = vand.u32 2147483647, %v1596
    %vm1607 = vcmp.eq.f32.partialorder %v1606, 8.507059e+37
    %v1608 = vand.u32 %v1596, 2147483648
    %v1609 = vor.u32 1.1754944e-38, %v1608
    %v1610 = vsel %vm1607, %v1609, %v1605
    %v1611 = vmul.f32 1.0, %v1610
    %v1612 = vtanh.pop %v1591
    %v1613 = vmul.f32 %v1611, %v1489
    %1615 = vrot.lane.b32.xlu0 %v1612, 64
    %v1616 = vpop.permute.xlu0 %1615
    %v1618 = vmul.f32 %v1611, %v1616
    %1620 = vrot.lane.b32.xlu0 %v1618, 32
    %v1621 = vpop.permute.xlu0 %1620
    %v1623 = vadd.f32 %v1613, %v1621
    %v1624 = vtanh.pop %v1623
    %1626 = vrot.lane.b32.xlu0 %v1624, 64
    %v1627 = vpop.permute.xlu0 %1626
    %v1629 = vmul.f32 %v1611, %v1627
    %1631 = vrot.lane.b32.xlu0 %v1629, 32
    %v1632 = vpop.permute.xlu0 %1631
    %1634 = vst.msk [vmem:[#allocation3 + $0xa] sm:$0x1] %vm293, %v1632
    %v1635 = vrot.slane %v145, 3
    %v1637 = vsel %vm160, %v1564, 0
    %1639 = vmatpush.msra.mxu0 0.0
    %1640 = vmatpush.msra.mxu0 0.0
    %1641 = vmatpush.msra.mxu0 0.0
    %1642 = vmatpush.msra.mxu0 0.0
    %1643 = vmatpush.msra.mxu0 0.0
    %1644 = vmatpush.msra.mxu0 0.0
    %1645 = vmatpush.msra.mxu0 0.0
    %1646 = vmatpush.msra.mxu0 0.0
    %1647 = vmatpush.msra.mxu0 0.0
    %1648 = vmatpush.msra.mxu0 0.0
    %1649 = vmatpush.msra.mxu0 0.0
    %1650 = vmatpush.msra.mxu0 0.0
    %1651 = vmatpush.msra.mxu0 %v150
    %1652 = vmatpush.msra.mxu0 %v149
    %1653 = vmatpush.msra.mxu0 %v148
    %1654 = vmatpush.msra.mxu0 %v147
    %1655 = vmatmul.f32.gmra.mxu0 %v1637
    %v1656 = vpop.f32.mrf.mxu0
    %v1657 = vadd.f32 %v1635, %v1656
    %1658 = vdwg.mxu0
    %v1659 = vxor.u32 %v1657, 2147483648
    %v1660 = vmul.f32 %v1659, 1.442695
    %v1661 = vpow.pop %v1660
    %v1662 = vadd.f32 %v1661, 1.0
    %v1663 = vrcp.pop %v1662
    %v1664 = vmul.f32 %v1662, %v1663
    %v1665 = vsub.f32 1.0, %v1664
    %v1666 = vmul.f32 %v1663, %v1665
    %v1667 = vadd.f32 %v1663, %v1666
    %vm1668 = vweird.f32 %v1662
    %vm1669 = vweird.f32 %v1663
    %vm1670 = vmor %vm1668, %vm1669
    %v1671 = vsel %vm1670, %v1663, %v1667
    %v1672 = vand.u32 2147483647, %v1662
    %vm1673 = vcmp.eq.f32.partialorder %v1672, 8.507059e+37
    %v1674 = vand.u32 %v1662, 2147483648
    %v1675 = vor.u32 1.1754944e-38, %v1674
    %v1676 = vsel %vm1673, %v1675, %v1671
    %v1677 = vmul.f32 1.0, %v1676
    %v1678 = vtanh.pop %v1657
    %v1679 = vmul.f32 %v1677, %v1555
    %1681 = vrot.lane.b32.xlu0 %v1678, 64
    %v1682 = vpop.permute.xlu0 %1681
    %v1684 = vmul.f32 %v1677, %v1682
    %1686 = vrot.lane.b32.xlu0 %v1684, 32
    %v1687 = vpop.permute.xlu0 %1686
    %v1689 = vadd.f32 %v1679, %v1687
    %v1690 = vtanh.pop %v1689
    %1692 = vrot.lane.b32.xlu0 %v1690, 64
    %v1693 = vpop.permute.xlu0 %1692
    %v1695 = vmul.f32 %v1677, %v1693
    %1697 = vrot.lane.b32.xlu0 %v1695, 32
    %v1698 = vpop.permute.xlu0 %1697
    %1700 = vrot.lane.b32.xlu0 %v1629, 64
    %v1701 = vpop.permute.xlu0 %1700
    %v1703 = vsel %vm160, %v1698, %v1701
    %v1705 = vsel %vm228, %v1703, 0
    %1707 = vmatpush.msra.mxu0 0.0
    %1708 = vmatpush.msra.mxu0 0.0
    %1709 = vmatpush.msra.mxu0 0.0
    %1710 = vmatpush.msra.mxu0 0.0
    %1711 = vmatpush.msra.mxu0 0.0
    %1712 = vmatpush.msra.mxu0 0.0
    %1713 = vmatpush.msra.mxu0 0.0
    %1714 = vmatpush.msra.mxu0 0.0
    %1715 = vmatpush.msra.mxu0 %v158
    %1716 = vmatpush.msra.mxu0 %v157
    %1717 = vmatpush.msra.mxu0 %v156
    %1718 = vmatpush.msra.mxu0 %v155
    %1719 = vmatpush.msra.mxu0 %v154
    %1720 = vmatpush.msra.mxu0 %v153
    %1721 = vmatpush.msra.mxu0 %v152
    %1722 = vmatpush.msra.mxu0 %v151
    %1723 = vmatmul.f32.gmra.mxu0 %v1705
    %v1724 = vpop.f32.mrf.mxu0
    %v1725 = vadd.f32 %v159, %v1724
    %1726 = vdwg.mxu0
    %v1727 = vxor.u32 %v1725, 2147483648
    %v1728 = vmul.f32 %v1727, 1.442695
    %v1729 = vpow.pop %v1728
    %v1730 = vadd.f32 %v1729, 1.0
    %v1731 = vrcp.pop %v1730
    %v1732 = vmul.f32 %v1730, %v1731
    %v1733 = vsub.f32 1.0, %v1732
    %v1734 = vmul.f32 %v1731, %v1733
    %v1735 = vadd.f32 %v1731, %v1734
    %vm1736 = vweird.f32 %v1730
    %vm1737 = vweird.f32 %v1731
    %vm1738 = vmor %vm1736, %vm1737
    %v1739 = vsel %vm1738, %v1731, %v1735
    %v1740 = vand.u32 2147483647, %v1730
    %vm1741 = vcmp.eq.f32.partialorder %v1740, 8.507059e+37
    %v1742 = vand.u32 %v1730, 2147483648
    %v1743 = vor.u32 1.1754944e-38, %v1742
    %v1744 = vsel %vm1741, %v1743, %v1739
    %v1745 = vmul.f32 1.0, %v1744
    %v1746 = vtanh.pop %v1725
    %v1747 = vmul.f32 %v1745, %v1623
    %1749 = vrot.lane.b32.xlu0 %v1746, 64
    %v1750 = vpop.permute.xlu0 %1749
    %v1752 = vmul.f32 %v1745, %v1750
    %1754 = vrot.lane.b32.xlu0 %v1752, 32
    %v1755 = vpop.permute.xlu0 %1754
    %v1757 = vadd.f32 %v1747, %v1755
    %v1758 = vtanh.pop %v1757
    %1760 = vrot.lane.b32.xlu0 %v1758, 64
    %v1761 = vpop.permute.xlu0 %1760
    %v1763 = vmul.f32 %v1745, %v1761
    %1765 = vrot.lane.b32.xlu0 %v1763, 32
    %v1766 = vpop.permute.xlu0 %1765
    %1768 = vst.msk [vmem:[#allocation3 + $0xb] sm:$0x1] %vm293, %v1766
    %v1769 = vrot.slane %v145, 4
    %v1771 = vsel %vm160, %v1698, 0
    %1773 = vmatpush.msra.mxu0 0.0
    %1774 = vmatpush.msra.mxu0 0.0
    %1775 = vmatpush.msra.mxu0 0.0
    %1776 = vmatpush.msra.mxu0 0.0
    %1777 = vmatpush.msra.mxu0 0.0
    %1778 = vmatpush.msra.mxu0 0.0
    %1779 = vmatpush.msra.mxu0 0.0
    %1780 = vmatpush.msra.mxu0 0.0
    %1781 = vmatpush.msra.mxu0 0.0
    %1782 = vmatpush.msra.mxu0 0.0
    %1783 = vmatpush.msra.mxu0 0.0
    %1784 = vmatpush.msra.mxu0 0.0
    %1785 = vmatpush.msra.mxu0 %v150
    %1786 = vmatpush.msra.mxu0 %v149
    %1787 = vmatpush.msra.mxu0 %v148
    %1788 = vmatpush.msra.mxu0 %v147
    %1789 = vmatmul.f32.gmra.mxu0 %v1771
    %v1790 = vpop.f32.mrf.mxu0
    %v1791 = vadd.f32 %v1769, %v1790
    %1792 = vdwg.mxu0
    %v1793 = vxor.u32 %v1791, 2147483648
    %v1794 = vmul.f32 %v1793, 1.442695
    %v1795 = vpow.pop %v1794
    %v1796 = vadd.f32 %v1795, 1.0
    %v1797 = vrcp.pop %v1796
    %v1798 = vmul.f32 %v1796, %v1797
    %v1799 = vsub.f32 1.0, %v1798
    %v1800 = vmul.f32 %v1797, %v1799
    %v1801 = vadd.f32 %v1797, %v1800
    %vm1802 = vweird.f32 %v1796
    %vm1803 = vweird.f32 %v1797
    %vm1804 = vmor %vm1802, %vm1803
    %v1805 = vsel %vm1804, %v1797, %v1801
    %v1806 = vand.u32 2147483647, %v1796
    %vm1807 = vcmp.eq.f32.partialorder %v1806, 8.507059e+37
    %v1808 = vand.u32 %v1796, 2147483648
    %v1809 = vor.u32 1.1754944e-38, %v1808
    %v1810 = vsel %vm1807, %v1809, %v1805
    %v1811 = vmul.f32 1.0, %v1810
    %v1812 = vtanh.pop %v1791
    %v1813 = vmul.f32 %v1811, %v1689
    %1815 = vrot.lane.b32.xlu0 %v1812, 64
    %v1816 = vpop.permute.xlu0 %1815
    %v1818 = vmul.f32 %v1811, %v1816
    %1820 = vrot.lane.b32.xlu0 %v1818, 32
    %v1821 = vpop.permute.xlu0 %1820
    %v1823 = vadd.f32 %v1813, %v1821
    %v1824 = vtanh.pop %v1823
    %1826 = vrot.lane.b32.xlu0 %v1824, 64
    %v1827 = vpop.permute.xlu0 %1826
    %v1829 = vmul.f32 %v1811, %v1827
    %1831 = vrot.lane.b32.xlu0 %v1829, 32
    %v1832 = vpop.permute.xlu0 %1831
    %1834 = vrot.lane.b32.xlu0 %v1763, 64
    %v1835 = vpop.permute.xlu0 %1834
    %v1837 = vsel %vm160, %v1832, %v1835
    %v1839 = vsel %vm228, %v1837, 0
    %1841 = vmatpush.msra.mxu0 0.0
    %1842 = vmatpush.msra.mxu0 0.0
    %1843 = vmatpush.msra.mxu0 0.0
    %1844 = vmatpush.msra.mxu0 0.0
    %1845 = vmatpush.msra.mxu0 0.0
    %1846 = vmatpush.msra.mxu0 0.0
    %1847 = vmatpush.msra.mxu0 0.0
    %1848 = vmatpush.msra.mxu0 0.0
    %1849 = vmatpush.msra.mxu0 %v158
    %1850 = vmatpush.msra.mxu0 %v157
    %1851 = vmatpush.msra.mxu0 %v156
    %1852 = vmatpush.msra.mxu0 %v155
    %1853 = vmatpush.msra.mxu0 %v154
    %1854 = vmatpush.msra.mxu0 %v153
    %1855 = vmatpush.msra.mxu0 %v152
    %1856 = vmatpush.msra.mxu0 %v151
    %1857 = vmatmul.f32.gmra.mxu0 %v1839
    %v1858 = vpop.f32.mrf.mxu0
    %v1859 = vadd.f32 %v159, %v1858
    %1860 = vdwg.mxu0
    %v1861 = vxor.u32 %v1859, 2147483648
    %v1862 = vmul.f32 %v1861, 1.442695
    %v1863 = vpow.pop %v1862
    %v1864 = vadd.f32 %v1863, 1.0
    %v1865 = vrcp.pop %v1864
    %v1866 = vmul.f32 %v1864, %v1865
    %v1867 = vsub.f32 1.0, %v1866
    %v1868 = vmul.f32 %v1865, %v1867
    %v1869 = vadd.f32 %v1865, %v1868
    %vm1870 = vweird.f32 %v1864
    %vm1871 = vweird.f32 %v1865
    %vm1872 = vmor %vm1870, %vm1871
    %v1873 = vsel %vm1872, %v1865, %v1869
    %v1874 = vand.u32 2147483647, %v1864
    %vm1875 = vcmp.eq.f32.partialorder %v1874, 8.507059e+37
    %v1876 = vand.u32 %v1864, 2147483648
    %v1877 = vor.u32 1.1754944e-38, %v1876
    %v1878 = vsel %vm1875, %v1877, %v1873
    %v1879 = vmul.f32 1.0, %v1878
    %v1880 = vtanh.pop %v1859
    %v1881 = vmul.f32 %v1879, %v1757
    %1883 = vrot.lane.b32.xlu0 %v1880, 64
    %v1884 = vpop.permute.xlu0 %1883
    %v1886 = vmul.f32 %v1879, %v1884
    %1888 = vrot.lane.b32.xlu0 %v1886, 32
    %v1889 = vpop.permute.xlu0 %1888
    %v1891 = vadd.f32 %v1881, %v1889
    %v1892 = vtanh.pop %v1891
    %1894 = vrot.lane.b32.xlu0 %v1892, 64
    %v1895 = vpop.permute.xlu0 %1894
    %v1897 = vmul.f32 %v1879, %v1895
    %1899 = vrot.lane.b32.xlu0 %v1897, 32
    %v1900 = vpop.permute.xlu0 %1899
    %1902 = vst.msk [vmem:[#allocation3 + $0xc] sm:$0x1] %vm293, %v1900
    %v1903 = vrot.slane %v145, 5
    %v1905 = vsel %vm160, %v1832, 0
    %1907 = vmatpush.msra.mxu0 0.0
    %1908 = vmatpush.msra.mxu0 0.0
    %1909 = vmatpush.msra.mxu0 0.0
    %1910 = vmatpush.msra.mxu0 0.0
    %1911 = vmatpush.msra.mxu0 0.0
    %1912 = vmatpush.msra.mxu0 0.0
    %1913 = vmatpush.msra.mxu0 0.0
    %1914 = vmatpush.msra.mxu0 0.0
    %1915 = vmatpush.msra.mxu0 0.0
    %1916 = vmatpush.msra.mxu0 0.0
    %1917 = vmatpush.msra.mxu0 0.0
    %1918 = vmatpush.msra.mxu0 0.0
    %1919 = vmatpush.msra.mxu0 %v150
    %1920 = vmatpush.msra.mxu0 %v149
    %1921 = vmatpush.msra.mxu0 %v148
    %1922 = vmatpush.msra.mxu0 %v147
    %1923 = vmatmul.f32.gmra.mxu0 %v1905
    %v1924 = vpop.f32.mrf.mxu0
    %v1925 = vadd.f32 %v1903, %v1924
    %1926 = vdwg.mxu0
    %v1927 = vxor.u32 %v1925, 2147483648
    %v1928 = vmul.f32 %v1927, 1.442695
    %v1929 = vpow.pop %v1928
    %v1930 = vadd.f32 %v1929, 1.0
    %v1931 = vrcp.pop %v1930
    %v1932 = vmul.f32 %v1930, %v1931
    %v1933 = vsub.f32 1.0, %v1932
    %v1934 = vmul.f32 %v1931, %v1933
    %v1935 = vadd.f32 %v1931, %v1934
    %vm1936 = vweird.f32 %v1930
    %vm1937 = vweird.f32 %v1931
    %vm1938 = vmor %vm1936, %vm1937
    %v1939 = vsel %vm1938, %v1931, %v1935
    %v1940 = vand.u32 2147483647, %v1930
    %vm1941 = vcmp.eq.f32.partialorder %v1940, 8.507059e+37
    %v1942 = vand.u32 %v1930, 2147483648
    %v1943 = vor.u32 1.1754944e-38, %v1942
    %v1944 = vsel %vm1941, %v1943, %v1939
    %v1945 = vmul.f32 1.0, %v1944
    %v1946 = vtanh.pop %v1925
    %v1947 = vmul.f32 %v1945, %v1823
    %1949 = vrot.lane.b32.xlu0 %v1946, 64
    %v1950 = vpop.permute.xlu0 %1949
    %v1952 = vmul.f32 %v1945, %v1950
    %1954 = vrot.lane.b32.xlu0 %v1952, 32
    %v1955 = vpop.permute.xlu0 %1954
    %v1957 = vadd.f32 %v1947, %v1955
    %v1958 = vtanh.pop %v1957
    %1960 = vrot.lane.b32.xlu0 %v1958, 64
    %v1961 = vpop.permute.xlu0 %1960
    %v1963 = vmul.f32 %v1945, %v1961
    %1965 = vrot.lane.b32.xlu0 %v1963, 32
    %v1966 = vpop.permute.xlu0 %1965
    %1968 = vrot.lane.b32.xlu0 %v1897, 64
    %v1969 = vpop.permute.xlu0 %1968
    %v1971 = vsel %vm160, %v1966, %v1969
    %v1973 = vsel %vm228, %v1971, 0
    %1975 = vmatpush.msra.mxu0 0.0
    %1976 = vmatpush.msra.mxu0 0.0
    %1977 = vmatpush.msra.mxu0 0.0
    %1978 = vmatpush.msra.mxu0 0.0
    %1979 = vmatpush.msra.mxu0 0.0
    %1980 = vmatpush.msra.mxu0 0.0
    %1981 = vmatpush.msra.mxu0 0.0
    %1982 = vmatpush.msra.mxu0 0.0
    %1983 = vmatpush.msra.mxu0 %v158
    %1984 = vmatpush.msra.mxu0 %v157
    %1985 = vmatpush.msra.mxu0 %v156
    %1986 = vmatpush.msra.mxu0 %v155
    %1987 = vmatpush.msra.mxu0 %v154
    %1988 = vmatpush.msra.mxu0 %v153
    %1989 = vmatpush.msra.mxu0 %v152
    %1990 = vmatpush.msra.mxu0 %v151
    %1991 = vmatmul.f32.gmra.mxu0 %v1973
    %v1992 = vpop.f32.mrf.mxu0
    %v1993 = vadd.f32 %v159, %v1992
    %1994 = vdwg.mxu0
    %v1995 = vxor.u32 %v1993, 2147483648
    %v1996 = vmul.f32 %v1995, 1.442695
    %v1997 = vpow.pop %v1996
    %v1998 = vadd.f32 %v1997, 1.0
    %v1999 = vrcp.pop %v1998
    %v2000 = vmul.f32 %v1998, %v1999
    %v2001 = vsub.f32 1.0, %v2000
    %v2002 = vmul.f32 %v1999, %v2001
    %v2003 = vadd.f32 %v1999, %v2002
    %vm2004 = vweird.f32 %v1998
    %vm2005 = vweird.f32 %v1999
    %vm2006 = vmor %vm2004, %vm2005
    %v2007 = vsel %vm2006, %v1999, %v2003
    %v2008 = vand.u32 2147483647, %v1998
    %vm2009 = vcmp.eq.f32.partialorder %v2008, 8.507059e+37
    %v2010 = vand.u32 %v1998, 2147483648
    %v2011 = vor.u32 1.1754944e-38, %v2010
    %v2012 = vsel %vm2009, %v2011, %v2007
    %v2013 = vmul.f32 1.0, %v2012
    %v2014 = vtanh.pop %v1993
    %v2015 = vmul.f32 %v2013, %v1891
    %2017 = vrot.lane.b32.xlu0 %v2014, 64
    %v2018 = vpop.permute.xlu0 %2017
    %v2020 = vmul.f32 %v2013, %v2018
    %2022 = vrot.lane.b32.xlu0 %v2020, 32
    %v2023 = vpop.permute.xlu0 %2022
    %v2025 = vadd.f32 %v2015, %v2023
    %v2026 = vtanh.pop %v2025
    %2028 = vrot.lane.b32.xlu0 %v2026, 64
    %v2029 = vpop.permute.xlu0 %2028
    %v2031 = vmul.f32 %v2013, %v2029
    %2033 = vrot.lane.b32.xlu0 %v2031, 32
    %v2034 = vpop.permute.xlu0 %2033
    %2036 = vst.msk [vmem:[#allocation3 + $0xd] sm:$0x1] %vm293, %v2034
    %v2037 = vrot.slane %v145, 6
    %v2039 = vsel %vm160, %v1966, 0
    %2041 = vmatpush.msra.mxu0 0.0
    %2042 = vmatpush.msra.mxu0 0.0
    %2043 = vmatpush.msra.mxu0 0.0
    %2044 = vmatpush.msra.mxu0 0.0
    %2045 = vmatpush.msra.mxu0 0.0
    %2046 = vmatpush.msra.mxu0 0.0
    %2047 = vmatpush.msra.mxu0 0.0
    %2048 = vmatpush.msra.mxu0 0.0
    %2049 = vmatpush.msra.mxu0 0.0
    %2050 = vmatpush.msra.mxu0 0.0
    %2051 = vmatpush.msra.mxu0 0.0
    %2052 = vmatpush.msra.mxu0 0.0
    %2053 = vmatpush.msra.mxu0 %v150
    %2054 = vmatpush.msra.mxu0 %v149
    %2055 = vmatpush.msra.mxu0 %v148
    %2056 = vmatpush.msra.mxu0 %v147
    %2057 = vmatmul.f32.gmra.mxu0 %v2039
    %v2058 = vpop.f32.mrf.mxu0
    %v2059 = vadd.f32 %v2037, %v2058
    %2060 = vdwg.mxu0
    %v2061 = vxor.u32 %v2059, 2147483648
    %v2062 = vmul.f32 %v2061, 1.442695
    %v2063 = vpow.pop %v2062
    %v2064 = vadd.f32 %v2063, 1.0
    %v2065 = vrcp.pop %v2064
    %v2066 = vmul.f32 %v2064, %v2065
    %v2067 = vsub.f32 1.0, %v2066
    %v2068 = vmul.f32 %v2065, %v2067
    %v2069 = vadd.f32 %v2065, %v2068
    %vm2070 = vweird.f32 %v2064
    %vm2071 = vweird.f32 %v2065
    %vm2072 = vmor %vm2070, %vm2071
    %v2073 = vsel %vm2072, %v2065, %v2069
    %v2074 = vand.u32 2147483647, %v2064
    %vm2075 = vcmp.eq.f32.partialorder %v2074, 8.507059e+37
    %v2076 = vand.u32 %v2064, 2147483648
    %v2077 = vor.u32 1.1754944e-38, %v2076
    %v2078 = vsel %vm2075, %v2077, %v2073
    %v2079 = vmul.f32 1.0, %v2078
    %v2080 = vtanh.pop %v2059
    %v2081 = vmul.f32 %v2079, %v1957
    %2083 = vrot.lane.b32.xlu0 %v2080, 64
    %v2084 = vpop.permute.xlu0 %2083
    %v2086 = vmul.f32 %v2079, %v2084
    %2088 = vrot.lane.b32.xlu0 %v2086, 32
    %v2089 = vpop.permute.xlu0 %2088
    %v2091 = vadd.f32 %v2081, %v2089
    %v2092 = vtanh.pop %v2091
    %2094 = vrot.lane.b32.xlu0 %v2092, 64
    %v2095 = vpop.permute.xlu0 %2094
    %v2097 = vmul.f32 %v2079, %v2095
    %2099 = vrot.lane.b32.xlu0 %v2097, 32
    %v2100 = vpop.permute.xlu0 %2099
    %2102 = vrot.lane.b32.xlu0 %v2031, 64
    %v2103 = vpop.permute.xlu0 %2102
    %v2105 = vsel %vm160, %v2100, %v2103
    %v2107 = vsel %vm228, %v2105, 0
    %2109 = vmatpush.msra.mxu0 0.0
    %2110 = vmatpush.msra.mxu0 0.0
    %2111 = vmatpush.msra.mxu0 0.0
    %2112 = vmatpush.msra.mxu0 0.0
    %2113 = vmatpush.msra.mxu0 0.0
    %2114 = vmatpush.msra.mxu0 0.0
    %2115 = vmatpush.msra.mxu0 0.0
    %2116 = vmatpush.msra.mxu0 0.0
    %2117 = vmatpush.msra.mxu0 %v158
    %2118 = vmatpush.msra.mxu0 %v157
    %2119 = vmatpush.msra.mxu0 %v156
    %2120 = vmatpush.msra.mxu0 %v155
    %2121 = vmatpush.msra.mxu0 %v154
    %2122 = vmatpush.msra.mxu0 %v153
    %2123 = vmatpush.msra.mxu0 %v152
    %2124 = vmatpush.msra.mxu0 %v151
    %2125 = vmatmul.f32.gmra.mxu0 %v2107
    %v2126 = vpop.f32.mrf.mxu0
    %v2127 = vadd.f32 %v159, %v2126
    %2128 = vdwg.mxu0
    %v2129 = vxor.u32 %v2127, 2147483648
    %v2130 = vmul.f32 %v2129, 1.442695
    %v2131 = vpow.pop %v2130
    %v2132 = vadd.f32 %v2131, 1.0
    %v2133 = vrcp.pop %v2132
    %v2134 = vmul.f32 %v2132, %v2133
    %v2135 = vsub.f32 1.0, %v2134
    %v2136 = vmul.f32 %v2133, %v2135
    %v2137 = vadd.f32 %v2133, %v2136
    %vm2138 = vweird.f32 %v2132
    %vm2139 = vweird.f32 %v2133
    %vm2140 = vmor %vm2138, %vm2139
    %v2141 = vsel %vm2140, %v2133, %v2137
    %v2142 = vand.u32 2147483647, %v2132
    %vm2143 = vcmp.eq.f32.partialorder %v2142, 8.507059e+37
    %v2144 = vand.u32 %v2132, 2147483648
    %v2145 = vor.u32 1.1754944e-38, %v2144
    %v2146 = vsel %vm2143, %v2145, %v2141
    %v2147 = vmul.f32 1.0, %v2146
    %v2148 = vtanh.pop %v2127
    %v2149 = vmul.f32 %v2147, %v2025
    %2151 = vrot.lane.b32.xlu0 %v2148, 64
    %v2152 = vpop.permute.xlu0 %2151
    %v2154 = vmul.f32 %v2147, %v2152
    %2156 = vrot.lane.b32.xlu0 %v2154, 32
    %v2157 = vpop.permute.xlu0 %2156
    %v2159 = vadd.f32 %v2149, %v2157
    %v2160 = vtanh.pop %v2159
    %2162 = vrot.lane.b32.xlu0 %v2160, 64
    %v2163 = vpop.permute.xlu0 %2162
    %v2165 = vmul.f32 %v2147, %v2163
    %2167 = vrot.lane.b32.xlu0 %v2165, 32
    %v2168 = vpop.permute.xlu0 %2167
    %2170 = vst.msk [vmem:[#allocation3 + $0xe] sm:$0x1] %vm293, %v2168
    %v2171 = vld [vmem:[#allocation3] sm:$0xff]
    %v2172 = vld [vmem:[#allocation3 + $0x8] sm:$0xff]
    %v2173 = vld [vmem:[%s7] sm:$0xff]
    %v2174 = vld [vmem:[%s7 + $0x8] sm:$0xff]
    %v2175 = vld [vmem:[%s7 + $0x10] sm:$0xff]
    %v2176 = vld [vmem:[%s7 + $0x18] sm:$0xff]
    %v2177 = vld [vmem:[%s8] sm:$0x1]
    %v2179 = vperm.slane %v2177, 0
    %v2182 = vsel %vm160, %v2171, 0
    %v2185 = vsel %vm160, %v2172, 0
    %2187 = vmatpush.msra.mxu0 0.0
    %2188 = vmatpush.msra.mxu0 0.0
    %2189 = vmatpush.msra.mxu0 0.0
    %2190 = vmatpush.msra.mxu0 0.0
    %2191 = vmatpush.msra.mxu0 0.0
    %2192 = vmatpush.msra.mxu0 0.0
    %2193 = vmatpush.msra.mxu0 0.0
    %2194 = vmatpush.msra.mxu0 0.0
    %2195 = vmatpush.msra.mxu0 0.0
    %2196 = vmatpush.msra.mxu0 0.0
    %2197 = vmatpush.msra.mxu0 0.0
    %2198 = vmatpush.msra.mxu0 0.0
    %2199 = vmatpush.msra.mxu0 %v2176
    %2200 = vmatpush.msra.mxu0 %v2175
    %2201 = vmatpush.msra.mxu0 %v2174
    %2202 = vmatpush.msra.mxu0 %v2173
    %2203 = vmatmul.f32.gmra.mxu0 %v2182
    %v2204 = vpop.f32.mrf.mxu0
    %v2205 = vadd.f32 %v2179, %v2204
    %2206 = vmatmul.f32.gmra.mxu0 %v2185
    %v2207 = vpop.f32.mrf.mxu0
    %v2208 = vadd.f32 %v2179, %v2207
    %2209 = vdwg.mxu0
    %vm2210 = vcmask 72704
    %v2211 = vsel %vm2210, %v2205, -inf
    %2212 = vmax.xlane.f32.xlu0 %v2211
    %v2213 = vpop.xlane.xlu0 %2212
    %v2214 = vsel %vm2210, %v2208, -inf
    %2215 = vmax.xlane.f32.xlu0 %v2214
    %v2216 = vpop.xlane.xlu0 %2215
    %v2217 = vsub.f32 %v2205, %v2213
    %v2218 = vsub.f32 %v2208, %v2216
    %v2219 = vmul.f32 %v2217, 1.442695
    %v2220 = vpow.pop %v2219
    %v2221 = vmul.f32 %v2218, 1.442695
    %v2222 = vpow.pop %v2221
    %v2223 = vsel %vm2210, %v2220, 0.0
    %2224 = vadd.xlane.f32.xlu0 %v2223
    %v2225 = vpop.xlane.xlu0 %2224
    %v2226 = vsel %vm2210, %v2222, 0.0
    %2227 = vadd.xlane.f32.xlu0 %v2226
    %v2228 = vpop.xlane.xlu0 %2227
    %v2229 = vrcp.pop %v2225
    %v2230 = vmul.f32 %v2225, %v2229
    %v2231 = vsub.f32 1.0, %v2230
    %v2232 = vmul.f32 %v2229, %v2231
    %v2233 = vadd.f32 %v2229, %v2232
    %vm2234 = vweird.f32 %v2225
    %vm2235 = vweird.f32 %v2229
    %vm2236 = vmor %vm2234, %vm2235
    %v2237 = vsel %vm2236, %v2229, %v2233
    %v2238 = vand.u32 2147483647, %v2225
    %vm2239 = vcmp.eq.f32.partialorder %v2238, 8.507059e+37
    %v2240 = vand.u32 %v2225, 2147483648
    %v2241 = vor.u32 1.1754944e-38, %v2240
    %v2242 = vsel %vm2239, %v2241, %v2237
    %v2243 = vmul.f32 %v2220, %v2242
    %v2244 = vrcp.pop %v2228
    %v2245 = vmul.f32 %v2228, %v2244
    %v2246 = vsub.f32 1.0, %v2245
    %v2247 = vmul.f32 %v2244, %v2246
    %v2248 = vadd.f32 %v2244, %v2247
    %vm2249 = vweird.f32 %v2228
    %vm2250 = vweird.f32 %v2244
    %vm2251 = vmor %vm2249, %vm2250
    %v2252 = vsel %vm2251, %v2244, %v2248
    %v2253 = vand.u32 2147483647, %v2228
    %vm2254 = vcmp.eq.f32.partialorder %v2253, 8.507059e+37
    %v2255 = vand.u32 %v2228, 2147483648
    %v2256 = vor.u32 1.1754944e-38, %v2255
    %v2257 = vsel %vm2254, %v2256, %v2252
    %v2258 = vmul.f32 %v2222, %v2257
    %2259 = vst.msk [vmem:[#allocation7] sm:$0xff] %vm2210, %v2243
    %vm2260 = vcmask 71680
    %2261 = vst.msk [vmem:[#allocation7 + $0x8] sm:$0x7f] %vm2260, %v2258
    // Predicated region
    $region42: #{rnn_forward.1} parent=1 // pred_check
      _
    $region43: #{rnn_forward.1} parent=1 // pred_check_branch
      %2263 = sbr.rel (0) target = $region45
    $region44: #{rnn_forward.1} parent=1 // pred_region
      %2265 = vsyncadd [#allocation5], 0
      %s2266 = sshll.u32 [#allocation7], 4
      %s2267 = int_to_ptr.vmem [resolvable:$true] %s2266
      %s2268 = sshll.u32 %s9, 4
      %s2269 = int_to_ptr.hbm [resolvable:$true] %s2268
      %2274 = dma.vmem_to_hbm [thread:$0]  %s2267, 256, %s2269, [#allocation5], 128, 128, 8
    $region45: #{rnn_forward.1} parent=1 // pred_fallthru
      _
    // Predicated region
    $region46: #{rnn_forward.1} parent=1 // pred_check
      _
    $region47: #{rnn_forward.1} parent=1 // pred_check_branch
      %2276 = sbr.rel (0) target = $region49
    $region48: #{rnn_forward.1} parent=1 // pred_region
      %2278 = dma.done [#allocation5], 256
    $region49: #{rnn_forward.1} parent=1 // pred_fallthru
      _
    %2279 = vsyncpa [#allocation5], 1
    %2280 = vsyncpa [#allocation6], 1

</llo_original>
